<compile_context>
chip_gen: v7x
topology: tpu7x:2x2x1
jax: 0.10.0
libtpu: 0.0.40
codegen_flags: <defaults>
</compile_context>

<pallas_src>
import numpy as np
import jax
import jax.numpy as jnp
from jax import lax
from jax.experimental import pallas as pl
from jax.experimental.pallas import tpu as pltpu


def _bilinear_matrix(in_size: int, out_size: int) -> np.ndarray:
    """Row-interpolation matrix for bilinear resize with align_corners=True."""
    A = np.zeros((out_size, in_size), dtype=np.float32)
    if out_size == 1:
        A[0, 0] = 1.0
        return A
    for o in range(out_size):
        src = o * (in_size - 1) / (out_size - 1)
        i0 = min(int(np.floor(src)), in_size - 1)
        i1 = min(i0 + 1, in_size - 1)
        f = src - i0
        A[o, i0] += 1.0 - f
        A[o, i1] += f
    return A


def _reflect_pad_rows(A: np.ndarray, pad: int) -> np.ndarray:
    """Compose PyTorch 'reflect' padding (no edge repeat) with interpolation A."""
    n = A.shape[0]
    idx = []
    for j in range(-pad, n + pad):
        i = abs(j)
        if i >= n:
            i = 2 * (n - 1) - i
        idx.append(i)
    return A[np.array(idx)]


def _round_up(v: int, m: int) -> int:
    return (v + m - 1) // m * m


def upconv_forward(x, w, b, *, scale, norm="instance", eps=1e-5):
    """Pallas forward pass matching `upconv` (training-mode instance norm)."""
    if norm != "instance":
        raise NotImplementedError("only norm='instance' is implemented")

    N, Cin, Hi, Wi = x.shape
    Cout, _, K, _ = w.shape
    Ho, Wo = int(Hi * scale), int(Wi * scale)
    pad = (K - 1) // 2
    Hp = Ho + 2 * pad                       # padded height (real)
    Wreal = Wo + 2 * pad                    # padded width (real, reflect)

    # Lane padding: smallest Wp >= Wreal with Ho*Wp a multiple of 128 so the
    # flattened-window width QROW is vreg-aligned (34 -> 36, QROW 1088 -> 1152).
    Wp = Wreal
    while (Ho * Wp) % 128 != 0:
        Wp += 1
    QROW = Ho * Wp                          # flattened-window width (lane-dense)
    off_max = (K - 1) * Wp + (K - 1)        # largest conv-tap lane offset
    QLEN = _round_up(max(Hp * Wp, off_max + QROW), 128)  # kt columns (+ slack)

    CIN_P = _round_up(Cin, 8)               # sublane-tile aligned channel dims
    COUT_P = _round_up(Cout, 8)
    count = float(Ho * Wo)                  # #valid pixels per channel

    # Fused (bilinear upsample + reflect pad) as ONE linear map on the
    # flattened image, row stride Wp.  Extra columns (lane pad + slack) are 0.
    ah = _reflect_pad_rows(_bilinear_matrix(Hi, Ho), pad)          # (Hp, Hi)
    aw = np.zeros((Wp, Wi), dtype=np.float32)
    aw[:Wreal] = _reflect_pad_rows(_bilinear_matrix(Wi, Wo), pad)  # (Wp, Wi)
    kt_np = np.zeros((Hi * Wi, QLEN), dtype=np.float32)
    kt_np[:, : Hp * Wp] = np.kron(ah, aw).T
    kt = jnp.asarray(kt_np).astype(jnp.bfloat16)                   # (Hi*Wi, QLEN)

    # Valid-column mask for the flattened-window layout (p % Wp < Wo), f32.
    mask = jnp.asarray(
        (np.arange(QROW) % Wp < Wo).astype(np.float32)[None, :])   # (1, QROW)

    # Conv weights as lane-packed taps: row co, cols (dy*K+dx)*CIN_P + ci.
    w4 = jnp.transpose(w, (0, 2, 3, 1))                            # (Cout,K,K,Cin)
    w4 = jnp.pad(w4, ((0, COUT_P - Cout), (0, 0), (0, 0), (0, CIN_P - Cin)))
    w2d = w4.reshape(COUT_P, K * K * CIN_P).astype(jnp.bfloat16)   # (COUT_P, K*K*CIN_P)
    b2 = jnp.pad(b, (0, COUT_P - Cout)).reshape(COUT_P, 1).astype(jnp.float32)

    # Input, flattened and channel-padded to a full sublane tile, bf16.
    x2 = jnp.pad(x.reshape(N, Cin, Hi * Wi),
                 ((0, 0), (0, CIN_P - Cin), (0, 0))).astype(jnp.bfloat16)

    def kernel(x_ref, kt_ref, m_ref, w_ref, b_ref, o_ref):
        # --- upsample + reflect pad, already flattened: (CIN_P, QLEN)
        #     bf16 x bf16 MXU matmul with f32 accumulation.
        xq = jnp.dot(x_ref[...], kt_ref[...],
                     preferred_element_type=jnp.float32)

        # --- conv: K*K accumulated rank-CIN_P bf16 matmuls on lane-dense
        #     (width = QROW, multiple of 128) shifted windows. No VMEM scratch.
        wf = w_ref[...]                                   # (COUT_P, K*K*CIN_P) bf16
        acc = None
        for dy in range(K):
            for dx in range(K):
                t = dy * K + dx
                off = dy * Wp + dx
                xs = xq[:, off:off + QROW].astype(jnp.bfloat16)
                part = jnp.dot(wf[:, t * CIN_P:(t + 1) * CIN_P], xs,
                               preferred_element_type=jnp.float32)
                acc = part if acc is None else acc + part
        y = acc + b_ref[...]                              # (COUT_P, QROW) f32

        # --- InstanceNorm2d (biased variance over valid columns) + ELU, f32.
        m = m_ref[...]                                    # (1, QROW) 0/1 mask
        ym = y * m                                        # reused for both sums
        s1 = jnp.sum(ym, axis=-1, keepdims=True)          # (COUT_P, 1)
        s2 = jnp.sum(y * ym, axis=-1, keepdims=True)      # (COUT_P, 1)
        mean = s1 * (1.0 / count)
        var = jnp.maximum(s2 * (1.0 / count) - mean * mean, 0.0)
        z = (y - mean) * lax.rsqrt(var + eps)
        o_ref[...] = jnp.where(z > 0, z, jnp.exp(z) - 1.0)

    grid_spec = pltpu.PrefetchScalarGridSpec(
        num_scalar_prefetch=0,
        grid=(N,),
        in_specs=[
            pl.BlockSpec((None, CIN_P, Hi * Wi), lambda n: (n, 0, 0)),   # x (flat)
            pl.BlockSpec((Hi * Wi, QLEN), lambda n: (0, 0)),             # upsample map
            pl.BlockSpec((1, QROW), lambda n: (0, 0)),                   # valid mask
            pl.BlockSpec((COUT_P, K * K * CIN_P), lambda n: (0, 0)),     # conv W
            pl.BlockSpec((COUT_P, 1), lambda n: (0, 0)),                 # bias
        ],
        out_specs=pl.BlockSpec((None, COUT_P, QROW), lambda n: (n, 0, 0)),
    )

    out = pl.pallas_call(
        kernel,
        out_shape=jax.ShapeDtypeStruct((N, COUT_P, QROW), jnp.float32),
        grid_spec=grid_spec,
        compiler_params=pltpu.CompilerParams(dimension_semantics=("parallel",)),
    )(x2, kt, mask, w2d, b2)

    # Drop padded channels and the Wp-Wo wrap/pad columns (masked out of stats).
    return out.reshape(N, COUT_P, Ho, Wp)[:, :Cout, :, :Wo]


def upconv_reference(x, w, b, *, scale, eps=1e-5):
    """Pure-JAX reference at the kernel's mixed precision.

    Mirrors the module semantics (upsample -> reflect-pad conv -> instance norm
    -> ELU) with the same bf16 rounding points the kernel uses (x, upsample
    matrix, conv inputs/weights in bf16; f32 accumulation and f32 norm math),
    so the comparison is apples-to-apples.
    """
    N, Cin, Hi, Wi = x.shape
    Cout, _, K, _ = w.shape
    Ho, Wo = int(Hi * scale), int(Wi * scale)
    pad = (K - 1) // 2
    ah = _reflect_pad_rows(_bilinear_matrix(Hi, Ho), pad)          # (Hp, Hi)
    aw = _reflect_pad_rows(_bilinear_matrix(Wi, Wo), pad)          # (Wr, Wi)
    kron = jnp.asarray(np.kron(ah, aw))                            # (Hp*Wr, Hi*Wi)
    kron = kron.astype(jnp.bfloat16).astype(jnp.float32)           # kernel rounding
    xf = x.astype(jnp.bfloat16).astype(jnp.float32).reshape(N, Cin, Hi * Wi)
    xp = jnp.einsum("pq,ncq->ncp", kron, xf)
    xp = xp.reshape(N, Cin, Ho + 2 * pad, Wo + 2 * pad)
    xp = xp.astype(jnp.bfloat16).astype(jnp.float32)               # conv LHS rounding
    wf = w.astype(jnp.bfloat16).astype(jnp.float32)
    y = lax.conv_general_dilated(
        xp, wf, (1, 1), "VALID", dimension_numbers=("NCHW", "OIHW", "NCHW"))
    y = y + b[None, :, None, None]
    mean = y.mean(axis=(2, 3), keepdims=True)
    var = ((y - mean) ** 2).mean(axis=(2, 3), keepdims=True)
    y = (y - mean) / jnp.sqrt(var + eps)
    return jnp.where(y > 0, y, jnp.exp(y) - 1.0)


if __name__ == "__main__":
    N, Cin, Cout, H, W, K, SCALE = 2, 4, 8, 16, 16, 3, 2
    key = jax.random.PRNGKey(0)
    kx, kw, kb = jax.random.split(key, 3)

    x = jax.random.normal(kx, (N, Cin, H, W), dtype=jnp.float32)
    bound = 1.0 / np.sqrt(Cin * K * K)          # deterministic synthetic init
    w = jax.random.uniform(kw, (Cout, Cin, K, K), jnp.float32, -bound, bound)
    b = jax.random.uniform(kb, (Cout,), jnp.float32, -bound, bound)

    out = upconv_forward(x, w, b, scale=SCALE, norm="instance")
    out = jax.block_until_ready(out)

    ref = upconv_reference(x, w, b, scale=SCALE)
    assert out.shape == (N, Cout, H * SCALE, W * SCALE)
    # Tolerance: kernel and reference share all bf16 rounding points; residual
    # differences are f32 accumulation-order noise plus rare one-ulp bf16
    # rounding flips on the conv input (<~5e-3 after instance norm).
    np.testing.assert_allclose(np.asarray(out), np.asarray(ref),
                               rtol=1e-2, atol=1e-2)
    print("KERNEL_OK")
</pallas_src>

<mosaic_0001>
module attributes {stable_mosaic.version = 11 : i64} {
  func.func @kernel(%arg0: i32, %arg1: memref<1x8x256xbf16, #tpu.memory_space<vmem>>, %arg2: memref<256x1280xbf16, #tpu.memory_space<vmem>>, %arg3: memref<1x1152xf32, #tpu.memory_space<vmem>>, %arg4: memref<8x72xbf16, #tpu.memory_space<vmem>>, %arg5: memref<8x1xf32, #tpu.memory_space<vmem>>, %arg6: memref<1x8x1152xf32, #tpu.memory_space<vmem>>) attributes {dimension_semantics = [#tpu.dimension_semantics<parallel>], iteration_bounds = array<i64: 2>, scalar_prefetch = 0 : i64, scratch_operands = 0 : i64, tpu.core_type = #tpu.core_type<tc>, window_params = [{transform_indices = @transform_0, window_bounds = array<i64: 1, 8, 256>}, {pipeline_mode = #tpu.pipeline_mode<synchronous>, transform_indices = @transform_1, window_bounds = array<i64: 256, 1280>}, {pipeline_mode = #tpu.pipeline_mode<synchronous>, transform_indices = @transform_2, window_bounds = array<i64: 1, 1152>}, {pipeline_mode = #tpu.pipeline_mode<synchronous>, transform_indices = @transform_3, window_bounds = array<i64: 8, 72>}, {pipeline_mode = #tpu.pipeline_mode<synchronous>, transform_indices = @transform_4, window_bounds = array<i64: 8, 1>}, {transform_indices = @transform_5, window_bounds = array<i64: 1, 8, 1152>}]} {
    %c0 = arith.constant 0 : index
    %c0_0 = arith.constant 0 : index
    %c0_1 = arith.constant 0 : index
    %0 = vector.load %arg1[%c0, %c0_0, %c0_1] : memref<1x8x256xbf16, #tpu.memory_space<vmem>>, vector<1x8x256xbf16>
    %1 = vector.shape_cast %0 : vector<1x8x256xbf16> to vector<8x256xbf16>
    %c0_2 = arith.constant 0 : index
    %c0_3 = arith.constant 0 : index
    %2 = vector.load %arg2[%c0_2, %c0_3] : memref<256x1280xbf16, #tpu.memory_space<vmem>>, vector<256x1280xbf16>
    %cst = arith.constant dense<0.000000e+00> : vector<8x1280xf32>
    %3 = tpu.matmul %1, %2, %cst {dimension_numbers = #tpu.dot_dimension_numbers<[1], [0], [0], [1], [0, 0, 1, 1], [], []>} : vector<8x256xbf16>, vector<256x1280xbf16>, vector<8x1280xf32> -> vector<8x1280xf32>
    %c0_4 = arith.constant 0 : index
    %c0_5 = arith.constant 0 : index
    %4 = vector.load %arg4[%c0_4, %c0_5] : memref<8x72xbf16, #tpu.memory_space<vmem>>, vector<8x72xbf16>
    %5 = vector.extract_strided_slice %3 {offsets = [0, 0], sizes = [8, 1152], strides = [1, 1]} : vector<8x1280xf32> to vector<8x1152xf32>
    %6 = arith.truncf %5 : vector<8x1152xf32> to vector<8x1152xbf16>
    %7 = vector.extract_strided_slice %4 {offsets = [0, 0], sizes = [8, 8], strides = [1, 1]} : vector<8x72xbf16> to vector<8x8xbf16>
    %cst_6 = arith.constant dense<0.000000e+00> : vector<8x1152xf32>
    %8 = tpu.matmul %7, %6, %cst_6 {dimension_numbers = #tpu.dot_dimension_numbers<[1], [0], [0], [1], [0, 0, 1, 1], [], []>} : vector<8x8xbf16>, vector<8x1152xbf16>, vector<8x1152xf32> -> vector<8x1152xf32>
    %9 = vector.extract_strided_slice %3 {offsets = [0, 1], sizes = [8, 1152], strides = [1, 1]} : vector<8x1280xf32> to vector<8x1152xf32>
    %10 = arith.truncf %9 : vector<8x1152xf32> to vector<8x1152xbf16>
    %11 = vector.extract_strided_slice %4 {offsets = [0, 8], sizes = [8, 8], strides = [1, 1]} : vector<8x72xbf16> to vector<8x8xbf16>
    %cst_7 = arith.constant dense<0.000000e+00> : vector<8x1152xf32>
    %12 = tpu.matmul %11, %10, %cst_7 {dimension_numbers = #tpu.dot_dimension_numbers<[1], [0], [0], [1], [0, 0, 1, 1], [], []>} : vector<8x8xbf16>, vector<8x1152xbf16>, vector<8x1152xf32> -> vector<8x1152xf32>
    %13 = arith.addf %8, %12 : vector<8x1152xf32>
    %14 = vector.extract_strided_slice %3 {offsets = [0, 2], sizes = [8, 1152], strides = [1, 1]} : vector<8x1280xf32> to vector<8x1152xf32>
    %15 = arith.truncf %14 : vector<8x1152xf32> to vector<8x1152xbf16>
    %16 = vector.extract_strided_slice %4 {offsets = [0, 16], sizes = [8, 8], strides = [1, 1]} : vector<8x72xbf16> to vector<8x8xbf16>
    %cst_8 = arith.constant dense<0.000000e+00> : vector<8x1152xf32>
    %17 = tpu.matmul %16, %15, %cst_8 {dimension_numbers = #tpu.dot_dimension_numbers<[1], [0], [0], [1], [0, 0, 1, 1], [], []>} : vector<8x8xbf16>, vector<8x1152xbf16>, vector<8x1152xf32> -> vector<8x1152xf32>
    %18 = arith.addf %13, %17 : vector<8x1152xf32>
    %19 = vector.extract_strided_slice %3 {offsets = [0, 36], sizes = [8, 1152], strides = [1, 1]} : vector<8x1280xf32> to vector<8x1152xf32>
    %20 = arith.truncf %19 : vector<8x1152xf32> to vector<8x1152xbf16>
    %21 = vector.extract_strided_slice %4 {offsets = [0, 24], sizes = [8, 8], strides = [1, 1]} : vector<8x72xbf16> to vector<8x8xbf16>
    %cst_9 = arith.constant dense<0.000000e+00> : vector<8x1152xf32>
    %22 = tpu.matmul %21, %20, %cst_9 {dimension_numbers = #tpu.dot_dimension_numbers<[1], [0], [0], [1], [0, 0, 1, 1], [], []>} : vector<8x8xbf16>, vector<8x1152xbf16>, vector<8x1152xf32> -> vector<8x1152xf32>
    %23 = arith.addf %18, %22 : vector<8x1152xf32>
    %24 = vector.extract_strided_slice %3 {offsets = [0, 37], sizes = [8, 1152], strides = [1, 1]} : vector<8x1280xf32> to vector<8x1152xf32>
    %25 = arith.truncf %24 : vector<8x1152xf32> to vector<8x1152xbf16>
    %26 = vector.extract_strided_slice %4 {offsets = [0, 32], sizes = [8, 8], strides = [1, 1]} : vector<8x72xbf16> to vector<8x8xbf16>
    %cst_10 = arith.constant dense<0.000000e+00> : vector<8x1152xf32>
    %27 = tpu.matmul %26, %25, %cst_10 {dimension_numbers = #tpu.dot_dimension_numbers<[1], [0], [0], [1], [0, 0, 1, 1], [], []>} : vector<8x8xbf16>, vector<8x1152xbf16>, vector<8x1152xf32> -> vector<8x1152xf32>
    %28 = arith.addf %23, %27 : vector<8x1152xf32>
    %29 = vector.extract_strided_slice %3 {offsets = [0, 38], sizes = [8, 1152], strides = [1, 1]} : vector<8x1280xf32> to vector<8x1152xf32>
    %30 = arith.truncf %29 : vector<8x1152xf32> to vector<8x1152xbf16>
    %31 = vector.extract_strided_slice %4 {offsets = [0, 40], sizes = [8, 8], strides = [1, 1]} : vector<8x72xbf16> to vector<8x8xbf16>
    %cst_11 = arith.constant dense<0.000000e+00> : vector<8x1152xf32>
    %32 = tpu.matmul %31, %30, %cst_11 {dimension_numbers = #tpu.dot_dimension_numbers<[1], [0], [0], [1], [0, 0, 1, 1], [], []>} : vector<8x8xbf16>, vector<8x1152xbf16>, vector<8x1152xf32> -> vector<8x1152xf32>
    %33 = arith.addf %28, %32 : vector<8x1152xf32>
    %34 = vector.extract_strided_slice %3 {offsets = [0, 72], sizes = [8, 1152], strides = [1, 1]} : vector<8x1280xf32> to vector<8x1152xf32>
    %35 = arith.truncf %34 : vector<8x1152xf32> to vector<8x1152xbf16>
    %36 = vector.extract_strided_slice %4 {offsets = [0, 48], sizes = [8, 8], strides = [1, 1]} : vector<8x72xbf16> to vector<8x8xbf16>
    %cst_12 = arith.constant dense<0.000000e+00> : vector<8x1152xf32>
    %37 = tpu.matmul %36, %35, %cst_12 {dimension_numbers = #tpu.dot_dimension_numbers<[1], [0], [0], [1], [0, 0, 1, 1], [], []>} : vector<8x8xbf16>, vector<8x1152xbf16>, vector<8x1152xf32> -> vector<8x1152xf32>
    %38 = arith.addf %33, %37 : vector<8x1152xf32>
    %39 = vector.extract_strided_slice %3 {offsets = [0, 73], sizes = [8, 1152], strides = [1, 1]} : vector<8x1280xf32> to vector<8x1152xf32>
    %40 = arith.truncf %39 : vector<8x1152xf32> to vector<8x1152xbf16>
    %41 = vector.extract_strided_slice %4 {offsets = [0, 56], sizes = [8, 8], strides = [1, 1]} : vector<8x72xbf16> to vector<8x8xbf16>
    %cst_13 = arith.constant dense<0.000000e+00> : vector<8x1152xf32>
    %42 = tpu.matmul %41, %40, %cst_13 {dimension_numbers = #tpu.dot_dimension_numbers<[1], [0], [0], [1], [0, 0, 1, 1], [], []>} : vector<8x8xbf16>, vector<8x1152xbf16>, vector<8x1152xf32> -> vector<8x1152xf32>
    %43 = arith.addf %38, %42 : vector<8x1152xf32>
    %44 = vector.extract_strided_slice %3 {offsets = [0, 74], sizes = [8, 1152], strides = [1, 1]} : vector<8x1280xf32> to vector<8x1152xf32>
    %45 = arith.truncf %44 : vector<8x1152xf32> to vector<8x1152xbf16>
    %46 = vector.extract_strided_slice %4 {offsets = [0, 64], sizes = [8, 8], strides = [1, 1]} : vector<8x72xbf16> to vector<8x8xbf16>
    %cst_14 = arith.constant dense<0.000000e+00> : vector<8x1152xf32>
    %47 = tpu.matmul %46, %45, %cst_14 {dimension_numbers = #tpu.dot_dimension_numbers<[1], [0], [0], [1], [0, 0, 1, 1], [], []>} : vector<8x8xbf16>, vector<8x1152xbf16>, vector<8x1152xf32> -> vector<8x1152xf32>
    %48 = arith.addf %43, %47 : vector<8x1152xf32>
    %c0_15 = arith.constant 0 : index
    %c0_16 = arith.constant 0 : index
    %49 = vector.load %arg5[%c0_15, %c0_16] : memref<8x1xf32, #tpu.memory_space<vmem>>, vector<8x1xf32>
    %50 = vector.broadcast %49 : vector<8x1xf32> to vector<8x1152xf32>
    %51 = arith.addf %48, %50 : vector<8x1152xf32>
    %c0_17 = arith.constant 0 : index
    %c0_18 = arith.constant 0 : index
    %52 = vector.load %arg3[%c0_17, %c0_18] : memref<1x1152xf32, #tpu.memory_space<vmem>>, vector<1x1152xf32>
    %53 = vector.broadcast %52 : vector<1x1152xf32> to vector<8x1152xf32>
    %54 = arith.mulf %51, %53 : vector<8x1152xf32>
    %cst_19 = arith.constant dense<0.000000e+00> : vector<8xf32>
    %55 = vector.multi_reduction <add>, %54, %cst_19 [1] : vector<8x1152xf32> to vector<8xf32>
    %56 = vector.shape_cast %55 : vector<8xf32> to vector<8x1xf32>
    %57 = arith.mulf %51, %54 : vector<8x1152xf32>
    %cst_20 = arith.constant dense<0.000000e+00> : vector<8xf32>
    %58 = vector.multi_reduction <add>, %57, %cst_20 [1] : vector<8x1152xf32> to vector<8xf32>
    %59 = vector.shape_cast %58 : vector<8xf32> to vector<8x1xf32>
    %cst_21 = arith.constant 9.765625E-4 : f32
    %60 = vector.broadcast %cst_21 : f32 to vector<8x1xf32>
    %61 = arith.mulf %56, %60 : vector<8x1xf32>
    %cst_22 = arith.constant 9.765625E-4 : f32
    %62 = vector.broadcast %cst_22 : f32 to vector<8x1xf32>
    %63 = arith.mulf %59, %62 : vector<8x1xf32>
    %64 = arith.mulf %61, %61 : vector<8x1xf32>
    %65 = arith.subf %63, %64 : vector<8x1xf32>
    %cst_23 = arith.constant 0.000000e+00 : f32
    %66 = vector.broadcast %cst_23 : f32 to vector<8x1xf32>
    %67 = arith.maximumf %65, %66 : vector<8x1xf32>
    %68 = vector.broadcast %61 : vector<8x1xf32> to vector<8x1152xf32>
    %69 = arith.subf %51, %68 : vector<8x1152xf32>
    %cst_24 = arith.constant 9.99999974E-6 : f32
    %70 = vector.broadcast %cst_24 : f32 to vector<8x1xf32>
    %71 = arith.addf %67, %70 : vector<8x1xf32>
    %72 = math.rsqrt %71 : vector<8x1xf32>
    %73 = vector.broadcast %72 : vector<8x1xf32> to vector<8x1152xf32>
    %74 = arith.mulf %69, %73 : vector<8x1152xf32>
    %cst_25 = arith.constant 0.000000e+00 : f32
    %75 = vector.broadcast %cst_25 : f32 to vector<8x1152xf32>
    %76 = arith.cmpf ogt, %74, %75 : vector<8x1152xf32>
    %77 = math.exp %74 : vector<8x1152xf32>
    %cst_26 = arith.constant 1.000000e+00 : f32
    %78 = vector.broadcast %cst_26 : f32 to vector<8x1152xf32>
    %79 = arith.subf %77, %78 : vector<8x1152xf32>
    %80 = arith.select %76, %74, %79 : vector<8x1152xi1>, vector<8x1152xf32>
    %c0_27 = arith.constant 0 : index
    %c0_28 = arith.constant 0 : index
    %c0_29 = arith.constant 0 : index
    %81 = vector.load %arg6[%c0_27, %c0_28, %c0_29] : memref<1x8x1152xf32, #tpu.memory_space<vmem>>, vector<1x8x1152xf32>
    %82 = vector.shape_cast %81 : vector<1x8x1152xf32> to vector<8x1152xf32>
    %83 = vector.shape_cast %80 : vector<8x1152xf32> to vector<1x8x1152xf32>
    tpu.vector_store %arg6[%c0_27, %c0_28, %c0_29], %83 {strides = array<i32>} : memref<1x8x1152xf32, #tpu.memory_space<vmem>>, vector<1x8x1152xf32>,
    return
  }
  func.func @transform_0(%arg0: i32) -> (i32, i32, i32) {
    %c0_i32 = arith.constant 0 : i32
    %c0_i32_0 = arith.constant 0 : i32
    %c0_i32_1 = arith.constant 0 : i32
    return %arg0, %c0_i32, %c0_i32_0 : i32, i32, i32
  }
  func.func @transform_1(%arg0: i32) -> (i32, i32) {
    %c0_i32 = arith.constant 0 : i32
    %c0_i32_0 = arith.constant 0 : i32
    %c0_i32_1 = arith.constant 0 : i32
    return %c0_i32, %c0_i32_0 : i32, i32
  }
  func.func @transform_2(%arg0: i32) -> (i32, i32) {
    %c0_i32 = arith.constant 0 : i32
    %c0_i32_0 = arith.constant 0 : i32
    %c0_i32_1 = arith.constant 0 : i32
    return %c0_i32, %c0_i32_0 : i32, i32
  }
  func.func @transform_3(%arg0: i32) -> (i32, i32) {
    %c0_i32 = arith.constant 0 : i32
    %c0_i32_0 = arith.constant 0 : i32
    %c0_i32_1 = arith.constant 0 : i32
    return %c0_i32, %c0_i32_0 : i32, i32
  }
  func.func @transform_4(%arg0: i32) -> (i32, i32) {
    %c0_i32 = arith.constant 0 : i32
    %c0_i32_0 = arith.constant 0 : i32
    %c0_i32_1 = arith.constant 0 : i32
    return %c0_i32, %c0_i32_0 : i32, i32
  }
  func.func @transform_5(%arg0: i32) -> (i32, i32, i32) {
    %c0_i32 = arith.constant 0 : i32
    %c0_i32_0 = arith.constant 0 : i32
    %c0_i32_1 = arith.constant 0 : i32
    return %arg0, %c0_i32, %c0_i32_0 : i32, i32, i32
  }
}

</mosaic_0001>

<llo_original>
// kernel: tpu_custom_call.1
$region0: #{tpu_custom_call.1}
  #allocation0 [shape = 'u32[]', space=smem, size = 0x4, offset = 0x4, fixed_abs, tag = 'smem constant byte address 0x4 - core index']
  #allocation1 [shape = 'u32[144,128]{1,0:T(1,128)}', space=vmem, size = 0x12000, scoped, tag = 'internal scratch']
  %s0 = inlined_call_operand.hbm [shape: bf16[2,8,256], index: 0, kind: input, shape index: {}]
  %s1 = inlined_call_operand.hbm [shape: bf16[256,1280], index: 1, kind: input, shape index: {}]
  %s2 = inlined_call_operand.vmem [shape: f32[1,1152], index: 2, kind: input, shape index: {}]
  %s3 = inlined_call_operand.vmem [shape: bf16[8,72], index: 3, kind: input, shape index: {}]
  %s4 = inlined_call_operand.vmem [shape: f32[8,1], index: 4, kind: input, shape index: {}]
  %s5 = inlined_call_operand.hbm [shape: f32[2,8,1152], index: 5, kind: output, shape index: {}]
  %s6 = sld [smem:[#allocation0]]
  $region61: #{tpu_custom_call.1} parent=0
    _
  %s8 = ssub.s32 1, %s6
  %s9 = scalar_select 0, %s8, %s6
  $region1: #{tpu_custom_call.1} parent=0
    #allocation2 [shape = 'u8[8192]{0}', space=vmem, size = 0x2000, scoped, tag = 'input window, operand 0']
    #allocation3 [shape = 's32[2]{0}', space=sflag, size = 0x8, scoped, tag = 'scoped memory for tpu_custom_call.1']
    #allocation4 [shape = 's32[2]{0}', space=sflag, size = 0x8, scoped, tag = 'scoped memory for tpu_custom_call.1']
    #allocation5 [shape = 'u8[655360]{0}', space=vmem, size = 0xa0000, scoped, tag = 'input window, operand 1, single buffered']
    #allocation6 [shape = 's32[1]{0}', space=sflag, size = 0x4, scoped, tag = 'scoped memory for tpu_custom_call.1']
    #allocation7 [shape = 'u8[73728]{0}', space=vmem, size = 0x12000, scoped, tag = 'output window, operand 0']
    %10 = vsyncpa [#allocation3], 0
    %s11 = scalar_lea.sflag [#allocation3], 1
    %12 = vsyncpa %s11, 0
    %13 = vsyncpa [#allocation6], 0
    %14 = vsyncpa [#allocation4], 0
    %s15 = scalar_lea.sflag [#allocation4], 1
    %16 = vsyncpa %s15, 0
    loop: start=0, step=1, limit=4
    $region2: #{tpu_custom_call.1} parent=1 // loop_pre_header
      _
    $region3: #{tpu_custom_call.1} parent=1 // loop_header
      %s18 = sphi 0, %s22
      %p19 = scmp.ge.s32.totalorder %s18, 4
      %s28 = sphi 0, %s30
      %s31 = sphi 0, %s28
      %s32 = sphi 0, %s31
      %s48 = sphi 0, %s32
      %s52 = sphi 0, %s52
      %s54 = sphi 0, %s52
      %s55 = sphi 0, %s54
      %s69 = sphi 0, %s55
      %s73 = sphi 0, %s73
      %s75 = sphi 0, %s73
      %s76 = sphi 0, %s75
      %s90 = sphi 0, %s76
      %s94 = sphi 0, %s94
      %s96 = sphi 0, %s94
      %s97 = sphi 0, %s96
      %s111 = sphi 0, %s97
      %s115 = sphi 0, %s115
      %s117 = sphi 0, %s115
      %s118 = sphi 0, %s117
      %s132 = sphi 0, %s118
      %s138 = sphi 0, %s140
      %s141 = sphi 0, %s138
      %s142 = sphi 0, %s141
      %s158 = sphi 0, %s142
    $region4: #{tpu_custom_call.1} parent=1 // loop_header_branch
      %21 = sbr.rel (%p19) target = $region8
    $region5: #{tpu_custom_call.1} parent=1 // loop_body
      %s23 = ssub.s32 %s18, 1
      %s24 = ssub.s32 %s18, 2
      %s25 = sadd.s32 %s18, 1
      %s26 = ssub.s32 %s18, %s25
      %p27 = scmp.eq.s32.totalorder %s26, 0
      %s29 = sadd.s32 %s28, 1
      %s30 = scalar_select %p27, %s28, %s29
      %p33 = pneg %p27
      %p34 = scmp.eq.s32.totalorder %s18, 1
      %p35 = por %p33, %p34
      %p36 = scmp.ne.s32.totalorder %s28, %s31
      %p37 = scmp.eq.s32.totalorder %s18, 0
      %p38 = por %p36, %p37
      %p39 = scmp.ne.s32.totalorder %s28, %s31
      %p40 = scmp.eq.s32.totalorder %s23, 1
      %p41 = por %p39, %p40
      %p42 = scmp.ne.s32.totalorder %s31, %s32
      %p43 = scmp.eq.s32.totalorder %s23, 0
      %p44 = por %p42, %p43
      %p45 = scmp.ne.s32.totalorder %s31, %s32
      %p46 = scmp.eq.s32.totalorder %s24, 1
      %p47 = por %p45, %p46
      %p49 = scmp.ne.s32.totalorder %s32, %s48
      %p50 = scmp.eq.s32.totalorder %s24, 0
      %p51 = por %p49, %p50
      %s53 = sadd.s32 %s52, 1
      %p56 = scmp.eq.s32.totalorder %s18, 1
      %p57 = scmp.ne.s32.totalorder %s52, %s54
      %p58 = scmp.eq.s32.totalorder %s18, 0
      %p59 = por %p57, %p58
      %p60 = scmp.ne.s32.totalorder %s52, %s54
      %p61 = scmp.eq.s32.totalorder %s23, 1
      %p62 = por %p60, %p61
      %p63 = scmp.ne.s32.totalorder %s54, %s55
      %p64 = scmp.eq.s32.totalorder %s23, 0
      %p65 = por %p63, %p64
      %p66 = scmp.ne.s32.totalorder %s54, %s55
      %p67 = scmp.eq.s32.totalorder %s24, 1
      %p68 = por %p66, %p67
      %p70 = scmp.ne.s32.totalorder %s55, %s69
      %p71 = scmp.eq.s32.totalorder %s24, 0
      %p72 = por %p70, %p71
      %s74 = sadd.s32 %s73, 1
      %p77 = scmp.eq.s32.totalorder %s18, 1
      %p78 = scmp.ne.s32.totalorder %s73, %s75
      %p79 = scmp.eq.s32.totalorder %s18, 0
      %p80 = por %p78, %p79
      %p81 = scmp.ne.s32.totalorder %s73, %s75
      %p82 = scmp.eq.s32.totalorder %s23, 1
      %p83 = por %p81, %p82
      %p84 = scmp.ne.s32.totalorder %s75, %s76
      %p85 = scmp.eq.s32.totalorder %s23, 0
      %p86 = por %p84, %p85
      %p87 = scmp.ne.s32.totalorder %s75, %s76
      %p88 = scmp.eq.s32.totalorder %s24, 1
      %p89 = por %p87, %p88
      %p91 = scmp.ne.s32.totalorder %s76, %s90
      %p92 = scmp.eq.s32.totalorder %s24, 0
      %p93 = por %p91, %p92
      %s95 = sadd.s32 %s94, 1
      %p98 = scmp.eq.s32.totalorder %s18, 1
      %p99 = scmp.ne.s32.totalorder %s94, %s96
      %p100 = scmp.eq.s32.totalorder %s18, 0
      %p101 = por %p99, %p100
      %p102 = scmp.ne.s32.totalorder %s94, %s96
      %p103 = scmp.eq.s32.totalorder %s23, 1
      %p104 = por %p102, %p103
      %p105 = scmp.ne.s32.totalorder %s96, %s97
      %p106 = scmp.eq.s32.totalorder %s23, 0
      %p107 = por %p105, %p106
      %p108 = scmp.ne.s32.totalorder %s96, %s97
      %p109 = scmp.eq.s32.totalorder %s24, 1
      %p110 = por %p108, %p109
      %p112 = scmp.ne.s32.totalorder %s97, %s111
      %p113 = scmp.eq.s32.totalorder %s24, 0
      %p114 = por %p112, %p113
      %s116 = sadd.s32 %s115, 1
      %p119 = scmp.eq.s32.totalorder %s18, 1
      %p120 = scmp.ne.s32.totalorder %s115, %s117
      %p121 = scmp.eq.s32.totalorder %s18, 0
      %p122 = por %p120, %p121
      %p123 = scmp.ne.s32.totalorder %s115, %s117
      %p124 = scmp.eq.s32.totalorder %s23, 1
      %p125 = por %p123, %p124
      %p126 = scmp.ne.s32.totalorder %s117, %s118
      %p127 = scmp.eq.s32.totalorder %s23, 0
      %p128 = por %p126, %p127
      %p129 = scmp.ne.s32.totalorder %s117, %s118
      %p130 = scmp.eq.s32.totalorder %s24, 1
      %p131 = por %p129, %p130
      %p133 = scmp.ne.s32.totalorder %s118, %s132
      %p134 = scmp.eq.s32.totalorder %s24, 0
      %p135 = por %p133, %p134
      %s136 = ssub.s32 %s18, %s25
      %p137 = scmp.eq.s32.totalorder %s136, 0
      %s139 = sadd.s32 %s138, 1
      %s140 = scalar_select %p137, %s138, %s139
      %p143 = pneg %p137
      %p144 = scmp.eq.s32.totalorder %s18, 1
      %p145 = por %p143, %p144
      %p146 = scmp.ne.s32.totalorder %s138, %s141
      %p147 = scmp.eq.s32.totalorder %s18, 0
      %p148 = por %p146, %p147
      %p149 = scmp.ne.s32.totalorder %s138, %s141
      %p150 = scmp.eq.s32.totalorder %s23, 1
      %p151 = por %p149, %p150
      %p152 = scmp.ne.s32.totalorder %s141, %s142
      %p153 = scmp.eq.s32.totalorder %s23, 0
      %p154 = por %p152, %p153
      %p155 = scmp.ne.s32.totalorder %s141, %s142
      %p156 = scmp.eq.s32.totalorder %s24, 1
      %p157 = por %p155, %p156
      %p159 = scmp.ne.s32.totalorder %s142, %s158
      %p160 = scmp.eq.s32.totalorder %s24, 0
      %p161 = por %p159, %p160
      %p162 = scmp.le.s32.totalorder 1, %s18
      %p163 = scmp.lt.s32.totalorder %s18, 3
      %p164 = pnand %p162, %p163
      %p165 = pneg %p164
      // Predicated region
      $region9: #{tpu_custom_call.1} parent=5 // pred_check
        _
      $region10: #{tpu_custom_call.1} parent=5 // pred_check_branch
        %167 = sbr.rel (%p164) target = $region12
      $region11: #{tpu_custom_call.1} parent=5 // pred_region
        %s168 = ssub.s32 %s18, 1
        // Predicated region
        $region13: #{tpu_custom_call.1} parent=11 // pred_check
          %p169 = pneg %p65
        $region14: #{tpu_custom_call.1} parent=11 // pred_check_branch
          %171 = sbr.rel (%p169) target = $region16
        $region15: #{tpu_custom_call.1} parent=11 // pred_region
          %s173 = ssub.s32 20480, 20480
          %174 = vsyncadd [#allocation6], %s173
          %s175 = sshll.u32 [#allocation5], 4
          %s176 = int_to_ptr.vmem [resolvable:$true] %s175
          %181 = dma.hbm_to_vmem [thread:$0]  %s1, 20480, %s176, [#allocation6], 640, 640, 40
        $region16: #{tpu_custom_call.1} parent=11 // pred_fallthru
          _
        // Predicated region
        $region17: #{tpu_custom_call.1} parent=11 // pred_check
          %p182 = pneg %p86
        $region18: #{tpu_custom_call.1} parent=11 // pred_check_branch
          %184 = sbr.rel (%p182) target = $region20
        $region19: #{tpu_custom_call.1} parent=11 // pred_region
          _
        $region20: #{tpu_custom_call.1} parent=11 // pred_fallthru
          _
        // Predicated region
        $region21: #{tpu_custom_call.1} parent=11 // pred_check
          %p185 = pneg %p107
        $region22: #{tpu_custom_call.1} parent=11 // pred_check_branch
          %187 = sbr.rel (%p185) target = $region24
        $region23: #{tpu_custom_call.1} parent=11 // pred_region
          _
        $region24: #{tpu_custom_call.1} parent=11 // pred_fallthru
          _
        // Predicated region
        $region25: #{tpu_custom_call.1} parent=11 // pred_check
          %p188 = pneg %p128
        $region26: #{tpu_custom_call.1} parent=11 // pred_check_branch
          %190 = sbr.rel (%p188) target = $region28
        $region27: #{tpu_custom_call.1} parent=11 // pred_region
          _
        $region28: #{tpu_custom_call.1} parent=11 // pred_fallthru
          _
      $region12: #{tpu_custom_call.1} parent=5 // pred_fallthru
        _
      %p191 = scmp.lt.s32.totalorder %s18, 2
      // Predicated region
      $region29: #{tpu_custom_call.1} parent=5 // pred_check
        %p192 = pneg %p191
      $region30: #{tpu_custom_call.1} parent=5 // pred_check_branch
        %194 = sbr.rel (%p192) target = $region32
      $region31: #{tpu_custom_call.1} parent=5 // pred_region
        // Predicated region
        $region33: #{tpu_custom_call.1} parent=31 // pred_check
          %p195 = pneg %p38
        $region34: #{tpu_custom_call.1} parent=31 // pred_check_branch
          %197 = sbr.rel (%p195) target = $region36
        $region35: #{tpu_custom_call.1} parent=31 // pred_region
          %s198 = sand.u32 %s28, 1
          %s199 = scalar_lea.sflag [#allocation3], %s198
          %s200 = sand.u32 %s28, 1
          %s201 = smul.addr %s200, 8
          %s202 = scalar_lea.vmem [#allocation2], %s201
          %s204 = ssub.s32 128, 128
          %205 = vsyncadd %s199, %s204
          %s206 = smul.addr %s18, 2
          %s207 = smul.addr %s206, 64
          %s208 = scalar_lea.hbm %s0, %s207
          %s210 = sshll.u32 %s202, 4
          %s211 = int_to_ptr.vmem [resolvable:$true] %s210
          %213 = dma.hbm_to_vmem [thread:$0]  %s208, 128, %s211, %s199
        $region36: #{tpu_custom_call.1} parent=31 // pred_fallthru
          _
      $region32: #{tpu_custom_call.1} parent=5 // pred_fallthru
        _
      %p214 = scmp.le.s32.totalorder 1, %s18
      %p215 = scmp.lt.s32.totalorder %s18, 3
      %p216 = pnand %p214, %p215
      %p217 = pneg %p216
      // Predicated region
      $region37: #{tpu_custom_call.1} parent=5 // pred_check
        _
      $region38: #{tpu_custom_call.1} parent=5 // pred_check_branch
        %219 = sbr.rel (%p216) target = $region40
      $region39: #{tpu_custom_call.1} parent=5 // pred_region
        %s220 = ssub.s32 %s18, 1
        %s221 = sand.u32 %s31, 1
        %s222 = scalar_lea.sflag [#allocation3], %s221
        %s223 = sand.u32 %s31, 1
        %s224 = smul.addr %s223, 8
        %s225 = scalar_lea.vmem [#allocation2], %s224
        // Predicated region
        $region41: #{tpu_custom_call.1} parent=39 // pred_check
          %p226 = pneg %p44
        $region42: #{tpu_custom_call.1} parent=39 // pred_check_branch
          %228 = sbr.rel (%p226) target = $region44
        $region43: #{tpu_custom_call.1} parent=39 // pred_region
          %229 = dma.done %s222, 128
        $region44: #{tpu_custom_call.1} parent=39 // pred_fallthru
          _
        // Predicated region
        $region45: #{tpu_custom_call.1} parent=39 // pred_check
          %p230 = pneg %p65
        $region46: #{tpu_custom_call.1} parent=39 // pred_check_branch
          %232 = sbr.rel (%p230) target = $region48
        $region47: #{tpu_custom_call.1} parent=39 // pred_region
          %233 = dma.done [#allocation6], 20480
        $region48: #{tpu_custom_call.1} parent=39 // pred_fallthru
          _
        %s234 = sand.u32 %s31, 1
        %s235 = scalar_lea.sflag [#allocation3], %s234
        %s236 = sand.u32 %s31, 1
        %s237 = smul.addr %s236, 8
        %s238 = scalar_lea.vmem [#allocation2], %s237
        %p239 = pneg %p44
        %p240 = pneg %p41
        %p241 = pneg %p65
        %p242 = pneg %p62
        %p243 = pneg %p86
        %p244 = pneg %p83
        %p245 = pneg %p107
        %p246 = pneg %p104
        %p247 = pneg %p128
        %p248 = pneg %p125
        %p249 = pneg %p154
        %p250 = pneg %p151
        %s251 = sand.u32 %s141, 1
        %s252 = scalar_lea.sflag [#allocation4], %s251
        %s253 = sand.u32 %s141, 1
        %s254 = smul.addr %s253, 72
        %s255 = scalar_lea.vmem [#allocation7], %s254
        %v257 = vld [vmem:[%s225] sm:$0xff]
        %v258 = vld [vmem:[#allocation5] sm:$0xff]
        %v259 = vld [vmem:[#allocation5 + $0x8] sm:$0xff]
        %v260 = vld [vmem:[#allocation5 + $0x10] sm:$0xff]
        %v261 = vld [vmem:[#allocation5 + $0x18] sm:$0xff]
        %v262 = vld [vmem:[#allocation5 + $0x20] sm:$0xff]
        %v263 = vld [vmem:[#allocation5 + $0x28] sm:$0xff]
        %v264 = vld [vmem:[#allocation5 + $0x30] sm:$0xff]
        %v265 = vld [vmem:[#allocation5 + $0x38] sm:$0xff]
        %v266 = vld [vmem:[#allocation5 + $0x40] sm:$0xff]
        %v267 = vld [vmem:[#allocation5 + $0x48] sm:$0xff]
        %v268 = vld [vmem:[#allocation5 + $0x50] sm:$0xff]
        %v269 = vld [vmem:[#allocation5 + $0x58] sm:$0xff]
        %v270 = vld [vmem:[#allocation5 + $0x60] sm:$0xff]
        %v271 = vld [vmem:[#allocation5 + $0x68] sm:$0xff]
        %v272 = vld [vmem:[#allocation5 + $0x70] sm:$0xff]
        %v273 = vld [vmem:[#allocation5 + $0x78] sm:$0xff]
        %v274 = vld [vmem:[#allocation5 + $0x80] sm:$0xff]
        %v275 = vld [vmem:[#allocation5 + $0x88] sm:$0xff]
        %v276 = vld [vmem:[#allocation5 + $0x90] sm:$0xff]
        %v277 = vld [vmem:[#allocation5 + $0x98] sm:$0xff]
        %v278 = vld [vmem:[#allocation5 + $0xa0] sm:$0xff]
        %v279 = vld [vmem:[#allocation5 + $0xa8] sm:$0xff]
        %v280 = vld [vmem:[#allocation5 + $0xb0] sm:$0xff]
        %v281 = vld [vmem:[#allocation5 + $0xb8] sm:$0xff]
        %v282 = vld [vmem:[#allocation5 + $0xc0] sm:$0xff]
        %v283 = vld [vmem:[#allocation5 + $0xc8] sm:$0xff]
        %v284 = vld [vmem:[#allocation5 + $0xd0] sm:$0xff]
        %v285 = vld [vmem:[#allocation5 + $0xd8] sm:$0xff]
        %v286 = vld [vmem:[#allocation5 + $0xe0] sm:$0xff]
        %v287 = vld [vmem:[#allocation5 + $0xe8] sm:$0xff]
        %v288 = vld [vmem:[#allocation5 + $0xf0] sm:$0xff]
        %v289 = vld [vmem:[#allocation5 + $0xf8] sm:$0xff]
        %v290 = vld [vmem:[#allocation5 + $0x100] sm:$0xff]
        %v291 = vld [vmem:[#allocation5 + $0x108] sm:$0xff]
        %v292 = vld [vmem:[#allocation5 + $0x110] sm:$0xff]
        %v293 = vld [vmem:[#allocation5 + $0x118] sm:$0xff]
        %v294 = vld [vmem:[#allocation5 + $0x120] sm:$0xff]
        %v295 = vld [vmem:[#allocation5 + $0x128] sm:$0xff]
        %v296 = vld [vmem:[#allocation5 + $0x130] sm:$0xff]
        %v297 = vld [vmem:[#allocation5 + $0x138] sm:$0xff]
        %v298 = vld [vmem:[#allocation5 + $0x140] sm:$0xff]
        %v299 = vld [vmem:[#allocation5 + $0x148] sm:$0xff]
        %v300 = vld [vmem:[#allocation5 + $0x150] sm:$0xff]
        %v301 = vld [vmem:[#allocation5 + $0x158] sm:$0xff]
        %v302 = vld [vmem:[#allocation5 + $0x160] sm:$0xff]
        %v303 = vld [vmem:[#allocation5 + $0x168] sm:$0xff]
        %v304 = vld [vmem:[#allocation5 + $0x170] sm:$0xff]
        %v305 = vld [vmem:[#allocation5 + $0x178] sm:$0xff]
        %v306 = vld [vmem:[#allocation5 + $0x180] sm:$0xff]
        %v307 = vld [vmem:[#allocation5 + $0x188] sm:$0xff]
        %v308 = vld [vmem:[#allocation5 + $0x190] sm:$0xff]
        %v309 = vld [vmem:[#allocation5 + $0x198] sm:$0xff]
        %v310 = vld [vmem:[#allocation5 + $0x1a0] sm:$0xff]
        %v311 = vld [vmem:[#allocation5 + $0x1a8] sm:$0xff]
        %v312 = vld [vmem:[#allocation5 + $0x1b0] sm:$0xff]
        %v313 = vld [vmem:[#allocation5 + $0x1b8] sm:$0xff]
        %v314 = vld [vmem:[#allocation5 + $0x1c0] sm:$0xff]
        %v315 = vld [vmem:[#allocation5 + $0x1c8] sm:$0xff]
        %v316 = vld [vmem:[#allocation5 + $0x1d0] sm:$0xff]
        %v317 = vld [vmem:[#allocation5 + $0x1d8] sm:$0xff]
        %v318 = vld [vmem:[#allocation5 + $0x1e0] sm:$0xff]
        %v319 = vld [vmem:[#allocation5 + $0x1e8] sm:$0xff]
        %v320 = vld [vmem:[#allocation5 + $0x1f0] sm:$0xff]
        %v321 = vld [vmem:[#allocation5 + $0x1f8] sm:$0xff]
        %v322 = vld [vmem:[#allocation5 + $0x200] sm:$0xff]
        %v323 = vld [vmem:[#allocation5 + $0x208] sm:$0xff]
        %v324 = vld [vmem:[#allocation5 + $0x210] sm:$0xff]
        %v325 = vld [vmem:[#allocation5 + $0x218] sm:$0xff]
        %v326 = vld [vmem:[#allocation5 + $0x220] sm:$0xff]
        %v327 = vld [vmem:[#allocation5 + $0x228] sm:$0xff]
        %v328 = vld [vmem:[#allocation5 + $0x230] sm:$0xff]
        %v329 = vld [vmem:[#allocation5 + $0x238] sm:$0xff]
        %v330 = vld [vmem:[#allocation5 + $0x240] sm:$0xff]
        %v331 = vld [vmem:[#allocation5 + $0x248] sm:$0xff]
        %v332 = vld [vmem:[#allocation5 + $0x250] sm:$0xff]
        %v333 = vld [vmem:[#allocation5 + $0x258] sm:$0xff]
        %v334 = vld [vmem:[#allocation5 + $0x260] sm:$0xff]
        %v335 = vld [vmem:[#allocation5 + $0x268] sm:$0xff]
        %v336 = vld [vmem:[#allocation5 + $0x270] sm:$0xff]
        %v337 = vld [vmem:[#allocation5 + $0x278] sm:$0xff]
        %v338 = vld [vmem:[#allocation5 + $0x280] sm:$0xff]
        %v339 = vld [vmem:[#allocation5 + $0x288] sm:$0xff]
        %v340 = vld [vmem:[#allocation5 + $0x290] sm:$0xff]
        %v341 = vld [vmem:[#allocation5 + $0x298] sm:$0xff]
        %v342 = vld [vmem:[#allocation5 + $0x2a0] sm:$0xff]
        %v343 = vld [vmem:[#allocation5 + $0x2a8] sm:$0xff]
        %v344 = vld [vmem:[#allocation5 + $0x2b0] sm:$0xff]
        %v345 = vld [vmem:[#allocation5 + $0x2b8] sm:$0xff]
        %v346 = vld [vmem:[#allocation5 + $0x2c0] sm:$0xff]
        %v347 = vld [vmem:[#allocation5 + $0x2c8] sm:$0xff]
        %v348 = vld [vmem:[#allocation5 + $0x2d0] sm:$0xff]
        %v349 = vld [vmem:[#allocation5 + $0x2d8] sm:$0xff]
        %v350 = vld [vmem:[#allocation5 + $0x2e0] sm:$0xff]
        %v351 = vld [vmem:[#allocation5 + $0x2e8] sm:$0xff]
        %v352 = vld [vmem:[#allocation5 + $0x2f0] sm:$0xff]
        %v353 = vld [vmem:[#allocation5 + $0x2f8] sm:$0xff]
        %v354 = vld [vmem:[#allocation5 + $0x300] sm:$0xff]
        %v355 = vld [vmem:[#allocation5 + $0x308] sm:$0xff]
        %v356 = vld [vmem:[#allocation5 + $0x310] sm:$0xff]
        %v357 = vld [vmem:[#allocation5 + $0x318] sm:$0xff]
        %v358 = vld [vmem:[#allocation5 + $0x320] sm:$0xff]
        %v359 = vld [vmem:[#allocation5 + $0x328] sm:$0xff]
        %v360 = vld [vmem:[#allocation5 + $0x330] sm:$0xff]
        %v361 = vld [vmem:[#allocation5 + $0x338] sm:$0xff]
        %v362 = vld [vmem:[#allocation5 + $0x340] sm:$0xff]
        %v363 = vld [vmem:[#allocation5 + $0x348] sm:$0xff]
        %v364 = vld [vmem:[#allocation5 + $0x350] sm:$0xff]
        %v365 = vld [vmem:[#allocation5 + $0x358] sm:$0xff]
        %v366 = vld [vmem:[#allocation5 + $0x360] sm:$0xff]
        %v367 = vld [vmem:[#allocation5 + $0x368] sm:$0xff]
        %v368 = vld [vmem:[#allocation5 + $0x370] sm:$0xff]
        %v369 = vld [vmem:[#allocation5 + $0x378] sm:$0xff]
        %v370 = vld [vmem:[#allocation5 + $0x380] sm:$0xff]
        %v371 = vld [vmem:[#allocation5 + $0x388] sm:$0xff]
        %v372 = vld [vmem:[#allocation5 + $0x390] sm:$0xff]
        %v373 = vld [vmem:[#allocation5 + $0x398] sm:$0xff]
        %v374 = vld [vmem:[#allocation5 + $0x3a0] sm:$0xff]
        %v375 = vld [vmem:[#allocation5 + $0x3a8] sm:$0xff]
        %v376 = vld [vmem:[#allocation5 + $0x3b0] sm:$0xff]
        %v377 = vld [vmem:[#allocation5 + $0x3b8] sm:$0xff]
        %v378 = vld [vmem:[#allocation5 + $0x3c0] sm:$0xff]
        %v379 = vld [vmem:[#allocation5 + $0x3c8] sm:$0xff]
        %v380 = vld [vmem:[#allocation5 + $0x3d0] sm:$0xff]
        %v381 = vld [vmem:[#allocation5 + $0x3d8] sm:$0xff]
        %v382 = vld [vmem:[#allocation5 + $0x3e0] sm:$0xff]
        %v383 = vld [vmem:[#allocation5 + $0x3e8] sm:$0xff]
        %v384 = vld [vmem:[#allocation5 + $0x3f0] sm:$0xff]
        %v385 = vld [vmem:[#allocation5 + $0x3f8] sm:$0xff]
        %v386 = vld [vmem:[#allocation5 + $0x400] sm:$0xff]
        %v387 = vld [vmem:[#allocation5 + $0x408] sm:$0xff]
        %v388 = vld [vmem:[#allocation5 + $0x410] sm:$0xff]
        %v389 = vld [vmem:[#allocation5 + $0x418] sm:$0xff]
        %v390 = vld [vmem:[#allocation5 + $0x420] sm:$0xff]
        %v391 = vld [vmem:[#allocation5 + $0x428] sm:$0xff]
        %v392 = vld [vmem:[#allocation5 + $0x430] sm:$0xff]
        %v393 = vld [vmem:[#allocation5 + $0x438] sm:$0xff]
        %v394 = vld [vmem:[#allocation5 + $0x440] sm:$0xff]
        %v395 = vld [vmem:[#allocation5 + $0x448] sm:$0xff]
        %v396 = vld [vmem:[#allocation5 + $0x450] sm:$0xff]
        %v397 = vld [vmem:[#allocation5 + $0x458] sm:$0xff]
        %v398 = vld [vmem:[#allocation5 + $0x460] sm:$0xff]
        %v399 = vld [vmem:[#allocation5 + $0x468] sm:$0xff]
        %v400 = vld [vmem:[#allocation5 + $0x470] sm:$0xff]
        %v401 = vld [vmem:[#allocation5 + $0x478] sm:$0xff]
        %v402 = vld [vmem:[#allocation5 + $0x480] sm:$0xff]
        %v403 = vld [vmem:[#allocation5 + $0x488] sm:$0xff]
        %v404 = vld [vmem:[#allocation5 + $0x490] sm:$0xff]
        %v405 = vld [vmem:[#allocation5 + $0x498] sm:$0xff]
        %v406 = vld [vmem:[#allocation5 + $0x4a0] sm:$0xff]
        %v407 = vld [vmem:[#allocation5 + $0x4a8] sm:$0xff]
        %v408 = vld [vmem:[#allocation5 + $0x4b0] sm:$0xff]
        %v409 = vld [vmem:[#allocation5 + $0x4b8] sm:$0xff]
        %v410 = vld [vmem:[#allocation5 + $0x4c0] sm:$0xff]
        %v411 = vld [vmem:[#allocation5 + $0x4c8] sm:$0xff]
        %v412 = vld [vmem:[#allocation5 + $0x4d0] sm:$0xff]
        %v413 = vld [vmem:[#allocation5 + $0x4d8] sm:$0xff]
        %v414 = vld [vmem:[#allocation5 + $0x4e0] sm:$0xff]
        %v415 = vld [vmem:[#allocation5 + $0x4e8] sm:$0xff]
        %v416 = vld [vmem:[#allocation5 + $0x4f0] sm:$0xff]
        %v417 = vld [vmem:[#allocation5 + $0x4f8] sm:$0xff]
        %v419 = vunpack.c.l.b16 %v257
        %v420 = vunpack.c.h.b16 %v257
        %v421 = vpack.c.b16 %v419, %v419
        %v422 = vpack.c.b16 %v420, %v420
        %v585 = vunpack.c.l.b16 %v258
        %v586 = vunpack.c.h.b16 %v258
        %v587 = vunpack.c.l.b16 %v259
        %v588 = vunpack.c.h.b16 %v259
        %v589 = vunpack.c.l.b16 %v260
        %v590 = vunpack.c.h.b16 %v260
        %v591 = vunpack.c.l.b16 %v261
        %v592 = vunpack.c.h.b16 %v261
        %v593 = vunpack.c.l.b16 %v262
        %v594 = vunpack.c.h.b16 %v262
        %v595 = vunpack.c.l.b16 %v263
        %v596 = vunpack.c.h.b16 %v263
        %v597 = vunpack.c.l.b16 %v264
        %v598 = vunpack.c.h.b16 %v264
        %v599 = vunpack.c.l.b16 %v265
        %v600 = vunpack.c.h.b16 %v265
        %v601 = vunpack.c.l.b16 %v266
        %v602 = vunpack.c.h.b16 %v266
        %v603 = vunpack.c.l.b16 %v267
        %v604 = vunpack.c.h.b16 %v267
        %v605 = vunpack.c.l.b16 %v268
        %v606 = vunpack.c.h.b16 %v268
        %v607 = vunpack.c.l.b16 %v269
        %v608 = vunpack.c.h.b16 %v269
        %v609 = vunpack.c.l.b16 %v270
        %v610 = vunpack.c.h.b16 %v270
        %v611 = vunpack.c.l.b16 %v271
        %v612 = vunpack.c.h.b16 %v271
        %v613 = vunpack.c.l.b16 %v272
        %v614 = vunpack.c.h.b16 %v272
        %v615 = vunpack.c.l.b16 %v273
        %v616 = vunpack.c.h.b16 %v273
        %v617 = vunpack.c.l.b16 %v274
        %v618 = vunpack.c.h.b16 %v274
        %v619 = vunpack.c.l.b16 %v275
        %v620 = vunpack.c.h.b16 %v275
        %v621 = vunpack.c.l.b16 %v276
        %v622 = vunpack.c.h.b16 %v276
        %v623 = vunpack.c.l.b16 %v277
        %v624 = vunpack.c.h.b16 %v277
        %v625 = vunpack.c.l.b16 %v278
        %v626 = vunpack.c.h.b16 %v278
        %v627 = vunpack.c.l.b16 %v279
        %v628 = vunpack.c.h.b16 %v279
        %v629 = vunpack.c.l.b16 %v280
        %v630 = vunpack.c.h.b16 %v280
        %v631 = vunpack.c.l.b16 %v281
        %v632 = vunpack.c.h.b16 %v281
        %v633 = vunpack.c.l.b16 %v282
        %v634 = vunpack.c.h.b16 %v282
        %v635 = vunpack.c.l.b16 %v283
        %v636 = vunpack.c.h.b16 %v283
        %v637 = vunpack.c.l.b16 %v284
        %v638 = vunpack.c.h.b16 %v284
        %v639 = vunpack.c.l.b16 %v285
        %v640 = vunpack.c.h.b16 %v285
        %v641 = vunpack.c.l.b16 %v286
        %v642 = vunpack.c.h.b16 %v286
        %v643 = vunpack.c.l.b16 %v287
        %v644 = vunpack.c.h.b16 %v287
        %v645 = vunpack.c.l.b16 %v288
        %v646 = vunpack.c.h.b16 %v288
        %v647 = vunpack.c.l.b16 %v289
        %v648 = vunpack.c.h.b16 %v289
        %v649 = vunpack.c.l.b16 %v290
        %v650 = vunpack.c.h.b16 %v290
        %v651 = vunpack.c.l.b16 %v291
        %v652 = vunpack.c.h.b16 %v291
        %v653 = vunpack.c.l.b16 %v292
        %v654 = vunpack.c.h.b16 %v292
        %v655 = vunpack.c.l.b16 %v293
        %v656 = vunpack.c.h.b16 %v293
        %v657 = vunpack.c.l.b16 %v294
        %v658 = vunpack.c.h.b16 %v294
        %v659 = vunpack.c.l.b16 %v295
        %v660 = vunpack.c.h.b16 %v295
        %v661 = vunpack.c.l.b16 %v296
        %v662 = vunpack.c.h.b16 %v296
        %v663 = vunpack.c.l.b16 %v297
        %v664 = vunpack.c.h.b16 %v297
        %v665 = vunpack.c.l.b16 %v298
        %v666 = vunpack.c.h.b16 %v298
        %v667 = vunpack.c.l.b16 %v299
        %v668 = vunpack.c.h.b16 %v299
        %v669 = vunpack.c.l.b16 %v300
        %v670 = vunpack.c.h.b16 %v300
        %v671 = vunpack.c.l.b16 %v301
        %v672 = vunpack.c.h.b16 %v301
        %v673 = vunpack.c.l.b16 %v302
        %v674 = vunpack.c.h.b16 %v302
        %v675 = vunpack.c.l.b16 %v303
        %v676 = vunpack.c.h.b16 %v303
        %v677 = vunpack.c.l.b16 %v304
        %v678 = vunpack.c.h.b16 %v304
        %v679 = vunpack.c.l.b16 %v305
        %v680 = vunpack.c.h.b16 %v305
        %v681 = vunpack.c.l.b16 %v306
        %v682 = vunpack.c.h.b16 %v306
        %v683 = vunpack.c.l.b16 %v307
        %v684 = vunpack.c.h.b16 %v307
        %v685 = vunpack.c.l.b16 %v308
        %v686 = vunpack.c.h.b16 %v308
        %v687 = vunpack.c.l.b16 %v309
        %v688 = vunpack.c.h.b16 %v309
        %v689 = vunpack.c.l.b16 %v310
        %v690 = vunpack.c.h.b16 %v310
        %v691 = vunpack.c.l.b16 %v311
        %v692 = vunpack.c.h.b16 %v311
        %v693 = vunpack.c.l.b16 %v312
        %v694 = vunpack.c.h.b16 %v312
        %v695 = vunpack.c.l.b16 %v313
        %v696 = vunpack.c.h.b16 %v313
        %v697 = vunpack.c.l.b16 %v314
        %v698 = vunpack.c.h.b16 %v314
        %v699 = vunpack.c.l.b16 %v315
        %v700 = vunpack.c.h.b16 %v315
        %v701 = vunpack.c.l.b16 %v316
        %v702 = vunpack.c.h.b16 %v316
        %v703 = vunpack.c.l.b16 %v317
        %v704 = vunpack.c.h.b16 %v317
        %v705 = vunpack.c.l.b16 %v318
        %v706 = vunpack.c.h.b16 %v318
        %v707 = vunpack.c.l.b16 %v319
        %v708 = vunpack.c.h.b16 %v319
        %v709 = vunpack.c.l.b16 %v320
        %v710 = vunpack.c.h.b16 %v320
        %v711 = vunpack.c.l.b16 %v321
        %v712 = vunpack.c.h.b16 %v321
        %v713 = vunpack.c.l.b16 %v322
        %v714 = vunpack.c.h.b16 %v322
        %v715 = vunpack.c.l.b16 %v323
        %v716 = vunpack.c.h.b16 %v323
        %v717 = vunpack.c.l.b16 %v324
        %v718 = vunpack.c.h.b16 %v324
        %v719 = vunpack.c.l.b16 %v325
        %v720 = vunpack.c.h.b16 %v325
        %v721 = vunpack.c.l.b16 %v326
        %v722 = vunpack.c.h.b16 %v326
        %v723 = vunpack.c.l.b16 %v327
        %v724 = vunpack.c.h.b16 %v327
        %v725 = vunpack.c.l.b16 %v328
        %v726 = vunpack.c.h.b16 %v328
        %v727 = vunpack.c.l.b16 %v329
        %v728 = vunpack.c.h.b16 %v329
        %v729 = vunpack.c.l.b16 %v330
        %v730 = vunpack.c.h.b16 %v330
        %v731 = vunpack.c.l.b16 %v331
        %v732 = vunpack.c.h.b16 %v331
        %v733 = vunpack.c.l.b16 %v332
        %v734 = vunpack.c.h.b16 %v332
        %v735 = vunpack.c.l.b16 %v333
        %v736 = vunpack.c.h.b16 %v333
        %v737 = vunpack.c.l.b16 %v334
        %v738 = vunpack.c.h.b16 %v334
        %v739 = vunpack.c.l.b16 %v335
        %v740 = vunpack.c.h.b16 %v335
        %v741 = vunpack.c.l.b16 %v336
        %v742 = vunpack.c.h.b16 %v336
        %v743 = vunpack.c.l.b16 %v337
        %v744 = vunpack.c.h.b16 %v337
        %v745 = vunpack.c.l.b16 %v338
        %v746 = vunpack.c.h.b16 %v338
        %v747 = vunpack.c.l.b16 %v339
        %v748 = vunpack.c.h.b16 %v339
        %v749 = vunpack.c.l.b16 %v340
        %v750 = vunpack.c.h.b16 %v340
        %v751 = vunpack.c.l.b16 %v341
        %v752 = vunpack.c.h.b16 %v341
        %v753 = vunpack.c.l.b16 %v342
        %v754 = vunpack.c.h.b16 %v342
        %v755 = vunpack.c.l.b16 %v343
        %v756 = vunpack.c.h.b16 %v343
        %v757 = vunpack.c.l.b16 %v344
        %v758 = vunpack.c.h.b16 %v344
        %v759 = vunpack.c.l.b16 %v345
        %v760 = vunpack.c.h.b16 %v345
        %v761 = vunpack.c.l.b16 %v346
        %v762 = vunpack.c.h.b16 %v346
        %v763 = vunpack.c.l.b16 %v347
        %v764 = vunpack.c.h.b16 %v347
        %v765 = vunpack.c.l.b16 %v348
        %v766 = vunpack.c.h.b16 %v348
        %v767 = vunpack.c.l.b16 %v349
        %v768 = vunpack.c.h.b16 %v349
        %v769 = vunpack.c.l.b16 %v350
        %v770 = vunpack.c.h.b16 %v350
        %v771 = vunpack.c.l.b16 %v351
        %v772 = vunpack.c.h.b16 %v351
        %v773 = vunpack.c.l.b16 %v352
        %v774 = vunpack.c.h.b16 %v352
        %v775 = vunpack.c.l.b16 %v353
        %v776 = vunpack.c.h.b16 %v353
        %v777 = vunpack.c.l.b16 %v354
        %v778 = vunpack.c.h.b16 %v354
        %v779 = vunpack.c.l.b16 %v355
        %v780 = vunpack.c.h.b16 %v355
        %v781 = vunpack.c.l.b16 %v356
        %v782 = vunpack.c.h.b16 %v356
        %v783 = vunpack.c.l.b16 %v357
        %v784 = vunpack.c.h.b16 %v357
        %v785 = vunpack.c.l.b16 %v358
        %v786 = vunpack.c.h.b16 %v358
        %v787 = vunpack.c.l.b16 %v359
        %v788 = vunpack.c.h.b16 %v359
        %v789 = vunpack.c.l.b16 %v360
        %v790 = vunpack.c.h.b16 %v360
        %v791 = vunpack.c.l.b16 %v361
        %v792 = vunpack.c.h.b16 %v361
        %v793 = vunpack.c.l.b16 %v362
        %v794 = vunpack.c.h.b16 %v362
        %v795 = vunpack.c.l.b16 %v363
        %v796 = vunpack.c.h.b16 %v363
        %v797 = vunpack.c.l.b16 %v364
        %v798 = vunpack.c.h.b16 %v364
        %v799 = vunpack.c.l.b16 %v365
        %v800 = vunpack.c.h.b16 %v365
        %v801 = vunpack.c.l.b16 %v366
        %v802 = vunpack.c.h.b16 %v366
        %v803 = vunpack.c.l.b16 %v367
        %v804 = vunpack.c.h.b16 %v367
        %v805 = vunpack.c.l.b16 %v368
        %v806 = vunpack.c.h.b16 %v368
        %v807 = vunpack.c.l.b16 %v369
        %v808 = vunpack.c.h.b16 %v369
        %v809 = vunpack.c.l.b16 %v370
        %v810 = vunpack.c.h.b16 %v370
        %v811 = vunpack.c.l.b16 %v371
        %v812 = vunpack.c.h.b16 %v371
        %v813 = vunpack.c.l.b16 %v372
        %v814 = vunpack.c.h.b16 %v372
        %v815 = vunpack.c.l.b16 %v373
        %v816 = vunpack.c.h.b16 %v373
        %v817 = vunpack.c.l.b16 %v374
        %v818 = vunpack.c.h.b16 %v374
        %v819 = vunpack.c.l.b16 %v375
        %v820 = vunpack.c.h.b16 %v375
        %v821 = vunpack.c.l.b16 %v376
        %v822 = vunpack.c.h.b16 %v376
        %v823 = vunpack.c.l.b16 %v377
        %v824 = vunpack.c.h.b16 %v377
        %v825 = vunpack.c.l.b16 %v378
        %v826 = vunpack.c.h.b16 %v378
        %v827 = vunpack.c.l.b16 %v379
        %v828 = vunpack.c.h.b16 %v379
        %v829 = vunpack.c.l.b16 %v380
        %v830 = vunpack.c.h.b16 %v380
        %v831 = vunpack.c.l.b16 %v381
        %v832 = vunpack.c.h.b16 %v381
        %v833 = vunpack.c.l.b16 %v382
        %v834 = vunpack.c.h.b16 %v382
        %v835 = vunpack.c.l.b16 %v383
        %v836 = vunpack.c.h.b16 %v383
        %v837 = vunpack.c.l.b16 %v384
        %v838 = vunpack.c.h.b16 %v384
        %v839 = vunpack.c.l.b16 %v385
        %v840 = vunpack.c.h.b16 %v385
        %v841 = vunpack.c.l.b16 %v386
        %v842 = vunpack.c.h.b16 %v386
        %v843 = vunpack.c.l.b16 %v387
        %v844 = vunpack.c.h.b16 %v387
        %v845 = vunpack.c.l.b16 %v388
        %v846 = vunpack.c.h.b16 %v388
        %v847 = vunpack.c.l.b16 %v389
        %v848 = vunpack.c.h.b16 %v389
        %v849 = vunpack.c.l.b16 %v390
        %v850 = vunpack.c.h.b16 %v390
        %v851 = vunpack.c.l.b16 %v391
        %v852 = vunpack.c.h.b16 %v391
        %v853 = vunpack.c.l.b16 %v392
        %v854 = vunpack.c.h.b16 %v392
        %v855 = vunpack.c.l.b16 %v393
        %v856 = vunpack.c.h.b16 %v393
        %v857 = vunpack.c.l.b16 %v394
        %v858 = vunpack.c.h.b16 %v394
        %v859 = vunpack.c.l.b16 %v395
        %v860 = vunpack.c.h.b16 %v395
        %v861 = vunpack.c.l.b16 %v396
        %v862 = vunpack.c.h.b16 %v396
        %v863 = vunpack.c.l.b16 %v397
        %v864 = vunpack.c.h.b16 %v397
        %v865 = vunpack.c.l.b16 %v398
        %v866 = vunpack.c.h.b16 %v398
        %v867 = vunpack.c.l.b16 %v399
        %v868 = vunpack.c.h.b16 %v399
        %v869 = vunpack.c.l.b16 %v400
        %v870 = vunpack.c.h.b16 %v400
        %v871 = vunpack.c.l.b16 %v401
        %v872 = vunpack.c.h.b16 %v401
        %v873 = vunpack.c.l.b16 %v402
        %v874 = vunpack.c.h.b16 %v402
        %v875 = vunpack.c.l.b16 %v403
        %v876 = vunpack.c.h.b16 %v403
        %v877 = vunpack.c.l.b16 %v404
        %v878 = vunpack.c.h.b16 %v404
        %v879 = vunpack.c.l.b16 %v405
        %v880 = vunpack.c.h.b16 %v405
        %v881 = vunpack.c.l.b16 %v406
        %v882 = vunpack.c.h.b16 %v406
        %v883 = vunpack.c.l.b16 %v407
        %v884 = vunpack.c.h.b16 %v407
        %v885 = vunpack.c.l.b16 %v408
        %v886 = vunpack.c.h.b16 %v408
        %v887 = vunpack.c.l.b16 %v409
        %v888 = vunpack.c.h.b16 %v409
        %v889 = vunpack.c.l.b16 %v410
        %v890 = vunpack.c.h.b16 %v410
        %v891 = vunpack.c.l.b16 %v411
        %v892 = vunpack.c.h.b16 %v411
        %v893 = vunpack.c.l.b16 %v412
        %v894 = vunpack.c.h.b16 %v412
        %v895 = vunpack.c.l.b16 %v413
        %v896 = vunpack.c.h.b16 %v413
        %v897 = vunpack.c.l.b16 %v414
        %v898 = vunpack.c.h.b16 %v414
        %v899 = vunpack.c.l.b16 %v415
        %v900 = vunpack.c.h.b16 %v415
        %v901 = vunpack.c.l.b16 %v416
        %v902 = vunpack.c.h.b16 %v416
        %v903 = vunpack.c.l.b16 %v417
        %v904 = vunpack.c.h.b16 %v417
        %v905 = vpack.c.b16 %v595, %v585
        %v906 = vpack.c.b16 %v596, %v586
        %v907 = vpack.c.b16 %v597, %v587
        %v908 = vpack.c.b16 %v598, %v588
        %v909 = vpack.c.b16 %v599, %v589
        %v910 = vpack.c.b16 %v600, %v590
        %v911 = vpack.c.b16 %v601, %v591
        %v912 = vpack.c.b16 %v602, %v592
        %v913 = vpack.c.b16 %v603, %v593
        %v914 = vpack.c.b16 %v604, %v594
        %v915 = vpack.c.b16 %v615, %v605
        %v916 = vpack.c.b16 %v616, %v606
        %v917 = vpack.c.b16 %v617, %v607
        %v918 = vpack.c.b16 %v618, %v608
        %v919 = vpack.c.b16 %v619, %v609
        %v920 = vpack.c.b16 %v620, %v610
        %v921 = vpack.c.b16 %v621, %v611
        %v922 = vpack.c.b16 %v622, %v612
        %v923 = vpack.c.b16 %v623, %v613
        %v924 = vpack.c.b16 %v624, %v614
        %v925 = vpack.c.b16 %v635, %v625
        %v926 = vpack.c.b16 %v636, %v626
        %v927 = vpack.c.b16 %v637, %v627
        %v928 = vpack.c.b16 %v638, %v628
        %v929 = vpack.c.b16 %v639, %v629
        %v930 = vpack.c.b16 %v640, %v630
        %v931 = vpack.c.b16 %v641, %v631
        %v932 = vpack.c.b16 %v642, %v632
        %v933 = vpack.c.b16 %v643, %v633
        %v934 = vpack.c.b16 %v644, %v634
        %v935 = vpack.c.b16 %v655, %v645
        %v936 = vpack.c.b16 %v656, %v646
        %v937 = vpack.c.b16 %v657, %v647
        %v938 = vpack.c.b16 %v658, %v648
        %v939 = vpack.c.b16 %v659, %v649
        %v940 = vpack.c.b16 %v660, %v650
        %v941 = vpack.c.b16 %v661, %v651
        %v942 = vpack.c.b16 %v662, %v652
        %v943 = vpack.c.b16 %v663, %v653
        %v944 = vpack.c.b16 %v664, %v654
        %v945 = vpack.c.b16 %v675, %v665
        %v946 = vpack.c.b16 %v676, %v666
        %v947 = vpack.c.b16 %v677, %v667
        %v948 = vpack.c.b16 %v678, %v668
        %v949 = vpack.c.b16 %v679, %v669
        %v950 = vpack.c.b16 %v680, %v670
        %v951 = vpack.c.b16 %v681, %v671
        %v952 = vpack.c.b16 %v682, %v672
        %v953 = vpack.c.b16 %v683, %v673
        %v954 = vpack.c.b16 %v684, %v674
        %v955 = vpack.c.b16 %v695, %v685
        %v956 = vpack.c.b16 %v696, %v686
        %v957 = vpack.c.b16 %v697, %v687
        %v958 = vpack.c.b16 %v698, %v688
        %v959 = vpack.c.b16 %v699, %v689
        %v960 = vpack.c.b16 %v700, %v690
        %v961 = vpack.c.b16 %v701, %v691
        %v962 = vpack.c.b16 %v702, %v692
        %v963 = vpack.c.b16 %v703, %v693
        %v964 = vpack.c.b16 %v704, %v694
        %v965 = vpack.c.b16 %v715, %v705
        %v966 = vpack.c.b16 %v716, %v706
        %v967 = vpack.c.b16 %v717, %v707
        %v968 = vpack.c.b16 %v718, %v708
        %v969 = vpack.c.b16 %v719, %v709
        %v970 = vpack.c.b16 %v720, %v710
        %v971 = vpack.c.b16 %v721, %v711
        %v972 = vpack.c.b16 %v722, %v712
        %v973 = vpack.c.b16 %v723, %v713
        %v974 = vpack.c.b16 %v724, %v714
        %v975 = vpack.c.b16 %v735, %v725
        %v976 = vpack.c.b16 %v736, %v726
        %v977 = vpack.c.b16 %v737, %v727
        %v978 = vpack.c.b16 %v738, %v728
        %v979 = vpack.c.b16 %v739, %v729
        %v980 = vpack.c.b16 %v740, %v730
        %v981 = vpack.c.b16 %v741, %v731
        %v982 = vpack.c.b16 %v742, %v732
        %v983 = vpack.c.b16 %v743, %v733
        %v984 = vpack.c.b16 %v744, %v734
        %v985 = vpack.c.b16 %v755, %v745
        %v986 = vpack.c.b16 %v756, %v746
        %v987 = vpack.c.b16 %v757, %v747
        %v988 = vpack.c.b16 %v758, %v748
        %v989 = vpack.c.b16 %v759, %v749
        %v990 = vpack.c.b16 %v760, %v750
        %v991 = vpack.c.b16 %v761, %v751
        %v992 = vpack.c.b16 %v762, %v752
        %v993 = vpack.c.b16 %v763, %v753
        %v994 = vpack.c.b16 %v764, %v754
        %v995 = vpack.c.b16 %v775, %v765
        %v996 = vpack.c.b16 %v776, %v766
        %v997 = vpack.c.b16 %v777, %v767
        %v998 = vpack.c.b16 %v778, %v768
        %v999 = vpack.c.b16 %v779, %v769
        %v1000 = vpack.c.b16 %v780, %v770
        %v1001 = vpack.c.b16 %v781, %v771
        %v1002 = vpack.c.b16 %v782, %v772
        %v1003 = vpack.c.b16 %v783, %v773
        %v1004 = vpack.c.b16 %v784, %v774
        %v1005 = vpack.c.b16 %v795, %v785
        %v1006 = vpack.c.b16 %v796, %v786
        %v1007 = vpack.c.b16 %v797, %v787
        %v1008 = vpack.c.b16 %v798, %v788
        %v1009 = vpack.c.b16 %v799, %v789
        %v1010 = vpack.c.b16 %v800, %v790
        %v1011 = vpack.c.b16 %v801, %v791
        %v1012 = vpack.c.b16 %v802, %v792
        %v1013 = vpack.c.b16 %v803, %v793
        %v1014 = vpack.c.b16 %v804, %v794
        %v1015 = vpack.c.b16 %v815, %v805
        %v1016 = vpack.c.b16 %v816, %v806
        %v1017 = vpack.c.b16 %v817, %v807
        %v1018 = vpack.c.b16 %v818, %v808
        %v1019 = vpack.c.b16 %v819, %v809
        %v1020 = vpack.c.b16 %v820, %v810
        %v1021 = vpack.c.b16 %v821, %v811
        %v1022 = vpack.c.b16 %v822, %v812
        %v1023 = vpack.c.b16 %v823, %v813
        %v1024 = vpack.c.b16 %v824, %v814
        %v1025 = vpack.c.b16 %v835, %v825
        %v1026 = vpack.c.b16 %v836, %v826
        %v1027 = vpack.c.b16 %v837, %v827
        %v1028 = vpack.c.b16 %v838, %v828
        %v1029 = vpack.c.b16 %v839, %v829
        %v1030 = vpack.c.b16 %v840, %v830
        %v1031 = vpack.c.b16 %v841, %v831
        %v1032 = vpack.c.b16 %v842, %v832
        %v1033 = vpack.c.b16 %v843, %v833
        %v1034 = vpack.c.b16 %v844, %v834
        %v1035 = vpack.c.b16 %v855, %v845
        %v1036 = vpack.c.b16 %v856, %v846
        %v1037 = vpack.c.b16 %v857, %v847
        %v1038 = vpack.c.b16 %v858, %v848
        %v1039 = vpack.c.b16 %v859, %v849
        %v1040 = vpack.c.b16 %v860, %v850
        %v1041 = vpack.c.b16 %v861, %v851
        %v1042 = vpack.c.b16 %v862, %v852
        %v1043 = vpack.c.b16 %v863, %v853
        %v1044 = vpack.c.b16 %v864, %v854
        %v1045 = vpack.c.b16 %v875, %v865
        %v1046 = vpack.c.b16 %v876, %v866
        %v1047 = vpack.c.b16 %v877, %v867
        %v1048 = vpack.c.b16 %v878, %v868
        %v1049 = vpack.c.b16 %v879, %v869
        %v1050 = vpack.c.b16 %v880, %v870
        %v1051 = vpack.c.b16 %v881, %v871
        %v1052 = vpack.c.b16 %v882, %v872
        %v1053 = vpack.c.b16 %v883, %v873
        %v1054 = vpack.c.b16 %v884, %v874
        %v1055 = vpack.c.b16 %v895, %v885
        %v1056 = vpack.c.b16 %v896, %v886
        %v1057 = vpack.c.b16 %v897, %v887
        %v1058 = vpack.c.b16 %v898, %v888
        %v1059 = vpack.c.b16 %v899, %v889
        %v1060 = vpack.c.b16 %v900, %v890
        %v1061 = vpack.c.b16 %v901, %v891
        %v1062 = vpack.c.b16 %v902, %v892
        %v1063 = vpack.c.b16 %v903, %v893
        %v1064 = vpack.c.b16 %v904, %v894
        %1225 = vmatprep.subr.bf16.mxu0 %v906
        %1226 = vmatpush1.bf16.msra.mxu0 %v905
        %1227 = vmatprep.subr.bf16.mxu0 %v916
        %1228 = vmatpush1.bf16.msra.mxu0 %v915
        %1229 = vmatprep.subr.bf16.mxu0 %v926
        %1230 = vmatpush1.bf16.msra.mxu0 %v925
        %1231 = vmatprep.subr.bf16.mxu0 %v936
        %1232 = vmatpush1.bf16.msra.mxu0 %v935
        %1233 = vmatprep.subr.bf16.mxu0 %v946
        %1234 = vmatpush1.bf16.msra.mxu0 %v945
        %1235 = vmatprep.subr.bf16.mxu0 %v956
        %1236 = vmatpush1.bf16.msra.mxu0 %v955
        %1237 = vmatprep.subr.bf16.mxu0 %v966
        %1238 = vmatpush1.bf16.msra.mxu0 %v965
        %1239 = vmatprep.subr.bf16.mxu0 %v976
        %1240 = vmatpush1.bf16.msra.mxu0 %v975
        %1241 = vmatprep.subr.bf16.mxu0 %v986
        %1242 = vmatpush1.bf16.msra.mxu0 %v985
        %1243 = vmatprep.subr.bf16.mxu0 %v996
        %1244 = vmatpush1.bf16.msra.mxu0 %v995
        %1245 = vmatprep.subr.bf16.mxu0 %v1006
        %1246 = vmatpush1.bf16.msra.mxu0 %v1005
        %1247 = vmatprep.subr.bf16.mxu0 %v1016
        %1248 = vmatpush1.bf16.msra.mxu0 %v1015
        %1249 = vmatprep.subr.bf16.mxu0 %v1026
        %1250 = vmatpush1.bf16.msra.mxu0 %v1025
        %1251 = vmatprep.subr.bf16.mxu0 %v1036
        %1252 = vmatpush1.bf16.msra.mxu0 %v1035
        %1253 = vmatprep.subr.bf16.mxu0 %v1046
        %1254 = vmatpush1.bf16.msra.mxu0 %v1045
        %1255 = vmatprep.subr.bf16.mxu0 %v1056
        %1256 = vmatpush1.bf16.msra.mxu0 %v1055
        %1257 = vmatprep.mubr.bf16.mxu0 %v422
        %1258 = vmatmul.mubr.bf16.gmra.mrb[0].mxu0 %v421
        %v1259 = vpop.f32.mrb[0].mxu0
        %v1260 = vadd.f32 0.0, %v1259
        %v1261 = vpop.f32.mrb[0].mxu0
        %v1262 = vadd.f32 0.0, %v1261
        %v1263 = vpop.f32.mrb[0].mxu0
        %v1264 = vpop.f32.mrb[0].mxu0
        %1265 = vdwg.mxu0
        %1266 = vmatprep.subr.bf16.mxu0 %v908
        %1267 = vmatpush1.bf16.msra.mxu0 %v907
        %1268 = vmatprep.subr.bf16.mxu0 %v918
        %1269 = vmatpush1.bf16.msra.mxu0 %v917
        %1270 = vmatprep.subr.bf16.mxu0 %v928
        %1271 = vmatpush1.bf16.msra.mxu0 %v927
        %1272 = vmatprep.subr.bf16.mxu0 %v938
        %1273 = vmatpush1.bf16.msra.mxu0 %v937
        %1274 = vmatprep.subr.bf16.mxu0 %v948
        %1275 = vmatpush1.bf16.msra.mxu0 %v947
        %1276 = vmatprep.subr.bf16.mxu0 %v958
        %1277 = vmatpush1.bf16.msra.mxu0 %v957
        %1278 = vmatprep.subr.bf16.mxu0 %v968
        %1279 = vmatpush1.bf16.msra.mxu0 %v967
        %1280 = vmatprep.subr.bf16.mxu0 %v978
        %1281 = vmatpush1.bf16.msra.mxu0 %v977
        %1282 = vmatprep.subr.bf16.mxu0 %v988
        %1283 = vmatpush1.bf16.msra.mxu0 %v987
        %1284 = vmatprep.subr.bf16.mxu0 %v998
        %1285 = vmatpush1.bf16.msra.mxu0 %v997
        %1286 = vmatprep.subr.bf16.mxu0 %v1008
        %1287 = vmatpush1.bf16.msra.mxu0 %v1007
        %1288 = vmatprep.subr.bf16.mxu0 %v1018
        %1289 = vmatpush1.bf16.msra.mxu0 %v1017
        %1290 = vmatprep.subr.bf16.mxu0 %v1028
        %1291 = vmatpush1.bf16.msra.mxu0 %v1027
        %1292 = vmatprep.subr.bf16.mxu0 %v1038
        %1293 = vmatpush1.bf16.msra.mxu0 %v1037
        %1294 = vmatprep.subr.bf16.mxu0 %v1048
        %1295 = vmatpush1.bf16.msra.mxu0 %v1047
        %1296 = vmatprep.subr.bf16.mxu0 %v1058
        %1297 = vmatpush1.bf16.msra.mxu0 %v1057
        %1298 = vmatprep.mubr.bf16.mxu0 %v422
        %1299 = vmatmul.mubr.bf16.gmra.mrb[0].mxu0 %v421
        %v1300 = vpop.f32.mrb[0].mxu0
        %v1301 = vadd.f32 0.0, %v1300
        %v1302 = vpop.f32.mrb[0].mxu0
        %v1303 = vadd.f32 0.0, %v1302
        %v1304 = vpop.f32.mrb[0].mxu0
        %v1305 = vpop.f32.mrb[0].mxu0
        %1306 = vdwg.mxu0
        %1307 = vmatprep.subr.bf16.mxu0 %v910
        %1308 = vmatpush1.bf16.msra.mxu0 %v909
        %1309 = vmatprep.subr.bf16.mxu0 %v920
        %1310 = vmatpush1.bf16.msra.mxu0 %v919
        %1311 = vmatprep.subr.bf16.mxu0 %v930
        %1312 = vmatpush1.bf16.msra.mxu0 %v929
        %1313 = vmatprep.subr.bf16.mxu0 %v940
        %1314 = vmatpush1.bf16.msra.mxu0 %v939
        %1315 = vmatprep.subr.bf16.mxu0 %v950
        %1316 = vmatpush1.bf16.msra.mxu0 %v949
        %1317 = vmatprep.subr.bf16.mxu0 %v960
        %1318 = vmatpush1.bf16.msra.mxu0 %v959
        %1319 = vmatprep.subr.bf16.mxu0 %v970
        %1320 = vmatpush1.bf16.msra.mxu0 %v969
        %1321 = vmatprep.subr.bf16.mxu0 %v980
        %1322 = vmatpush1.bf16.msra.mxu0 %v979
        %1323 = vmatprep.subr.bf16.mxu0 %v990
        %1324 = vmatpush1.bf16.msra.mxu0 %v989
        %1325 = vmatprep.subr.bf16.mxu0 %v1000
        %1326 = vmatpush1.bf16.msra.mxu0 %v999
        %1327 = vmatprep.subr.bf16.mxu0 %v1010
        %1328 = vmatpush1.bf16.msra.mxu0 %v1009
        %1329 = vmatprep.subr.bf16.mxu0 %v1020
        %1330 = vmatpush1.bf16.msra.mxu0 %v1019
        %1331 = vmatprep.subr.bf16.mxu0 %v1030
        %1332 = vmatpush1.bf16.msra.mxu0 %v1029
        %1333 = vmatprep.subr.bf16.mxu0 %v1040
        %1334 = vmatpush1.bf16.msra.mxu0 %v1039
        %1335 = vmatprep.subr.bf16.mxu0 %v1050
        %1336 = vmatpush1.bf16.msra.mxu0 %v1049
        %1337 = vmatprep.subr.bf16.mxu0 %v1060
        %1338 = vmatpush1.bf16.msra.mxu0 %v1059
        %1339 = vmatprep.mubr.bf16.mxu0 %v422
        %1340 = vmatmul.mubr.bf16.gmra.mrb[0].mxu0 %v421
        %v1341 = vpop.f32.mrb[0].mxu0
        %v1342 = vadd.f32 0.0, %v1341
        %v1343 = vpop.f32.mrb[0].mxu0
        %v1344 = vadd.f32 0.0, %v1343
        %v1345 = vpop.f32.mrb[0].mxu0
        %v1346 = vpop.f32.mrb[0].mxu0
        %1347 = vdwg.mxu0
        %1348 = vmatprep.subr.bf16.mxu0 %v912
        %1349 = vmatpush1.bf16.msra.mxu0 %v911
        %1350 = vmatprep.subr.bf16.mxu0 %v922
        %1351 = vmatpush1.bf16.msra.mxu0 %v921
        %1352 = vmatprep.subr.bf16.mxu0 %v932
        %1353 = vmatpush1.bf16.msra.mxu0 %v931
        %1354 = vmatprep.subr.bf16.mxu0 %v942
        %1355 = vmatpush1.bf16.msra.mxu0 %v941
        %1356 = vmatprep.subr.bf16.mxu0 %v952
        %1357 = vmatpush1.bf16.msra.mxu0 %v951
        %1358 = vmatprep.subr.bf16.mxu0 %v962
        %1359 = vmatpush1.bf16.msra.mxu0 %v961
        %1360 = vmatprep.subr.bf16.mxu0 %v972
        %1361 = vmatpush1.bf16.msra.mxu0 %v971
        %1362 = vmatprep.subr.bf16.mxu0 %v982
        %1363 = vmatpush1.bf16.msra.mxu0 %v981
        %1364 = vmatprep.subr.bf16.mxu0 %v992
        %1365 = vmatpush1.bf16.msra.mxu0 %v991
        %1366 = vmatprep.subr.bf16.mxu0 %v1002
        %1367 = vmatpush1.bf16.msra.mxu0 %v1001
        %1368 = vmatprep.subr.bf16.mxu0 %v1012
        %1369 = vmatpush1.bf16.msra.mxu0 %v1011
        %1370 = vmatprep.subr.bf16.mxu0 %v1022
        %1371 = vmatpush1.bf16.msra.mxu0 %v1021
        %1372 = vmatprep.subr.bf16.mxu0 %v1032
        %1373 = vmatpush1.bf16.msra.mxu0 %v1031
        %1374 = vmatprep.subr.bf16.mxu0 %v1042
        %1375 = vmatpush1.bf16.msra.mxu0 %v1041
        %1376 = vmatprep.subr.bf16.mxu0 %v1052
        %1377 = vmatpush1.bf16.msra.mxu0 %v1051
        %1378 = vmatprep.subr.bf16.mxu0 %v1062
        %1379 = vmatpush1.bf16.msra.mxu0 %v1061
        %1380 = vmatprep.mubr.bf16.mxu0 %v422
        %1381 = vmatmul.mubr.bf16.gmra.mrb[0].mxu0 %v421
        %v1382 = vpop.f32.mrb[0].mxu0
        %v1383 = vadd.f32 0.0, %v1382
        %v1384 = vpop.f32.mrb[0].mxu0
        %v1385 = vadd.f32 0.0, %v1384
        %v1386 = vpop.f32.mrb[0].mxu0
        %v1387 = vpop.f32.mrb[0].mxu0
        %1388 = vdwg.mxu0
        %1389 = vmatprep.subr.bf16.mxu0 %v914
        %1390 = vmatpush1.bf16.msra.mxu0 %v913
        %1391 = vmatprep.subr.bf16.mxu0 %v924
        %1392 = vmatpush1.bf16.msra.mxu0 %v923
        %1393 = vmatprep.subr.bf16.mxu0 %v934
        %1394 = vmatpush1.bf16.msra.mxu0 %v933
        %1395 = vmatprep.subr.bf16.mxu0 %v944
        %1396 = vmatpush1.bf16.msra.mxu0 %v943
        %1397 = vmatprep.subr.bf16.mxu0 %v954
        %1398 = vmatpush1.bf16.msra.mxu0 %v953
        %1399 = vmatprep.subr.bf16.mxu0 %v964
        %1400 = vmatpush1.bf16.msra.mxu0 %v963
        %1401 = vmatprep.subr.bf16.mxu0 %v974
        %1402 = vmatpush1.bf16.msra.mxu0 %v973
        %1403 = vmatprep.subr.bf16.mxu0 %v984
        %1404 = vmatpush1.bf16.msra.mxu0 %v983
        %1405 = vmatprep.subr.bf16.mxu0 %v994
        %1406 = vmatpush1.bf16.msra.mxu0 %v993
        %1407 = vmatprep.subr.bf16.mxu0 %v1004
        %1408 = vmatpush1.bf16.msra.mxu0 %v1003
        %1409 = vmatprep.subr.bf16.mxu0 %v1014
        %1410 = vmatpush1.bf16.msra.mxu0 %v1013
        %1411 = vmatprep.subr.bf16.mxu0 %v1024
        %1412 = vmatpush1.bf16.msra.mxu0 %v1023
        %1413 = vmatprep.subr.bf16.mxu0 %v1034
        %1414 = vmatpush1.bf16.msra.mxu0 %v1033
        %1415 = vmatprep.subr.bf16.mxu0 %v1044
        %1416 = vmatpush1.bf16.msra.mxu0 %v1043
        %1417 = vmatprep.subr.bf16.mxu0 %v1054
        %1418 = vmatpush1.bf16.msra.mxu0 %v1053
        %1419 = vmatprep.subr.bf16.mxu0 %v1064
        %1420 = vmatpush1.bf16.msra.mxu0 %v1063
        %1421 = vmatprep.mubr.bf16.mxu0 %v422
        %1422 = vmatmul.mubr.bf16.gmra.mrb[0].mxu0 %v421
        %v1423 = vpop.f32.mrb[0].mxu0
        %v1424 = vadd.f32 0.0, %v1423
        %v1425 = vpop.f32.mrb[0].mxu0
        %v1426 = vadd.f32 0.0, %v1425
        %v1427 = vpop.f32.mrb[0].mxu0
        %v1428 = vpop.f32.mrb[0].mxu0
        %1429 = vdwg.mxu0
        %v1430 = vld [vmem:[%s3] sm:$0xf]
        %v1431 = vpack.c.bf16 %v1260, %v1260
        %v1432 = vpack.c.bf16 %v1262, %v1262
        %v1433 = vpack.c.bf16 %v1301, %v1301
        %v1434 = vpack.c.bf16 %v1303, %v1303
        %v1435 = vpack.c.bf16 %v1342, %v1342
        %v1436 = vpack.c.bf16 %v1344, %v1344
        %v1437 = vpack.c.bf16 %v1383, %v1383
        %v1438 = vpack.c.bf16 %v1385, %v1385
        %v1439 = vpack.c.bf16 %v1424, %v1424
        %v1440 = vpack.c.bf16 %v1426, %v1426
        %v1442 = vunpack.c.l.b16 %v1430
        %v1443 = vpack.c.b16 %v1442, %v1442
        %1444 = vrot.lane.b32.xlu0 %v1443, 120
        %v1445 = vpop.permute.xlu0 %1444
        %1456 = vrot.lane.b32.xlu0 %v1431, 127
        %v1457 = vpop.permute.xlu0 %1456
        %1458 = vrot.lane.b32.xlu0 %v1432, 127
        %v1459 = vpop.permute.xlu0 %1458
        %1460 = vrot.lane.b32.xlu0 %v1433, 127
        %v1461 = vpop.permute.xlu0 %1460
        %1462 = vrot.lane.b32.xlu0 %v1434, 127
        %v1463 = vpop.permute.xlu0 %1462
        %1464 = vrot.lane.b32.xlu0 %v1435, 127
        %v1465 = vpop.permute.xlu0 %1464
        %1466 = vrot.lane.b32.xlu0 %v1436, 127
        %v1467 = vpop.permute.xlu0 %1466
        %1468 = vrot.lane.b32.xlu0 %v1437, 127
        %v1469 = vpop.permute.xlu0 %1468
        %1470 = vrot.lane.b32.xlu0 %v1438, 127
        %v1471 = vpop.permute.xlu0 %1470
        %1472 = vrot.lane.b32.xlu0 %v1439, 127
        %v1473 = vpop.permute.xlu0 %1472
        %1474 = vrot.lane.b32.xlu0 %v1440, 127
        %v1475 = vpop.permute.xlu0 %1474
        %vm1476 = vcmask 1039360
        %v1477 = vsel %vm1476, %v1457, %v1459
        %v1478 = vsel %vm1476, %v1459, %v1461
        %v1479 = vsel %vm1476, %v1461, %v1463
        %v1480 = vsel %vm1476, %v1463, %v1465
        %v1481 = vsel %vm1476, %v1465, %v1467
        %v1482 = vsel %vm1476, %v1467, %v1469
        %v1483 = vsel %vm1476, %v1469, %v1471
        %v1484 = vsel %vm1476, %v1471, %v1473
        %v1485 = vsel %vm1476, %v1473, %v1475
        %vm1486 = vcmask 64512
        %v1488 = vsel %vm1486, %v1445, 0
        %vm1490 = vcmask 1043456
        %v1492 = vsel %vm1490, %v1477, 0
        %v1495 = vsel %vm1490, %v1478, 0
        %v1498 = vsel %vm1490, %v1479, 0
        %v1501 = vsel %vm1490, %v1480, 0
        %v1504 = vsel %vm1490, %v1481, 0
        %v1507 = vsel %vm1490, %v1482, 0
        %v1510 = vsel %vm1490, %v1483, 0
        %v1513 = vsel %vm1490, %v1484, 0
        %v1516 = vsel %vm1490, %v1485, 0
        %1518 = vmatprep.subr.bf16.mxu0 %v1495
        %1519 = vmatpush1.bf16.msra.mxu0 %v1492
        %1520 = vmatprep.subr.bf16.mxu0 0
        %1521 = vmatpush1.bf16.msra.mxu0 0
        %1522 = vmatprep.subr.bf16.mxu0 0
        %1523 = vmatpush1.bf16.msra.mxu0 0
        %1524 = vmatprep.subr.bf16.mxu0 0
        %1525 = vmatpush1.bf16.msra.mxu0 0
        %1526 = vmatprep.subr.bf16.mxu0 0
        %1527 = vmatpush1.bf16.msra.mxu0 0
        %1528 = vmatprep.subr.bf16.mxu0 0
        %1529 = vmatpush1.bf16.msra.mxu0 0
        %1530 = vmatprep.subr.bf16.mxu0 0
        %1531 = vmatpush1.bf16.msra.mxu0 0
        %1532 = vmatprep.subr.bf16.mxu0 0
        %1533 = vmatpush1.bf16.msra.mxu0 0
        %1534 = vmatprep.subr.bf16.mxu0 0
        %1535 = vmatpush1.bf16.msra.mxu0 0
        %1536 = vmatprep.subr.bf16.mxu0 0
        %1537 = vmatpush1.bf16.msra.mxu0 0
        %1538 = vmatprep.subr.bf16.mxu0 0
        %1539 = vmatpush1.bf16.msra.mxu0 0
        %1540 = vmatprep.subr.bf16.mxu0 0
        %1541 = vmatpush1.bf16.msra.mxu0 0
        %1542 = vmatprep.subr.bf16.mxu0 0
        %1543 = vmatpush1.bf16.msra.mxu0 0
        %1544 = vmatprep.subr.bf16.mxu0 0
        %1545 = vmatpush1.bf16.msra.mxu0 0
        %1546 = vmatprep.subr.bf16.mxu0 0
        %1547 = vmatpush1.bf16.msra.mxu0 0
        %1548 = vmatprep.subr.bf16.mxu0 0
        %1549 = vmatpush1.bf16.msra.mxu0 0
        %1550 = vmatprep.mubr.bf16.mxu0 0
        %1551 = vmatmul.mubr.bf16.gmra.mrb[0].mxu0 %v1488
        %v1552 = vpop.f32.mrb[0].mxu0
        %v1553 = vadd.f32 0.0, %v1552
        %v1554 = vpop.f32.mrb[0].mxu0
        %v1555 = vadd.f32 0.0, %v1554
        %v1556 = vpop.f32.mrb[0].mxu0
        %v1557 = vpop.f32.mrb[0].mxu0
        %1558 = vdwg.mxu0
        %1559 = vmatprep.subr.bf16.mxu0 %v1501
        %1560 = vmatpush1.bf16.msra.mxu0 %v1498
        %1561 = vmatprep.subr.bf16.mxu0 0
        %1562 = vmatpush1.bf16.msra.mxu0 0
        %1563 = vmatprep.subr.bf16.mxu0 0
        %1564 = vmatpush1.bf16.msra.mxu0 0
        %1565 = vmatprep.subr.bf16.mxu0 0
        %1566 = vmatpush1.bf16.msra.mxu0 0
        %1567 = vmatprep.subr.bf16.mxu0 0
        %1568 = vmatpush1.bf16.msra.mxu0 0
        %1569 = vmatprep.subr.bf16.mxu0 0
        %1570 = vmatpush1.bf16.msra.mxu0 0
        %1571 = vmatprep.subr.bf16.mxu0 0
        %1572 = vmatpush1.bf16.msra.mxu0 0
        %1573 = vmatprep.subr.bf16.mxu0 0
        %1574 = vmatpush1.bf16.msra.mxu0 0
        %1575 = vmatprep.subr.bf16.mxu0 0
        %1576 = vmatpush1.bf16.msra.mxu0 0
        %1577 = vmatprep.subr.bf16.mxu0 0
        %1578 = vmatpush1.bf16.msra.mxu0 0
        %1579 = vmatprep.subr.bf16.mxu0 0
        %1580 = vmatpush1.bf16.msra.mxu0 0
        %1581 = vmatprep.subr.bf16.mxu0 0
        %1582 = vmatpush1.bf16.msra.mxu0 0
        %1583 = vmatprep.subr.bf16.mxu0 0
        %1584 = vmatpush1.bf16.msra.mxu0 0
        %1585 = vmatprep.subr.bf16.mxu0 0
        %1586 = vmatpush1.bf16.msra.mxu0 0
        %1587 = vmatprep.subr.bf16.mxu0 0
        %1588 = vmatpush1.bf16.msra.mxu0 0
        %1589 = vmatprep.subr.bf16.mxu0 0
        %1590 = vmatpush1.bf16.msra.mxu0 0
        %1591 = vmatprep.mubr.bf16.mxu0 0
        %1592 = vmatmul.mubr.bf16.gmra.mrb[0].mxu0 %v1488
        %v1593 = vpop.f32.mrb[0].mxu0
        %v1594 = vadd.f32 0.0, %v1593
        %v1595 = vpop.f32.mrb[0].mxu0
        %v1596 = vadd.f32 0.0, %v1595
        %v1597 = vpop.f32.mrb[0].mxu0
        %v1598 = vpop.f32.mrb[0].mxu0
        %1599 = vdwg.mxu0
        %1600 = vmatprep.subr.bf16.mxu0 %v1507
        %1601 = vmatpush1.bf16.msra.mxu0 %v1504
        %1602 = vmatprep.subr.bf16.mxu0 0
        %1603 = vmatpush1.bf16.msra.mxu0 0
        %1604 = vmatprep.subr.bf16.mxu0 0
        %1605 = vmatpush1.bf16.msra.mxu0 0
        %1606 = vmatprep.subr.bf16.mxu0 0
        %1607 = vmatpush1.bf16.msra.mxu0 0
        %1608 = vmatprep.subr.bf16.mxu0 0
        %1609 = vmatpush1.bf16.msra.mxu0 0
        %1610 = vmatprep.subr.bf16.mxu0 0
        %1611 = vmatpush1.bf16.msra.mxu0 0
        %1612 = vmatprep.subr.bf16.mxu0 0
        %1613 = vmatpush1.bf16.msra.mxu0 0
        %1614 = vmatprep.subr.bf16.mxu0 0
        %1615 = vmatpush1.bf16.msra.mxu0 0
        %1616 = vmatprep.subr.bf16.mxu0 0
        %1617 = vmatpush1.bf16.msra.mxu0 0
        %1618 = vmatprep.subr.bf16.mxu0 0
        %1619 = vmatpush1.bf16.msra.mxu0 0
        %1620 = vmatprep.subr.bf16.mxu0 0
        %1621 = vmatpush1.bf16.msra.mxu0 0
        %1622 = vmatprep.subr.bf16.mxu0 0
        %1623 = vmatpush1.bf16.msra.mxu0 0
        %1624 = vmatprep.subr.bf16.mxu0 0
        %1625 = vmatpush1.bf16.msra.mxu0 0
        %1626 = vmatprep.subr.bf16.mxu0 0
        %1627 = vmatpush1.bf16.msra.mxu0 0
        %1628 = vmatprep.subr.bf16.mxu0 0
        %1629 = vmatpush1.bf16.msra.mxu0 0
        %1630 = vmatprep.subr.bf16.mxu0 0
        %1631 = vmatpush1.bf16.msra.mxu0 0
        %1632 = vmatprep.mubr.bf16.mxu0 0
        %1633 = vmatmul.mubr.bf16.gmra.mrb[0].mxu0 %v1488
        %v1634 = vpop.f32.mrb[0].mxu0
        %v1635 = vadd.f32 0.0, %v1634
        %v1636 = vpop.f32.mrb[0].mxu0
        %v1637 = vadd.f32 0.0, %v1636
        %v1638 = vpop.f32.mrb[0].mxu0
        %v1639 = vpop.f32.mrb[0].mxu0
        %1640 = vdwg.mxu0
        %1641 = vmatprep.subr.bf16.mxu0 %v1513
        %1642 = vmatpush1.bf16.msra.mxu0 %v1510
        %1643 = vmatprep.subr.bf16.mxu0 0
        %1644 = vmatpush1.bf16.msra.mxu0 0
        %1645 = vmatprep.subr.bf16.mxu0 0
        %1646 = vmatpush1.bf16.msra.mxu0 0
        %1647 = vmatprep.subr.bf16.mxu0 0
        %1648 = vmatpush1.bf16.msra.mxu0 0
        %1649 = vmatprep.subr.bf16.mxu0 0
        %1650 = vmatpush1.bf16.msra.mxu0 0
        %1651 = vmatprep.subr.bf16.mxu0 0
        %1652 = vmatpush1.bf16.msra.mxu0 0
        %1653 = vmatprep.subr.bf16.mxu0 0
        %1654 = vmatpush1.bf16.msra.mxu0 0
        %1655 = vmatprep.subr.bf16.mxu0 0
        %1656 = vmatpush1.bf16.msra.mxu0 0
        %1657 = vmatprep.subr.bf16.mxu0 0
        %1658 = vmatpush1.bf16.msra.mxu0 0
        %1659 = vmatprep.subr.bf16.mxu0 0
        %1660 = vmatpush1.bf16.msra.mxu0 0
        %1661 = vmatprep.subr.bf16.mxu0 0
        %1662 = vmatpush1.bf16.msra.mxu0 0
        %1663 = vmatprep.subr.bf16.mxu0 0
        %1664 = vmatpush1.bf16.msra.mxu0 0
        %1665 = vmatprep.subr.bf16.mxu0 0
        %1666 = vmatpush1.bf16.msra.mxu0 0
        %1667 = vmatprep.subr.bf16.mxu0 0
        %1668 = vmatpush1.bf16.msra.mxu0 0
        %1669 = vmatprep.subr.bf16.mxu0 0
        %1670 = vmatpush1.bf16.msra.mxu0 0
        %1671 = vmatprep.subr.bf16.mxu0 0
        %1672 = vmatpush1.bf16.msra.mxu0 0
        %1673 = vmatprep.mubr.bf16.mxu0 0
        %1674 = vmatmul.mubr.bf16.gmra.mrb[0].mxu0 %v1488
        %v1675 = vpop.f32.mrb[0].mxu0
        %v1676 = vadd.f32 0.0, %v1675
        %v1677 = vpop.f32.mrb[0].mxu0
        %v1678 = vadd.f32 0.0, %v1677
        %v1679 = vpop.f32.mrb[0].mxu0
        %v1680 = vpop.f32.mrb[0].mxu0
        %1681 = vdwg.mxu0
        %1682 = vmatprep.subr.bf16.mxu0 0
        %1683 = vmatpush1.bf16.msra.mxu0 %v1516
        %1684 = vmatprep.subr.bf16.mxu0 0
        %1685 = vmatpush1.bf16.msra.mxu0 0
        %1686 = vmatprep.subr.bf16.mxu0 0
        %1687 = vmatpush1.bf16.msra.mxu0 0
        %1688 = vmatprep.subr.bf16.mxu0 0
        %1689 = vmatpush1.bf16.msra.mxu0 0
        %1690 = vmatprep.subr.bf16.mxu0 0
        %1691 = vmatpush1.bf16.msra.mxu0 0
        %1692 = vmatprep.subr.bf16.mxu0 0
        %1693 = vmatpush1.bf16.msra.mxu0 0
        %1694 = vmatprep.subr.bf16.mxu0 0
        %1695 = vmatpush1.bf16.msra.mxu0 0
        %1696 = vmatprep.subr.bf16.mxu0 0
        %1697 = vmatpush1.bf16.msra.mxu0 0
        %1698 = vmatprep.subr.bf16.mxu0 0
        %1699 = vmatpush1.bf16.msra.mxu0 0
        %1700 = vmatprep.subr.bf16.mxu0 0
        %1701 = vmatpush1.bf16.msra.mxu0 0
        %1702 = vmatprep.subr.bf16.mxu0 0
        %1703 = vmatpush1.bf16.msra.mxu0 0
        %1704 = vmatprep.subr.bf16.mxu0 0
        %1705 = vmatpush1.bf16.msra.mxu0 0
        %1706 = vmatprep.subr.bf16.mxu0 0
        %1707 = vmatpush1.bf16.msra.mxu0 0
        %1708 = vmatprep.subr.bf16.mxu0 0
        %1709 = vmatpush1.bf16.msra.mxu0 0
        %1710 = vmatprep.subr.bf16.mxu0 0
        %1711 = vmatpush1.bf16.msra.mxu0 0
        %1712 = vmatprep.subr.bf16.mxu0 0
        %1713 = vmatpush1.bf16.msra.mxu0 0
        %1714 = vmatprep.mubr.bf16.mxu0 0
        %1715 = vmatmul.mubr.bf16.gmra.mrb[0].mxu0 %v1488
        %v1716 = vpop.f32.mrb[0].mxu0
        %v1717 = vadd.f32 0.0, %v1716
        %v1718 = vpop.f32.mrb[0].mxu0
        %v1719 = vpop.f32.mrb[0].mxu0
        %v1720 = vpop.f32.mrb[0].mxu0
        %1721 = vdwg.mxu0
        %v1723 = vsel %vm1486, %v1430, 0
        %v1726 = vsel %vm1490, %v1431, 0
        %v1729 = vsel %vm1490, %v1432, 0
        %v1732 = vsel %vm1490, %v1433, 0
        %v1735 = vsel %vm1490, %v1434, 0
        %v1738 = vsel %vm1490, %v1435, 0
        %v1741 = vsel %vm1490, %v1436, 0
        %v1744 = vsel %vm1490, %v1437, 0
        %v1747 = vsel %vm1490, %v1438, 0
        %v1750 = vsel %vm1490, %v1439, 0
        %1752 = vmatprep.subr.bf16.mxu0 %v1729
        %1753 = vmatpush1.bf16.msra.mxu0 %v1726
        %1754 = vmatprep.subr.bf16.mxu0 0
        %1755 = vmatpush1.bf16.msra.mxu0 0
        %1756 = vmatprep.subr.bf16.mxu0 0
        %1757 = vmatpush1.bf16.msra.mxu0 0
        %1758 = vmatprep.subr.bf16.mxu0 0
        %1759 = vmatpush1.bf16.msra.mxu0 0
        %1760 = vmatprep.subr.bf16.mxu0 0
        %1761 = vmatpush1.bf16.msra.mxu0 0
        %1762 = vmatprep.subr.bf16.mxu0 0
        %1763 = vmatpush1.bf16.msra.mxu0 0
        %1764 = vmatprep.subr.bf16.mxu0 0
        %1765 = vmatpush1.bf16.msra.mxu0 0
        %1766 = vmatprep.subr.bf16.mxu0 0
        %1767 = vmatpush1.bf16.msra.mxu0 0
        %1768 = vmatprep.subr.bf16.mxu0 0
        %1769 = vmatpush1.bf16.msra.mxu0 0
        %1770 = vmatprep.subr.bf16.mxu0 0
        %1771 = vmatpush1.bf16.msra.mxu0 0
        %1772 = vmatprep.subr.bf16.mxu0 0
        %1773 = vmatpush1.bf16.msra.mxu0 0
        %1774 = vmatprep.subr.bf16.mxu0 0
        %1775 = vmatpush1.bf16.msra.mxu0 0
        %1776 = vmatprep.subr.bf16.mxu0 0
        %1777 = vmatpush1.bf16.msra.mxu0 0
        %1778 = vmatprep.subr.bf16.mxu0 0
        %1779 = vmatpush1.bf16.msra.mxu0 0
        %1780 = vmatprep.subr.bf16.mxu0 0
        %1781 = vmatpush1.bf16.msra.mxu0 0
        %1782 = vmatprep.subr.bf16.mxu0 0
        %1783 = vmatpush1.bf16.msra.mxu0 0
        %1784 = vmatprep.mubr.bf16.mxu0 0
        %1785 = vmatmul.mubr.bf16.gmra.mrb[0].mxu0 %v1723
        %v1786 = vpop.f32.mrb[0].mxu0
        %v1787 = vadd.f32 %v1553, %v1786
        %v1788 = vpop.f32.mrb[0].mxu0
        %v1789 = vadd.f32 %v1555, %v1788
        %v1790 = vpop.f32.mrb[0].mxu0
        %v1791 = vpop.f32.mrb[0].mxu0
        %1792 = vdwg.mxu0
        %1793 = vmatprep.subr.bf16.mxu0 %v1735
        %1794 = vmatpush1.bf16.msra.mxu0 %v1732
        %1795 = vmatprep.subr.bf16.mxu0 0
        %1796 = vmatpush1.bf16.msra.mxu0 0
        %1797 = vmatprep.subr.bf16.mxu0 0
        %1798 = vmatpush1.bf16.msra.mxu0 0
        %1799 = vmatprep.subr.bf16.mxu0 0
        %1800 = vmatpush1.bf16.msra.mxu0 0
        %1801 = vmatprep.subr.bf16.mxu0 0
        %1802 = vmatpush1.bf16.msra.mxu0 0
        %1803 = vmatprep.subr.bf16.mxu0 0
        %1804 = vmatpush1.bf16.msra.mxu0 0
        %1805 = vmatprep.subr.bf16.mxu0 0
        %1806 = vmatpush1.bf16.msra.mxu0 0
        %1807 = vmatprep.subr.bf16.mxu0 0
        %1808 = vmatpush1.bf16.msra.mxu0 0
        %1809 = vmatprep.subr.bf16.mxu0 0
        %1810 = vmatpush1.bf16.msra.mxu0 0
        %1811 = vmatprep.subr.bf16.mxu0 0
        %1812 = vmatpush1.bf16.msra.mxu0 0
        %1813 = vmatprep.subr.bf16.mxu0 0
        %1814 = vmatpush1.bf16.msra.mxu0 0
        %1815 = vmatprep.subr.bf16.mxu0 0
        %1816 = vmatpush1.bf16.msra.mxu0 0
        %1817 = vmatprep.subr.bf16.mxu0 0
        %1818 = vmatpush1.bf16.msra.mxu0 0
        %1819 = vmatprep.subr.bf16.mxu0 0
        %1820 = vmatpush1.bf16.msra.mxu0 0
        %1821 = vmatprep.subr.bf16.mxu0 0
        %1822 = vmatpush1.bf16.msra.mxu0 0
        %1823 = vmatprep.subr.bf16.mxu0 0
        %1824 = vmatpush1.bf16.msra.mxu0 0
        %1825 = vmatprep.mubr.bf16.mxu0 0
        %1826 = vmatmul.mubr.bf16.gmra.mrb[0].mxu0 %v1723
        %v1827 = vpop.f32.mrb[0].mxu0
        %v1828 = vadd.f32 %v1594, %v1827
        %v1829 = vpop.f32.mrb[0].mxu0
        %v1830 = vadd.f32 %v1596, %v1829
        %v1831 = vpop.f32.mrb[0].mxu0
        %v1832 = vpop.f32.mrb[0].mxu0
        %1833 = vdwg.mxu0
        %1834 = vmatprep.subr.bf16.mxu0 %v1741
        %1835 = vmatpush1.bf16.msra.mxu0 %v1738
        %1836 = vmatprep.subr.bf16.mxu0 0
        %1837 = vmatpush1.bf16.msra.mxu0 0
        %1838 = vmatprep.subr.bf16.mxu0 0
        %1839 = vmatpush1.bf16.msra.mxu0 0
        %1840 = vmatprep.subr.bf16.mxu0 0
        %1841 = vmatpush1.bf16.msra.mxu0 0
        %1842 = vmatprep.subr.bf16.mxu0 0
        %1843 = vmatpush1.bf16.msra.mxu0 0
        %1844 = vmatprep.subr.bf16.mxu0 0
        %1845 = vmatpush1.bf16.msra.mxu0 0
        %1846 = vmatprep.subr.bf16.mxu0 0
        %1847 = vmatpush1.bf16.msra.mxu0 0
        %1848 = vmatprep.subr.bf16.mxu0 0
        %1849 = vmatpush1.bf16.msra.mxu0 0
        %1850 = vmatprep.subr.bf16.mxu0 0
        %1851 = vmatpush1.bf16.msra.mxu0 0
        %1852 = vmatprep.subr.bf16.mxu0 0
        %1853 = vmatpush1.bf16.msra.mxu0 0
        %1854 = vmatprep.subr.bf16.mxu0 0
        %1855 = vmatpush1.bf16.msra.mxu0 0
        %1856 = vmatprep.subr.bf16.mxu0 0
        %1857 = vmatpush1.bf16.msra.mxu0 0
        %1858 = vmatprep.subr.bf16.mxu0 0
        %1859 = vmatpush1.bf16.msra.mxu0 0
        %1860 = vmatprep.subr.bf16.mxu0 0
        %1861 = vmatpush1.bf16.msra.mxu0 0
        %1862 = vmatprep.subr.bf16.mxu0 0
        %1863 = vmatpush1.bf16.msra.mxu0 0
        %1864 = vmatprep.subr.bf16.mxu0 0
        %1865 = vmatpush1.bf16.msra.mxu0 0
        %1866 = vmatprep.mubr.bf16.mxu0 0
        %1867 = vmatmul.mubr.bf16.gmra.mrb[0].mxu0 %v1723
        %v1868 = vpop.f32.mrb[0].mxu0
        %v1869 = vadd.f32 %v1635, %v1868
        %v1870 = vpop.f32.mrb[0].mxu0
        %v1871 = vadd.f32 %v1637, %v1870
        %v1872 = vpop.f32.mrb[0].mxu0
        %v1873 = vpop.f32.mrb[0].mxu0
        %1874 = vdwg.mxu0
        %1875 = vmatprep.subr.bf16.mxu0 %v1747
        %1876 = vmatpush1.bf16.msra.mxu0 %v1744
        %1877 = vmatprep.subr.bf16.mxu0 0
        %1878 = vmatpush1.bf16.msra.mxu0 0
        %1879 = vmatprep.subr.bf16.mxu0 0
        %1880 = vmatpush1.bf16.msra.mxu0 0
        %1881 = vmatprep.subr.bf16.mxu0 0
        %1882 = vmatpush1.bf16.msra.mxu0 0
        %1883 = vmatprep.subr.bf16.mxu0 0
        %1884 = vmatpush1.bf16.msra.mxu0 0
        %1885 = vmatprep.subr.bf16.mxu0 0
        %1886 = vmatpush1.bf16.msra.mxu0 0
        %1887 = vmatprep.subr.bf16.mxu0 0
        %1888 = vmatpush1.bf16.msra.mxu0 0
        %1889 = vmatprep.subr.bf16.mxu0 0
        %1890 = vmatpush1.bf16.msra.mxu0 0
        %1891 = vmatprep.subr.bf16.mxu0 0
        %1892 = vmatpush1.bf16.msra.mxu0 0
        %1893 = vmatprep.subr.bf16.mxu0 0
        %1894 = vmatpush1.bf16.msra.mxu0 0
        %1895 = vmatprep.subr.bf16.mxu0 0
        %1896 = vmatpush1.bf16.msra.mxu0 0
        %1897 = vmatprep.subr.bf16.mxu0 0
        %1898 = vmatpush1.bf16.msra.mxu0 0
        %1899 = vmatprep.subr.bf16.mxu0 0
        %1900 = vmatpush1.bf16.msra.mxu0 0
        %1901 = vmatprep.subr.bf16.mxu0 0
        %1902 = vmatpush1.bf16.msra.mxu0 0
        %1903 = vmatprep.subr.bf16.mxu0 0
        %1904 = vmatpush1.bf16.msra.mxu0 0
        %1905 = vmatprep.subr.bf16.mxu0 0
        %1906 = vmatpush1.bf16.msra.mxu0 0
        %1907 = vmatprep.mubr.bf16.mxu0 0
        %1908 = vmatmul.mubr.bf16.gmra.mrb[0].mxu0 %v1723
        %v1909 = vpop.f32.mrb[0].mxu0
        %v1910 = vadd.f32 %v1676, %v1909
        %v1911 = vpop.f32.mrb[0].mxu0
        %v1912 = vadd.f32 %v1678, %v1911
        %v1913 = vpop.f32.mrb[0].mxu0
        %v1914 = vpop.f32.mrb[0].mxu0
        %1915 = vdwg.mxu0
        %1916 = vmatprep.subr.bf16.mxu0 0
        %1917 = vmatpush1.bf16.msra.mxu0 %v1750
        %1918 = vmatprep.subr.bf16.mxu0 0
        %1919 = vmatpush1.bf16.msra.mxu0 0
        %1920 = vmatprep.subr.bf16.mxu0 0
        %1921 = vmatpush1.bf16.msra.mxu0 0
        %1922 = vmatprep.subr.bf16.mxu0 0
        %1923 = vmatpush1.bf16.msra.mxu0 0
        %1924 = vmatprep.subr.bf16.mxu0 0
        %1925 = vmatpush1.bf16.msra.mxu0 0
        %1926 = vmatprep.subr.bf16.mxu0 0
        %1927 = vmatpush1.bf16.msra.mxu0 0
        %1928 = vmatprep.subr.bf16.mxu0 0
        %1929 = vmatpush1.bf16.msra.mxu0 0
        %1930 = vmatprep.subr.bf16.mxu0 0
        %1931 = vmatpush1.bf16.msra.mxu0 0
        %1932 = vmatprep.subr.bf16.mxu0 0
        %1933 = vmatpush1.bf16.msra.mxu0 0
        %1934 = vmatprep.subr.bf16.mxu0 0
        %1935 = vmatpush1.bf16.msra.mxu0 0
        %1936 = vmatprep.subr.bf16.mxu0 0
        %1937 = vmatpush1.bf16.msra.mxu0 0
        %1938 = vmatprep.subr.bf16.mxu0 0
        %1939 = vmatpush1.bf16.msra.mxu0 0
        %1940 = vmatprep.subr.bf16.mxu0 0
        %1941 = vmatpush1.bf16.msra.mxu0 0
        %1942 = vmatprep.subr.bf16.mxu0 0
        %1943 = vmatpush1.bf16.msra.mxu0 0
        %1944 = vmatprep.subr.bf16.mxu0 0
        %1945 = vmatpush1.bf16.msra.mxu0 0
        %1946 = vmatprep.subr.bf16.mxu0 0
        %1947 = vmatpush1.bf16.msra.mxu0 0
        %1948 = vmatprep.mubr.bf16.mxu0 0
        %1949 = vmatmul.mubr.bf16.gmra.mrb[0].mxu0 %v1723
        %v1950 = vpop.f32.mrb[0].mxu0
        %v1951 = vadd.f32 %v1717, %v1950
        %v1952 = vpop.f32.mrb[0].mxu0
        %v1953 = vpop.f32.mrb[0].mxu0
        %v1954 = vpop.f32.mrb[0].mxu0
        %1955 = vdwg.mxu0
        %1956 = vrot.lane.b32.xlu0 %v1443, 112
        %v1957 = vpop.permute.xlu0 %1956
        %1958 = vrot.lane.b32.xlu0 %v1431, 126
        %v1959 = vpop.permute.xlu0 %1958
        %1960 = vrot.lane.b32.xlu0 %v1432, 126
        %v1961 = vpop.permute.xlu0 %1960
        %1962 = vrot.lane.b32.xlu0 %v1433, 126
        %v1963 = vpop.permute.xlu0 %1962
        %1964 = vrot.lane.b32.xlu0 %v1434, 126
        %v1965 = vpop.permute.xlu0 %1964
        %1966 = vrot.lane.b32.xlu0 %v1435, 126
        %v1967 = vpop.permute.xlu0 %1966
        %1968 = vrot.lane.b32.xlu0 %v1436, 126
        %v1969 = vpop.permute.xlu0 %1968
        %1970 = vrot.lane.b32.xlu0 %v1437, 126
        %v1971 = vpop.permute.xlu0 %1970
        %1972 = vrot.lane.b32.xlu0 %v1438, 126
        %v1973 = vpop.permute.xlu0 %1972
        %1974 = vrot.lane.b32.xlu0 %v1439, 126
        %v1975 = vpop.permute.xlu0 %1974
        %1976 = vrot.lane.b32.xlu0 %v1440, 126
        %v1977 = vpop.permute.xlu0 %1976
        %vm1978 = vcmask 1031168
        %v1979 = vsel %vm1978, %v1959, %v1961
        %v1980 = vsel %vm1978, %v1961, %v1963
        %v1981 = vsel %vm1978, %v1963, %v1965
        %v1982 = vsel %vm1978, %v1965, %v1967
        %v1983 = vsel %vm1978, %v1967, %v1969
        %v1984 = vsel %vm1978, %v1969, %v1971
        %v1985 = vsel %vm1978, %v1971, %v1973
        %v1986 = vsel %vm1978, %v1973, %v1975
        %v1987 = vsel %vm1978, %v1975, %v1977
        %v1989 = vsel %vm1486, %v1957, 0
        %v1992 = vsel %vm1490, %v1979, 0
        %v1995 = vsel %vm1490, %v1980, 0
        %v1998 = vsel %vm1490, %v1981, 0
        %v2001 = vsel %vm1490, %v1982, 0
        %v2004 = vsel %vm1490, %v1983, 0
        %v2007 = vsel %vm1490, %v1984, 0
        %v2010 = vsel %vm1490, %v1985, 0
        %v2013 = vsel %vm1490, %v1986, 0
        %v2016 = vsel %vm1490, %v1987, 0
        %2018 = vmatprep.subr.bf16.mxu0 %v1995
        %2019 = vmatpush1.bf16.msra.mxu0 %v1992
        %2020 = vmatprep.subr.bf16.mxu0 0
        %2021 = vmatpush1.bf16.msra.mxu0 0
        %2022 = vmatprep.subr.bf16.mxu0 0
        %2023 = vmatpush1.bf16.msra.mxu0 0
        %2024 = vmatprep.subr.bf16.mxu0 0
        %2025 = vmatpush1.bf16.msra.mxu0 0
        %2026 = vmatprep.subr.bf16.mxu0 0
        %2027 = vmatpush1.bf16.msra.mxu0 0
        %2028 = vmatprep.subr.bf16.mxu0 0
        %2029 = vmatpush1.bf16.msra.mxu0 0
        %2030 = vmatprep.subr.bf16.mxu0 0
        %2031 = vmatpush1.bf16.msra.mxu0 0
        %2032 = vmatprep.subr.bf16.mxu0 0
        %2033 = vmatpush1.bf16.msra.mxu0 0
        %2034 = vmatprep.subr.bf16.mxu0 0
        %2035 = vmatpush1.bf16.msra.mxu0 0
        %2036 = vmatprep.subr.bf16.mxu0 0
        %2037 = vmatpush1.bf16.msra.mxu0 0
        %2038 = vmatprep.subr.bf16.mxu0 0
        %2039 = vmatpush1.bf16.msra.mxu0 0
        %2040 = vmatprep.subr.bf16.mxu0 0
        %2041 = vmatpush1.bf16.msra.mxu0 0
        %2042 = vmatprep.subr.bf16.mxu0 0
        %2043 = vmatpush1.bf16.msra.mxu0 0
        %2044 = vmatprep.subr.bf16.mxu0 0
        %2045 = vmatpush1.bf16.msra.mxu0 0
        %2046 = vmatprep.subr.bf16.mxu0 0
        %2047 = vmatpush1.bf16.msra.mxu0 0
        %2048 = vmatprep.subr.bf16.mxu0 0
        %2049 = vmatpush1.bf16.msra.mxu0 0
        %2050 = vmatprep.mubr.bf16.mxu0 0
        %2051 = vmatmul.mubr.bf16.gmra.mrb[0].mxu0 %v1989
        %v2052 = vpop.f32.mrb[0].mxu0
        %v2053 = vadd.f32 0.0, %v2052
        %v2054 = vpop.f32.mrb[0].mxu0
        %v2055 = vadd.f32 0.0, %v2054
        %v2056 = vpop.f32.mrb[0].mxu0
        %v2057 = vpop.f32.mrb[0].mxu0
        %2058 = vdwg.mxu0
        %2059 = vmatprep.subr.bf16.mxu0 %v2001
        %2060 = vmatpush1.bf16.msra.mxu0 %v1998
        %2061 = vmatprep.subr.bf16.mxu0 0
        %2062 = vmatpush1.bf16.msra.mxu0 0
        %2063 = vmatprep.subr.bf16.mxu0 0
        %2064 = vmatpush1.bf16.msra.mxu0 0
        %2065 = vmatprep.subr.bf16.mxu0 0
        %2066 = vmatpush1.bf16.msra.mxu0 0
        %2067 = vmatprep.subr.bf16.mxu0 0
        %2068 = vmatpush1.bf16.msra.mxu0 0
        %2069 = vmatprep.subr.bf16.mxu0 0
        %2070 = vmatpush1.bf16.msra.mxu0 0
        %2071 = vmatprep.subr.bf16.mxu0 0
        %2072 = vmatpush1.bf16.msra.mxu0 0
        %2073 = vmatprep.subr.bf16.mxu0 0
        %2074 = vmatpush1.bf16.msra.mxu0 0
        %2075 = vmatprep.subr.bf16.mxu0 0
        %2076 = vmatpush1.bf16.msra.mxu0 0
        %2077 = vmatprep.subr.bf16.mxu0 0
        %2078 = vmatpush1.bf16.msra.mxu0 0
        %2079 = vmatprep.subr.bf16.mxu0 0
        %2080 = vmatpush1.bf16.msra.mxu0 0
        %2081 = vmatprep.subr.bf16.mxu0 0
        %2082 = vmatpush1.bf16.msra.mxu0 0
        %2083 = vmatprep.subr.bf16.mxu0 0
        %2084 = vmatpush1.bf16.msra.mxu0 0
        %2085 = vmatprep.subr.bf16.mxu0 0
        %2086 = vmatpush1.bf16.msra.mxu0 0
        %2087 = vmatprep.subr.bf16.mxu0 0
        %2088 = vmatpush1.bf16.msra.mxu0 0
        %2089 = vmatprep.subr.bf16.mxu0 0
        %2090 = vmatpush1.bf16.msra.mxu0 0
        %2091 = vmatprep.mubr.bf16.mxu0 0
        %2092 = vmatmul.mubr.bf16.gmra.mrb[0].mxu0 %v1989
        %v2093 = vpop.f32.mrb[0].mxu0
        %v2094 = vadd.f32 0.0, %v2093
        %v2095 = vpop.f32.mrb[0].mxu0
        %v2096 = vadd.f32 0.0, %v2095
        %v2097 = vpop.f32.mrb[0].mxu0
        %v2098 = vpop.f32.mrb[0].mxu0
        %2099 = vdwg.mxu0
        %2100 = vmatprep.subr.bf16.mxu0 %v2007
        %2101 = vmatpush1.bf16.msra.mxu0 %v2004
        %2102 = vmatprep.subr.bf16.mxu0 0
        %2103 = vmatpush1.bf16.msra.mxu0 0
        %2104 = vmatprep.subr.bf16.mxu0 0
        %2105 = vmatpush1.bf16.msra.mxu0 0
        %2106 = vmatprep.subr.bf16.mxu0 0
        %2107 = vmatpush1.bf16.msra.mxu0 0
        %2108 = vmatprep.subr.bf16.mxu0 0
        %2109 = vmatpush1.bf16.msra.mxu0 0
        %2110 = vmatprep.subr.bf16.mxu0 0
        %2111 = vmatpush1.bf16.msra.mxu0 0
        %2112 = vmatprep.subr.bf16.mxu0 0
        %2113 = vmatpush1.bf16.msra.mxu0 0
        %2114 = vmatprep.subr.bf16.mxu0 0
        %2115 = vmatpush1.bf16.msra.mxu0 0
        %2116 = vmatprep.subr.bf16.mxu0 0
        %2117 = vmatpush1.bf16.msra.mxu0 0
        %2118 = vmatprep.subr.bf16.mxu0 0
        %2119 = vmatpush1.bf16.msra.mxu0 0
        %2120 = vmatprep.subr.bf16.mxu0 0
        %2121 = vmatpush1.bf16.msra.mxu0 0
        %2122 = vmatprep.subr.bf16.mxu0 0
        %2123 = vmatpush1.bf16.msra.mxu0 0
        %2124 = vmatprep.subr.bf16.mxu0 0
        %2125 = vmatpush1.bf16.msra.mxu0 0
        %2126 = vmatprep.subr.bf16.mxu0 0
        %2127 = vmatpush1.bf16.msra.mxu0 0
        %2128 = vmatprep.subr.bf16.mxu0 0
        %2129 = vmatpush1.bf16.msra.mxu0 0
        %2130 = vmatprep.subr.bf16.mxu0 0
        %2131 = vmatpush1.bf16.msra.mxu0 0
        %2132 = vmatprep.mubr.bf16.mxu0 0
        %2133 = vmatmul.mubr.bf16.gmra.mrb[0].mxu0 %v1989
        %v2134 = vpop.f32.mrb[0].mxu0
        %v2135 = vadd.f32 0.0, %v2134
        %v2136 = vpop.f32.mrb[0].mxu0
        %v2137 = vadd.f32 0.0, %v2136
        %v2138 = vpop.f32.mrb[0].mxu0
        %v2139 = vpop.f32.mrb[0].mxu0
        %2140 = vdwg.mxu0
        %2141 = vmatprep.subr.bf16.mxu0 %v2013
        %2142 = vmatpush1.bf16.msra.mxu0 %v2010
        %2143 = vmatprep.subr.bf16.mxu0 0
        %2144 = vmatpush1.bf16.msra.mxu0 0
        %2145 = vmatprep.subr.bf16.mxu0 0
        %2146 = vmatpush1.bf16.msra.mxu0 0
        %2147 = vmatprep.subr.bf16.mxu0 0
        %2148 = vmatpush1.bf16.msra.mxu0 0
        %2149 = vmatprep.subr.bf16.mxu0 0
        %2150 = vmatpush1.bf16.msra.mxu0 0
        %2151 = vmatprep.subr.bf16.mxu0 0
        %2152 = vmatpush1.bf16.msra.mxu0 0
        %2153 = vmatprep.subr.bf16.mxu0 0
        %2154 = vmatpush1.bf16.msra.mxu0 0
        %2155 = vmatprep.subr.bf16.mxu0 0
        %2156 = vmatpush1.bf16.msra.mxu0 0
        %2157 = vmatprep.subr.bf16.mxu0 0
        %2158 = vmatpush1.bf16.msra.mxu0 0
        %2159 = vmatprep.subr.bf16.mxu0 0
        %2160 = vmatpush1.bf16.msra.mxu0 0
        %2161 = vmatprep.subr.bf16.mxu0 0
        %2162 = vmatpush1.bf16.msra.mxu0 0
        %2163 = vmatprep.subr.bf16.mxu0 0
        %2164 = vmatpush1.bf16.msra.mxu0 0
        %2165 = vmatprep.subr.bf16.mxu0 0
        %2166 = vmatpush1.bf16.msra.mxu0 0
        %2167 = vmatprep.subr.bf16.mxu0 0
        %2168 = vmatpush1.bf16.msra.mxu0 0
        %2169 = vmatprep.subr.bf16.mxu0 0
        %2170 = vmatpush1.bf16.msra.mxu0 0
        %2171 = vmatprep.subr.bf16.mxu0 0
        %2172 = vmatpush1.bf16.msra.mxu0 0
        %2173 = vmatprep.mubr.bf16.mxu0 0
        %2174 = vmatmul.mubr.bf16.gmra.mrb[0].mxu0 %v1989
        %v2175 = vpop.f32.mrb[0].mxu0
        %v2176 = vadd.f32 0.0, %v2175
        %v2177 = vpop.f32.mrb[0].mxu0
        %v2178 = vadd.f32 0.0, %v2177
        %v2179 = vpop.f32.mrb[0].mxu0
        %v2180 = vpop.f32.mrb[0].mxu0
        %2181 = vdwg.mxu0
        %2182 = vmatprep.subr.bf16.mxu0 0
        %2183 = vmatpush1.bf16.msra.mxu0 %v2016
        %2184 = vmatprep.subr.bf16.mxu0 0
        %2185 = vmatpush1.bf16.msra.mxu0 0
        %2186 = vmatprep.subr.bf16.mxu0 0
        %2187 = vmatpush1.bf16.msra.mxu0 0
        %2188 = vmatprep.subr.bf16.mxu0 0
        %2189 = vmatpush1.bf16.msra.mxu0 0
        %2190 = vmatprep.subr.bf16.mxu0 0
        %2191 = vmatpush1.bf16.msra.mxu0 0
        %2192 = vmatprep.subr.bf16.mxu0 0
        %2193 = vmatpush1.bf16.msra.mxu0 0
        %2194 = vmatprep.subr.bf16.mxu0 0
        %2195 = vmatpush1.bf16.msra.mxu0 0
        %2196 = vmatprep.subr.bf16.mxu0 0
        %2197 = vmatpush1.bf16.msra.mxu0 0
        %2198 = vmatprep.subr.bf16.mxu0 0
        %2199 = vmatpush1.bf16.msra.mxu0 0
        %2200 = vmatprep.subr.bf16.mxu0 0
        %2201 = vmatpush1.bf16.msra.mxu0 0
        %2202 = vmatprep.subr.bf16.mxu0 0
        %2203 = vmatpush1.bf16.msra.mxu0 0
        %2204 = vmatprep.subr.bf16.mxu0 0
        %2205 = vmatpush1.bf16.msra.mxu0 0
        %2206 = vmatprep.subr.bf16.mxu0 0
        %2207 = vmatpush1.bf16.msra.mxu0 0
        %2208 = vmatprep.subr.bf16.mxu0 0
        %2209 = vmatpush1.bf16.msra.mxu0 0
        %2210 = vmatprep.subr.bf16.mxu0 0
        %2211 = vmatpush1.bf16.msra.mxu0 0
        %2212 = vmatprep.subr.bf16.mxu0 0
        %2213 = vmatpush1.bf16.msra.mxu0 0
        %2214 = vmatprep.mubr.bf16.mxu0 0
        %2215 = vmatmul.mubr.bf16.gmra.mrb[0].mxu0 %v1989
        %v2216 = vpop.f32.mrb[0].mxu0
        %v2217 = vadd.f32 0.0, %v2216
        %v2218 = vpop.f32.mrb[0].mxu0
        %v2219 = vpop.f32.mrb[0].mxu0
        %v2220 = vpop.f32.mrb[0].mxu0
        %2221 = vdwg.mxu0
        %v2222 = vadd.f32 %v1787, %v2053
        %v2223 = vadd.f32 %v1789, %v2055
        %v2224 = vadd.f32 %v1828, %v2094
        %v2225 = vadd.f32 %v1830, %v2096
        %v2226 = vadd.f32 %v1869, %v2135
        %v2227 = vadd.f32 %v1871, %v2137
        %v2228 = vadd.f32 %v1910, %v2176
        %v2229 = vadd.f32 %v1912, %v2178
        %v2230 = vadd.f32 %v1951, %v2217
        %2231 = vrot.lane.b32.xlu0 %v1443, 104
        %v2232 = vpop.permute.xlu0 %2231
        %2233 = vrot.lane.b32.xlu0 %v1431, 92
        %v2234 = vpop.permute.xlu0 %2233
        %2235 = vrot.lane.b32.xlu0 %v1432, 92
        %v2236 = vpop.permute.xlu0 %2235
        %2237 = vrot.lane.b32.xlu0 %v1433, 92
        %v2238 = vpop.permute.xlu0 %2237
        %2239 = vrot.lane.b32.xlu0 %v1434, 92
        %v2240 = vpop.permute.xlu0 %2239
        %2241 = vrot.lane.b32.xlu0 %v1435, 92
        %v2242 = vpop.permute.xlu0 %2241
        %2243 = vrot.lane.b32.xlu0 %v1436, 92
        %v2244 = vpop.permute.xlu0 %2243
        %2245 = vrot.lane.b32.xlu0 %v1437, 92
        %v2246 = vpop.permute.xlu0 %2245
        %2247 = vrot.lane.b32.xlu0 %v1438, 92
        %v2248 = vpop.permute.xlu0 %2247
        %2249 = vrot.lane.b32.xlu0 %v1439, 92
        %v2250 = vpop.permute.xlu0 %2249
        %2251 = vrot.lane.b32.xlu0 %v1440, 92
        %v2252 = vpop.permute.xlu0 %2251
        %vm2253 = vcmask 752640
        %v2254 = vsel %vm2253, %v2234, %v2236
        %v2255 = vsel %vm2253, %v2236, %v2238
        %v2256 = vsel %vm2253, %v2238, %v2240
        %v2257 = vsel %vm2253, %v2240, %v2242
        %v2258 = vsel %vm2253, %v2242, %v2244
        %v2259 = vsel %vm2253, %v2244, %v2246
        %v2260 = vsel %vm2253, %v2246, %v2248
        %v2261 = vsel %vm2253, %v2248, %v2250
        %v2262 = vsel %vm2253, %v2250, %v2252
        %v2264 = vsel %vm1486, %v2232, 0
        %v2267 = vsel %vm1490, %v2254, 0
        %v2270 = vsel %vm1490, %v2255, 0
        %v2273 = vsel %vm1490, %v2256, 0
        %v2276 = vsel %vm1490, %v2257, 0
        %v2279 = vsel %vm1490, %v2258, 0
        %v2282 = vsel %vm1490, %v2259, 0
        %v2285 = vsel %vm1490, %v2260, 0
        %v2288 = vsel %vm1490, %v2261, 0
        %v2291 = vsel %vm1490, %v2262, 0
        %2293 = vmatprep.subr.bf16.mxu0 %v2270
        %2294 = vmatpush1.bf16.msra.mxu0 %v2267
        %2295 = vmatprep.subr.bf16.mxu0 0
        %2296 = vmatpush1.bf16.msra.mxu0 0
        %2297 = vmatprep.subr.bf16.mxu0 0
        %2298 = vmatpush1.bf16.msra.mxu0 0
        %2299 = vmatprep.subr.bf16.mxu0 0
        %2300 = vmatpush1.bf16.msra.mxu0 0
        %2301 = vmatprep.subr.bf16.mxu0 0
        %2302 = vmatpush1.bf16.msra.mxu0 0
        %2303 = vmatprep.subr.bf16.mxu0 0
        %2304 = vmatpush1.bf16.msra.mxu0 0
        %2305 = vmatprep.subr.bf16.mxu0 0
        %2306 = vmatpush1.bf16.msra.mxu0 0
        %2307 = vmatprep.subr.bf16.mxu0 0
        %2308 = vmatpush1.bf16.msra.mxu0 0
        %2309 = vmatprep.subr.bf16.mxu0 0
        %2310 = vmatpush1.bf16.msra.mxu0 0
        %2311 = vmatprep.subr.bf16.mxu0 0
        %2312 = vmatpush1.bf16.msra.mxu0 0
        %2313 = vmatprep.subr.bf16.mxu0 0
        %2314 = vmatpush1.bf16.msra.mxu0 0
        %2315 = vmatprep.subr.bf16.mxu0 0
        %2316 = vmatpush1.bf16.msra.mxu0 0
        %2317 = vmatprep.subr.bf16.mxu0 0
        %2318 = vmatpush1.bf16.msra.mxu0 0
        %2319 = vmatprep.subr.bf16.mxu0 0
        %2320 = vmatpush1.bf16.msra.mxu0 0
        %2321 = vmatprep.subr.bf16.mxu0 0
        %2322 = vmatpush1.bf16.msra.mxu0 0
        %2323 = vmatprep.subr.bf16.mxu0 0
        %2324 = vmatpush1.bf16.msra.mxu0 0
        %2325 = vmatprep.mubr.bf16.mxu0 0
        %2326 = vmatmul.mubr.bf16.gmra.mrb[0].mxu0 %v2264
        %v2327 = vpop.f32.mrb[0].mxu0
        %v2328 = vadd.f32 0.0, %v2327
        %v2329 = vpop.f32.mrb[0].mxu0
        %v2330 = vadd.f32 0.0, %v2329
        %v2331 = vpop.f32.mrb[0].mxu0
        %v2332 = vpop.f32.mrb[0].mxu0
        %2333 = vdwg.mxu0
        %2334 = vmatprep.subr.bf16.mxu0 %v2276
        %2335 = vmatpush1.bf16.msra.mxu0 %v2273
        %2336 = vmatprep.subr.bf16.mxu0 0
        %2337 = vmatpush1.bf16.msra.mxu0 0
        %2338 = vmatprep.subr.bf16.mxu0 0
        %2339 = vmatpush1.bf16.msra.mxu0 0
        %2340 = vmatprep.subr.bf16.mxu0 0
        %2341 = vmatpush1.bf16.msra.mxu0 0
        %2342 = vmatprep.subr.bf16.mxu0 0
        %2343 = vmatpush1.bf16.msra.mxu0 0
        %2344 = vmatprep.subr.bf16.mxu0 0
        %2345 = vmatpush1.bf16.msra.mxu0 0
        %2346 = vmatprep.subr.bf16.mxu0 0
        %2347 = vmatpush1.bf16.msra.mxu0 0
        %2348 = vmatprep.subr.bf16.mxu0 0
        %2349 = vmatpush1.bf16.msra.mxu0 0
        %2350 = vmatprep.subr.bf16.mxu0 0
        %2351 = vmatpush1.bf16.msra.mxu0 0
        %2352 = vmatprep.subr.bf16.mxu0 0
        %2353 = vmatpush1.bf16.msra.mxu0 0
        %2354 = vmatprep.subr.bf16.mxu0 0
        %2355 = vmatpush1.bf16.msra.mxu0 0
        %2356 = vmatprep.subr.bf16.mxu0 0
        %2357 = vmatpush1.bf16.msra.mxu0 0
        %2358 = vmatprep.subr.bf16.mxu0 0
        %2359 = vmatpush1.bf16.msra.mxu0 0
        %2360 = vmatprep.subr.bf16.mxu0 0
        %2361 = vmatpush1.bf16.msra.mxu0 0
        %2362 = vmatprep.subr.bf16.mxu0 0
        %2363 = vmatpush1.bf16.msra.mxu0 0
        %2364 = vmatprep.subr.bf16.mxu0 0
        %2365 = vmatpush1.bf16.msra.mxu0 0
        %2366 = vmatprep.mubr.bf16.mxu0 0
        %2367 = vmatmul.mubr.bf16.gmra.mrb[0].mxu0 %v2264
        %v2368 = vpop.f32.mrb[0].mxu0
        %v2369 = vadd.f32 0.0, %v2368
        %v2370 = vpop.f32.mrb[0].mxu0
        %v2371 = vadd.f32 0.0, %v2370
        %v2372 = vpop.f32.mrb[0].mxu0
        %v2373 = vpop.f32.mrb[0].mxu0
        %2374 = vdwg.mxu0
        %2375 = vmatprep.subr.bf16.mxu0 %v2282
        %2376 = vmatpush1.bf16.msra.mxu0 %v2279
        %2377 = vmatprep.subr.bf16.mxu0 0
        %2378 = vmatpush1.bf16.msra.mxu0 0
        %2379 = vmatprep.subr.bf16.mxu0 0
        %2380 = vmatpush1.bf16.msra.mxu0 0
        %2381 = vmatprep.subr.bf16.mxu0 0
        %2382 = vmatpush1.bf16.msra.mxu0 0
        %2383 = vmatprep.subr.bf16.mxu0 0
        %2384 = vmatpush1.bf16.msra.mxu0 0
        %2385 = vmatprep.subr.bf16.mxu0 0
        %2386 = vmatpush1.bf16.msra.mxu0 0
        %2387 = vmatprep.subr.bf16.mxu0 0
        %2388 = vmatpush1.bf16.msra.mxu0 0
        %2389 = vmatprep.subr.bf16.mxu0 0
        %2390 = vmatpush1.bf16.msra.mxu0 0
        %2391 = vmatprep.subr.bf16.mxu0 0
        %2392 = vmatpush1.bf16.msra.mxu0 0
        %2393 = vmatprep.subr.bf16.mxu0 0
        %2394 = vmatpush1.bf16.msra.mxu0 0
        %2395 = vmatprep.subr.bf16.mxu0 0
        %2396 = vmatpush1.bf16.msra.mxu0 0
        %2397 = vmatprep.subr.bf16.mxu0 0
        %2398 = vmatpush1.bf16.msra.mxu0 0
        %2399 = vmatprep.subr.bf16.mxu0 0
        %2400 = vmatpush1.bf16.msra.mxu0 0
        %2401 = vmatprep.subr.bf16.mxu0 0
        %2402 = vmatpush1.bf16.msra.mxu0 0
        %2403 = vmatprep.subr.bf16.mxu0 0
        %2404 = vmatpush1.bf16.msra.mxu0 0
        %2405 = vmatprep.subr.bf16.mxu0 0
        %2406 = vmatpush1.bf16.msra.mxu0 0
        %2407 = vmatprep.mubr.bf16.mxu0 0
        %2408 = vmatmul.mubr.bf16.gmra.mrb[0].mxu0 %v2264
        %v2409 = vpop.f32.mrb[0].mxu0
        %v2410 = vadd.f32 0.0, %v2409
        %v2411 = vpop.f32.mrb[0].mxu0
        %v2412 = vadd.f32 0.0, %v2411
        %v2413 = vpop.f32.mrb[0].mxu0
        %v2414 = vpop.f32.mrb[0].mxu0
        %2415 = vdwg.mxu0
        %2416 = vmatprep.subr.bf16.mxu0 %v2288
        %2417 = vmatpush1.bf16.msra.mxu0 %v2285
        %2418 = vmatprep.subr.bf16.mxu0 0
        %2419 = vmatpush1.bf16.msra.mxu0 0
        %2420 = vmatprep.subr.bf16.mxu0 0
        %2421 = vmatpush1.bf16.msra.mxu0 0
        %2422 = vmatprep.subr.bf16.mxu0 0
        %2423 = vmatpush1.bf16.msra.mxu0 0
        %2424 = vmatprep.subr.bf16.mxu0 0
        %2425 = vmatpush1.bf16.msra.mxu0 0
        %2426 = vmatprep.subr.bf16.mxu0 0
        %2427 = vmatpush1.bf16.msra.mxu0 0
        %2428 = vmatprep.subr.bf16.mxu0 0
        %2429 = vmatpush1.bf16.msra.mxu0 0
        %2430 = vmatprep.subr.bf16.mxu0 0
        %2431 = vmatpush1.bf16.msra.mxu0 0
        %2432 = vmatprep.subr.bf16.mxu0 0
        %2433 = vmatpush1.bf16.msra.mxu0 0
        %2434 = vmatprep.subr.bf16.mxu0 0
        %2435 = vmatpush1.bf16.msra.mxu0 0
        %2436 = vmatprep.subr.bf16.mxu0 0
        %2437 = vmatpush1.bf16.msra.mxu0 0
        %2438 = vmatprep.subr.bf16.mxu0 0
        %2439 = vmatpush1.bf16.msra.mxu0 0
        %2440 = vmatprep.subr.bf16.mxu0 0
        %2441 = vmatpush1.bf16.msra.mxu0 0
        %2442 = vmatprep.subr.bf16.mxu0 0
        %2443 = vmatpush1.bf16.msra.mxu0 0
        %2444 = vmatprep.subr.bf16.mxu0 0
        %2445 = vmatpush1.bf16.msra.mxu0 0
        %2446 = vmatprep.subr.bf16.mxu0 0
        %2447 = vmatpush1.bf16.msra.mxu0 0
        %2448 = vmatprep.mubr.bf16.mxu0 0
        %2449 = vmatmul.mubr.bf16.gmra.mrb[0].mxu0 %v2264
        %v2450 = vpop.f32.mrb[0].mxu0
        %v2451 = vadd.f32 0.0, %v2450
        %v2452 = vpop.f32.mrb[0].mxu0
        %v2453 = vadd.f32 0.0, %v2452
        %v2454 = vpop.f32.mrb[0].mxu0
        %v2455 = vpop.f32.mrb[0].mxu0
        %2456 = vdwg.mxu0
        %2457 = vmatprep.subr.bf16.mxu0 0
        %2458 = vmatpush1.bf16.msra.mxu0 %v2291
        %2459 = vmatprep.subr.bf16.mxu0 0
        %2460 = vmatpush1.bf16.msra.mxu0 0
        %2461 = vmatprep.subr.bf16.mxu0 0
        %2462 = vmatpush1.bf16.msra.mxu0 0
        %2463 = vmatprep.subr.bf16.mxu0 0
        %2464 = vmatpush1.bf16.msra.mxu0 0
        %2465 = vmatprep.subr.bf16.mxu0 0
        %2466 = vmatpush1.bf16.msra.mxu0 0
        %2467 = vmatprep.subr.bf16.mxu0 0
        %2468 = vmatpush1.bf16.msra.mxu0 0
        %2469 = vmatprep.subr.bf16.mxu0 0
        %2470 = vmatpush1.bf16.msra.mxu0 0
        %2471 = vmatprep.subr.bf16.mxu0 0
        %2472 = vmatpush1.bf16.msra.mxu0 0
        %2473 = vmatprep.subr.bf16.mxu0 0
        %2474 = vmatpush1.bf16.msra.mxu0 0
        %2475 = vmatprep.subr.bf16.mxu0 0
        %2476 = vmatpush1.bf16.msra.mxu0 0
        %2477 = vmatprep.subr.bf16.mxu0 0
        %2478 = vmatpush1.bf16.msra.mxu0 0
        %2479 = vmatprep.subr.bf16.mxu0 0
        %2480 = vmatpush1.bf16.msra.mxu0 0
        %2481 = vmatprep.subr.bf16.mxu0 0
        %2482 = vmatpush1.bf16.msra.mxu0 0
        %2483 = vmatprep.subr.bf16.mxu0 0
        %2484 = vmatpush1.bf16.msra.mxu0 0
        %2485 = vmatprep.subr.bf16.mxu0 0
        %2486 = vmatpush1.bf16.msra.mxu0 0
        %2487 = vmatprep.subr.bf16.mxu0 0
        %2488 = vmatpush1.bf16.msra.mxu0 0
        %2489 = vmatprep.mubr.bf16.mxu0 0
        %2490 = vmatmul.mubr.bf16.gmra.mrb[0].mxu0 %v2264
        %v2491 = vpop.f32.mrb[0].mxu0
        %v2492 = vadd.f32 0.0, %v2491
        %v2493 = vpop.f32.mrb[0].mxu0
        %v2494 = vpop.f32.mrb[0].mxu0
        %v2495 = vpop.f32.mrb[0].mxu0
        %2496 = vdwg.mxu0
        %v2497 = vadd.f32 %v2222, %v2328
        %v2498 = vadd.f32 %v2223, %v2330
        %v2499 = vadd.f32 %v2224, %v2369
        %v2500 = vadd.f32 %v2225, %v2371
        %v2501 = vadd.f32 %v2226, %v2410
        %v2502 = vadd.f32 %v2227, %v2412
        %v2503 = vadd.f32 %v2228, %v2451
        %v2504 = vadd.f32 %v2229, %v2453
        %v2505 = vadd.f32 %v2230, %v2492
        %2506 = vrot.lane.b32.xlu0 %v1443, 96
        %v2507 = vpop.permute.xlu0 %2506
        %2508 = vrot.lane.b32.xlu0 %v1431, 91
        %v2509 = vpop.permute.xlu0 %2508
        %2510 = vrot.lane.b32.xlu0 %v1432, 91
        %v2511 = vpop.permute.xlu0 %2510
        %2512 = vrot.lane.b32.xlu0 %v1433, 91
        %v2513 = vpop.permute.xlu0 %2512
        %2514 = vrot.lane.b32.xlu0 %v1434, 91
        %v2515 = vpop.permute.xlu0 %2514
        %2516 = vrot.lane.b32.xlu0 %v1435, 91
        %v2517 = vpop.permute.xlu0 %2516
        %2518 = vrot.lane.b32.xlu0 %v1436, 91
        %v2519 = vpop.permute.xlu0 %2518
        %2520 = vrot.lane.b32.xlu0 %v1437, 91
        %v2521 = vpop.permute.xlu0 %2520
        %2522 = vrot.lane.b32.xlu0 %v1438, 91
        %v2523 = vpop.permute.xlu0 %2522
        %2524 = vrot.lane.b32.xlu0 %v1439, 91
        %v2525 = vpop.permute.xlu0 %2524
        %2526 = vrot.lane.b32.xlu0 %v1440, 91
        %v2527 = vpop.permute.xlu0 %2526
        %vm2528 = vcmask 744448
        %v2529 = vsel %vm2528, %v2509, %v2511
        %v2530 = vsel %vm2528, %v2511, %v2513
        %v2531 = vsel %vm2528, %v2513, %v2515
        %v2532 = vsel %vm2528, %v2515, %v2517
        %v2533 = vsel %vm2528, %v2517, %v2519
        %v2534 = vsel %vm2528, %v2519, %v2521
        %v2535 = vsel %vm2528, %v2521, %v2523
        %v2536 = vsel %vm2528, %v2523, %v2525
        %v2537 = vsel %vm2528, %v2525, %v2527
        %v2539 = vsel %vm1486, %v2507, 0
        %v2542 = vsel %vm1490, %v2529, 0
        %v2545 = vsel %vm1490, %v2530, 0
        %v2548 = vsel %vm1490, %v2531, 0
        %v2551 = vsel %vm1490, %v2532, 0
        %v2554 = vsel %vm1490, %v2533, 0
        %v2557 = vsel %vm1490, %v2534, 0
        %v2560 = vsel %vm1490, %v2535, 0
        %v2563 = vsel %vm1490, %v2536, 0
        %v2566 = vsel %vm1490, %v2537, 0
        %2568 = vmatprep.subr.bf16.mxu0 %v2545
        %2569 = vmatpush1.bf16.msra.mxu0 %v2542
        %2570 = vmatprep.subr.bf16.mxu0 0
        %2571 = vmatpush1.bf16.msra.mxu0 0
        %2572 = vmatprep.subr.bf16.mxu0 0
        %2573 = vmatpush1.bf16.msra.mxu0 0
        %2574 = vmatprep.subr.bf16.mxu0 0
        %2575 = vmatpush1.bf16.msra.mxu0 0
        %2576 = vmatprep.subr.bf16.mxu0 0
        %2577 = vmatpush1.bf16.msra.mxu0 0
        %2578 = vmatprep.subr.bf16.mxu0 0
        %2579 = vmatpush1.bf16.msra.mxu0 0
        %2580 = vmatprep.subr.bf16.mxu0 0
        %2581 = vmatpush1.bf16.msra.mxu0 0
        %2582 = vmatprep.subr.bf16.mxu0 0
        %2583 = vmatpush1.bf16.msra.mxu0 0
        %2584 = vmatprep.subr.bf16.mxu0 0
        %2585 = vmatpush1.bf16.msra.mxu0 0
        %2586 = vmatprep.subr.bf16.mxu0 0
        %2587 = vmatpush1.bf16.msra.mxu0 0
        %2588 = vmatprep.subr.bf16.mxu0 0
        %2589 = vmatpush1.bf16.msra.mxu0 0
        %2590 = vmatprep.subr.bf16.mxu0 0
        %2591 = vmatpush1.bf16.msra.mxu0 0
        %2592 = vmatprep.subr.bf16.mxu0 0
        %2593 = vmatpush1.bf16.msra.mxu0 0
        %2594 = vmatprep.subr.bf16.mxu0 0
        %2595 = vmatpush1.bf16.msra.mxu0 0
        %2596 = vmatprep.subr.bf16.mxu0 0
        %2597 = vmatpush1.bf16.msra.mxu0 0
        %2598 = vmatprep.subr.bf16.mxu0 0
        %2599 = vmatpush1.bf16.msra.mxu0 0
        %2600 = vmatprep.mubr.bf16.mxu0 0
        %2601 = vmatmul.mubr.bf16.gmra.mrb[0].mxu0 %v2539
        %v2602 = vpop.f32.mrb[0].mxu0
        %v2603 = vadd.f32 0.0, %v2602
        %v2604 = vpop.f32.mrb[0].mxu0
        %v2605 = vadd.f32 0.0, %v2604
        %v2606 = vpop.f32.mrb[0].mxu0
        %v2607 = vpop.f32.mrb[0].mxu0
        %2608 = vdwg.mxu0
        %2609 = vmatprep.subr.bf16.mxu0 %v2551
        %2610 = vmatpush1.bf16.msra.mxu0 %v2548
        %2611 = vmatprep.subr.bf16.mxu0 0
        %2612 = vmatpush1.bf16.msra.mxu0 0
        %2613 = vmatprep.subr.bf16.mxu0 0
        %2614 = vmatpush1.bf16.msra.mxu0 0
        %2615 = vmatprep.subr.bf16.mxu0 0
        %2616 = vmatpush1.bf16.msra.mxu0 0
        %2617 = vmatprep.subr.bf16.mxu0 0
        %2618 = vmatpush1.bf16.msra.mxu0 0
        %2619 = vmatprep.subr.bf16.mxu0 0
        %2620 = vmatpush1.bf16.msra.mxu0 0
        %2621 = vmatprep.subr.bf16.mxu0 0
        %2622 = vmatpush1.bf16.msra.mxu0 0
        %2623 = vmatprep.subr.bf16.mxu0 0
        %2624 = vmatpush1.bf16.msra.mxu0 0
        %2625 = vmatprep.subr.bf16.mxu0 0
        %2626 = vmatpush1.bf16.msra.mxu0 0
        %2627 = vmatprep.subr.bf16.mxu0 0
        %2628 = vmatpush1.bf16.msra.mxu0 0
        %2629 = vmatprep.subr.bf16.mxu0 0
        %2630 = vmatpush1.bf16.msra.mxu0 0
        %2631 = vmatprep.subr.bf16.mxu0 0
        %2632 = vmatpush1.bf16.msra.mxu0 0
        %2633 = vmatprep.subr.bf16.mxu0 0
        %2634 = vmatpush1.bf16.msra.mxu0 0
        %2635 = vmatprep.subr.bf16.mxu0 0
        %2636 = vmatpush1.bf16.msra.mxu0 0
        %2637 = vmatprep.subr.bf16.mxu0 0
        %2638 = vmatpush1.bf16.msra.mxu0 0
        %2639 = vmatprep.subr.bf16.mxu0 0
        %2640 = vmatpush1.bf16.msra.mxu0 0
        %2641 = vmatprep.mubr.bf16.mxu0 0
        %2642 = vmatmul.mubr.bf16.gmra.mrb[0].mxu0 %v2539
        %v2643 = vpop.f32.mrb[0].mxu0
        %v2644 = vadd.f32 0.0, %v2643
        %v2645 = vpop.f32.mrb[0].mxu0
        %v2646 = vadd.f32 0.0, %v2645
        %v2647 = vpop.f32.mrb[0].mxu0
        %v2648 = vpop.f32.mrb[0].mxu0
        %2649 = vdwg.mxu0
        %2650 = vmatprep.subr.bf16.mxu0 %v2557
        %2651 = vmatpush1.bf16.msra.mxu0 %v2554
        %2652 = vmatprep.subr.bf16.mxu0 0
        %2653 = vmatpush1.bf16.msra.mxu0 0
        %2654 = vmatprep.subr.bf16.mxu0 0
        %2655 = vmatpush1.bf16.msra.mxu0 0
        %2656 = vmatprep.subr.bf16.mxu0 0
        %2657 = vmatpush1.bf16.msra.mxu0 0
        %2658 = vmatprep.subr.bf16.mxu0 0
        %2659 = vmatpush1.bf16.msra.mxu0 0
        %2660 = vmatprep.subr.bf16.mxu0 0
        %2661 = vmatpush1.bf16.msra.mxu0 0
        %2662 = vmatprep.subr.bf16.mxu0 0
        %2663 = vmatpush1.bf16.msra.mxu0 0
        %2664 = vmatprep.subr.bf16.mxu0 0
        %2665 = vmatpush1.bf16.msra.mxu0 0
        %2666 = vmatprep.subr.bf16.mxu0 0
        %2667 = vmatpush1.bf16.msra.mxu0 0
        %2668 = vmatprep.subr.bf16.mxu0 0
        %2669 = vmatpush1.bf16.msra.mxu0 0
        %2670 = vmatprep.subr.bf16.mxu0 0
        %2671 = vmatpush1.bf16.msra.mxu0 0
        %2672 = vmatprep.subr.bf16.mxu0 0
        %2673 = vmatpush1.bf16.msra.mxu0 0
        %2674 = vmatprep.subr.bf16.mxu0 0
        %2675 = vmatpush1.bf16.msra.mxu0 0
        %2676 = vmatprep.subr.bf16.mxu0 0
        %2677 = vmatpush1.bf16.msra.mxu0 0
        %2678 = vmatprep.subr.bf16.mxu0 0
        %2679 = vmatpush1.bf16.msra.mxu0 0
        %2680 = vmatprep.subr.bf16.mxu0 0
        %2681 = vmatpush1.bf16.msra.mxu0 0
        %2682 = vmatprep.mubr.bf16.mxu0 0
        %2683 = vmatmul.mubr.bf16.gmra.mrb[0].mxu0 %v2539
        %v2684 = vpop.f32.mrb[0].mxu0
        %v2685 = vadd.f32 0.0, %v2684
        %v2686 = vpop.f32.mrb[0].mxu0
        %v2687 = vadd.f32 0.0, %v2686
        %v2688 = vpop.f32.mrb[0].mxu0
        %v2689 = vpop.f32.mrb[0].mxu0
        %2690 = vdwg.mxu0
        %2691 = vmatprep.subr.bf16.mxu0 %v2563
        %2692 = vmatpush1.bf16.msra.mxu0 %v2560
        %2693 = vmatprep.subr.bf16.mxu0 0
        %2694 = vmatpush1.bf16.msra.mxu0 0
        %2695 = vmatprep.subr.bf16.mxu0 0
        %2696 = vmatpush1.bf16.msra.mxu0 0
        %2697 = vmatprep.subr.bf16.mxu0 0
        %2698 = vmatpush1.bf16.msra.mxu0 0
        %2699 = vmatprep.subr.bf16.mxu0 0
        %2700 = vmatpush1.bf16.msra.mxu0 0
        %2701 = vmatprep.subr.bf16.mxu0 0
        %2702 = vmatpush1.bf16.msra.mxu0 0
        %2703 = vmatprep.subr.bf16.mxu0 0
        %2704 = vmatpush1.bf16.msra.mxu0 0
        %2705 = vmatprep.subr.bf16.mxu0 0
        %2706 = vmatpush1.bf16.msra.mxu0 0
        %2707 = vmatprep.subr.bf16.mxu0 0
        %2708 = vmatpush1.bf16.msra.mxu0 0
        %2709 = vmatprep.subr.bf16.mxu0 0
        %2710 = vmatpush1.bf16.msra.mxu0 0
        %2711 = vmatprep.subr.bf16.mxu0 0
        %2712 = vmatpush1.bf16.msra.mxu0 0
        %2713 = vmatprep.subr.bf16.mxu0 0
        %2714 = vmatpush1.bf16.msra.mxu0 0
        %2715 = vmatprep.subr.bf16.mxu0 0
        %2716 = vmatpush1.bf16.msra.mxu0 0
        %2717 = vmatprep.subr.bf16.mxu0 0
        %2718 = vmatpush1.bf16.msra.mxu0 0
        %2719 = vmatprep.subr.bf16.mxu0 0
        %2720 = vmatpush1.bf16.msra.mxu0 0
        %2721 = vmatprep.subr.bf16.mxu0 0
        %2722 = vmatpush1.bf16.msra.mxu0 0
        %2723 = vmatprep.mubr.bf16.mxu0 0
        %2724 = vmatmul.mubr.bf16.gmra.mrb[0].mxu0 %v2539
        %v2725 = vpop.f32.mrb[0].mxu0
        %v2726 = vadd.f32 0.0, %v2725
        %v2727 = vpop.f32.mrb[0].mxu0
        %v2728 = vadd.f32 0.0, %v2727
        %v2729 = vpop.f32.mrb[0].mxu0
        %v2730 = vpop.f32.mrb[0].mxu0
        %2731 = vdwg.mxu0
        %2732 = vmatprep.subr.bf16.mxu0 0
        %2733 = vmatpush1.bf16.msra.mxu0 %v2566
        %2734 = vmatprep.subr.bf16.mxu0 0
        %2735 = vmatpush1.bf16.msra.mxu0 0
        %2736 = vmatprep.subr.bf16.mxu0 0
        %2737 = vmatpush1.bf16.msra.mxu0 0
        %2738 = vmatprep.subr.bf16.mxu0 0
        %2739 = vmatpush1.bf16.msra.mxu0 0
        %2740 = vmatprep.subr.bf16.mxu0 0
        %2741 = vmatpush1.bf16.msra.mxu0 0
        %2742 = vmatprep.subr.bf16.mxu0 0
        %2743 = vmatpush1.bf16.msra.mxu0 0
        %2744 = vmatprep.subr.bf16.mxu0 0
        %2745 = vmatpush1.bf16.msra.mxu0 0
        %2746 = vmatprep.subr.bf16.mxu0 0
        %2747 = vmatpush1.bf16.msra.mxu0 0
        %2748 = vmatprep.subr.bf16.mxu0 0
        %2749 = vmatpush1.bf16.msra.mxu0 0
        %2750 = vmatprep.subr.bf16.mxu0 0
        %2751 = vmatpush1.bf16.msra.mxu0 0
        %2752 = vmatprep.subr.bf16.mxu0 0
        %2753 = vmatpush1.bf16.msra.mxu0 0
        %2754 = vmatprep.subr.bf16.mxu0 0
        %2755 = vmatpush1.bf16.msra.mxu0 0
        %2756 = vmatprep.subr.bf16.mxu0 0
        %2757 = vmatpush1.bf16.msra.mxu0 0
        %2758 = vmatprep.subr.bf16.mxu0 0
        %2759 = vmatpush1.bf16.msra.mxu0 0
        %2760 = vmatprep.subr.bf16.mxu0 0
        %2761 = vmatpush1.bf16.msra.mxu0 0
        %2762 = vmatprep.subr.bf16.mxu0 0
        %2763 = vmatpush1.bf16.msra.mxu0 0
        %2764 = vmatprep.mubr.bf16.mxu0 0
        %2765 = vmatmul.mubr.bf16.gmra.mrb[0].mxu0 %v2539
        %v2766 = vpop.f32.mrb[0].mxu0
        %v2767 = vadd.f32 0.0, %v2766
        %v2768 = vpop.f32.mrb[0].mxu0
        %v2769 = vpop.f32.mrb[0].mxu0
        %v2770 = vpop.f32.mrb[0].mxu0
        %2771 = vdwg.mxu0
        %v2772 = vadd.f32 %v2497, %v2603
        %v2773 = vadd.f32 %v2498, %v2605
        %v2774 = vadd.f32 %v2499, %v2644
        %v2775 = vadd.f32 %v2500, %v2646
        %v2776 = vadd.f32 %v2501, %v2685
        %v2777 = vadd.f32 %v2502, %v2687
        %v2778 = vadd.f32 %v2503, %v2726
        %v2779 = vadd.f32 %v2504, %v2728
        %v2780 = vadd.f32 %v2505, %v2767
        %2781 = vrot.lane.b32.xlu0 %v1443, 88
        %v2782 = vpop.permute.xlu0 %2781
        %2783 = vrot.lane.b32.xlu0 %v1431, 90
        %v2784 = vpop.permute.xlu0 %2783
        %2785 = vrot.lane.b32.xlu0 %v1432, 90
        %v2786 = vpop.permute.xlu0 %2785
        %2787 = vrot.lane.b32.xlu0 %v1433, 90
        %v2788 = vpop.permute.xlu0 %2787
        %2789 = vrot.lane.b32.xlu0 %v1434, 90
        %v2790 = vpop.permute.xlu0 %2789
        %2791 = vrot.lane.b32.xlu0 %v1435, 90
        %v2792 = vpop.permute.xlu0 %2791
        %2793 = vrot.lane.b32.xlu0 %v1436, 90
        %v2794 = vpop.permute.xlu0 %2793
        %2795 = vrot.lane.b32.xlu0 %v1437, 90
        %v2796 = vpop.permute.xlu0 %2795
        %2797 = vrot.lane.b32.xlu0 %v1438, 90
        %v2798 = vpop.permute.xlu0 %2797
        %2799 = vrot.lane.b32.xlu0 %v1439, 90
        %v2800 = vpop.permute.xlu0 %2799
        %2801 = vrot.lane.b32.xlu0 %v1440, 90
        %v2802 = vpop.permute.xlu0 %2801
        %vm2803 = vcmask 736256
        %v2804 = vsel %vm2803, %v2784, %v2786
        %v2805 = vsel %vm2803, %v2786, %v2788
        %v2806 = vsel %vm2803, %v2788, %v2790
        %v2807 = vsel %vm2803, %v2790, %v2792
        %v2808 = vsel %vm2803, %v2792, %v2794
        %v2809 = vsel %vm2803, %v2794, %v2796
        %v2810 = vsel %vm2803, %v2796, %v2798
        %v2811 = vsel %vm2803, %v2798, %v2800
        %v2812 = vsel %vm2803, %v2800, %v2802
        %v2814 = vsel %vm1486, %v2782, 0
        %v2817 = vsel %vm1490, %v2804, 0
        %v2820 = vsel %vm1490, %v2805, 0
        %v2823 = vsel %vm1490, %v2806, 0
        %v2826 = vsel %vm1490, %v2807, 0
        %v2829 = vsel %vm1490, %v2808, 0
        %v2832 = vsel %vm1490, %v2809, 0
        %v2835 = vsel %vm1490, %v2810, 0
        %v2838 = vsel %vm1490, %v2811, 0
        %v2841 = vsel %vm1490, %v2812, 0
        %2843 = vmatprep.subr.bf16.mxu0 %v2820
        %2844 = vmatpush1.bf16.msra.mxu0 %v2817
        %2845 = vmatprep.subr.bf16.mxu0 0
        %2846 = vmatpush1.bf16.msra.mxu0 0
        %2847 = vmatprep.subr.bf16.mxu0 0
        %2848 = vmatpush1.bf16.msra.mxu0 0
        %2849 = vmatprep.subr.bf16.mxu0 0
        %2850 = vmatpush1.bf16.msra.mxu0 0
        %2851 = vmatprep.subr.bf16.mxu0 0
        %2852 = vmatpush1.bf16.msra.mxu0 0
        %2853 = vmatprep.subr.bf16.mxu0 0
        %2854 = vmatpush1.bf16.msra.mxu0 0
        %2855 = vmatprep.subr.bf16.mxu0 0
        %2856 = vmatpush1.bf16.msra.mxu0 0
        %2857 = vmatprep.subr.bf16.mxu0 0
        %2858 = vmatpush1.bf16.msra.mxu0 0
        %2859 = vmatprep.subr.bf16.mxu0 0
        %2860 = vmatpush1.bf16.msra.mxu0 0
        %2861 = vmatprep.subr.bf16.mxu0 0
        %2862 = vmatpush1.bf16.msra.mxu0 0
        %2863 = vmatprep.subr.bf16.mxu0 0
        %2864 = vmatpush1.bf16.msra.mxu0 0
        %2865 = vmatprep.subr.bf16.mxu0 0
        %2866 = vmatpush1.bf16.msra.mxu0 0
        %2867 = vmatprep.subr.bf16.mxu0 0
        %2868 = vmatpush1.bf16.msra.mxu0 0
        %2869 = vmatprep.subr.bf16.mxu0 0
        %2870 = vmatpush1.bf16.msra.mxu0 0
        %2871 = vmatprep.subr.bf16.mxu0 0
        %2872 = vmatpush1.bf16.msra.mxu0 0
        %2873 = vmatprep.subr.bf16.mxu0 0
        %2874 = vmatpush1.bf16.msra.mxu0 0
        %2875 = vmatprep.mubr.bf16.mxu0 0
        %2876 = vmatmul.mubr.bf16.gmra.mrb[0].mxu0 %v2814
        %v2877 = vpop.f32.mrb[0].mxu0
        %v2878 = vadd.f32 0.0, %v2877
        %v2879 = vpop.f32.mrb[0].mxu0
        %v2880 = vadd.f32 0.0, %v2879
        %v2881 = vpop.f32.mrb[0].mxu0
        %v2882 = vpop.f32.mrb[0].mxu0
        %2883 = vdwg.mxu0
        %2884 = vmatprep.subr.bf16.mxu0 %v2826
        %2885 = vmatpush1.bf16.msra.mxu0 %v2823
        %2886 = vmatprep.subr.bf16.mxu0 0
        %2887 = vmatpush1.bf16.msra.mxu0 0
        %2888 = vmatprep.subr.bf16.mxu0 0
        %2889 = vmatpush1.bf16.msra.mxu0 0
        %2890 = vmatprep.subr.bf16.mxu0 0
        %2891 = vmatpush1.bf16.msra.mxu0 0
        %2892 = vmatprep.subr.bf16.mxu0 0
        %2893 = vmatpush1.bf16.msra.mxu0 0
        %2894 = vmatprep.subr.bf16.mxu0 0
        %2895 = vmatpush1.bf16.msra.mxu0 0
        %2896 = vmatprep.subr.bf16.mxu0 0
        %2897 = vmatpush1.bf16.msra.mxu0 0
        %2898 = vmatprep.subr.bf16.mxu0 0
        %2899 = vmatpush1.bf16.msra.mxu0 0
        %2900 = vmatprep.subr.bf16.mxu0 0
        %2901 = vmatpush1.bf16.msra.mxu0 0
        %2902 = vmatprep.subr.bf16.mxu0 0
        %2903 = vmatpush1.bf16.msra.mxu0 0
        %2904 = vmatprep.subr.bf16.mxu0 0
        %2905 = vmatpush1.bf16.msra.mxu0 0
        %2906 = vmatprep.subr.bf16.mxu0 0
        %2907 = vmatpush1.bf16.msra.mxu0 0
        %2908 = vmatprep.subr.bf16.mxu0 0
        %2909 = vmatpush1.bf16.msra.mxu0 0
        %2910 = vmatprep.subr.bf16.mxu0 0
        %2911 = vmatpush1.bf16.msra.mxu0 0
        %2912 = vmatprep.subr.bf16.mxu0 0
        %2913 = vmatpush1.bf16.msra.mxu0 0
        %2914 = vmatprep.subr.bf16.mxu0 0
        %2915 = vmatpush1.bf16.msra.mxu0 0
        %2916 = vmatprep.mubr.bf16.mxu0 0
        %2917 = vmatmul.mubr.bf16.gmra.mrb[0].mxu0 %v2814
        %v2918 = vpop.f32.mrb[0].mxu0
        %v2919 = vadd.f32 0.0, %v2918
        %v2920 = vpop.f32.mrb[0].mxu0
        %v2921 = vadd.f32 0.0, %v2920
        %v2922 = vpop.f32.mrb[0].mxu0
        %v2923 = vpop.f32.mrb[0].mxu0
        %2924 = vdwg.mxu0
        %2925 = vmatprep.subr.bf16.mxu0 %v2832
        %2926 = vmatpush1.bf16.msra.mxu0 %v2829
        %2927 = vmatprep.subr.bf16.mxu0 0
        %2928 = vmatpush1.bf16.msra.mxu0 0
        %2929 = vmatprep.subr.bf16.mxu0 0
        %2930 = vmatpush1.bf16.msra.mxu0 0
        %2931 = vmatprep.subr.bf16.mxu0 0
        %2932 = vmatpush1.bf16.msra.mxu0 0
        %2933 = vmatprep.subr.bf16.mxu0 0
        %2934 = vmatpush1.bf16.msra.mxu0 0
        %2935 = vmatprep.subr.bf16.mxu0 0
        %2936 = vmatpush1.bf16.msra.mxu0 0
        %2937 = vmatprep.subr.bf16.mxu0 0
        %2938 = vmatpush1.bf16.msra.mxu0 0
        %2939 = vmatprep.subr.bf16.mxu0 0
        %2940 = vmatpush1.bf16.msra.mxu0 0
        %2941 = vmatprep.subr.bf16.mxu0 0
        %2942 = vmatpush1.bf16.msra.mxu0 0
        %2943 = vmatprep.subr.bf16.mxu0 0
        %2944 = vmatpush1.bf16.msra.mxu0 0
        %2945 = vmatprep.subr.bf16.mxu0 0
        %2946 = vmatpush1.bf16.msra.mxu0 0
        %2947 = vmatprep.subr.bf16.mxu0 0
        %2948 = vmatpush1.bf16.msra.mxu0 0
        %2949 = vmatprep.subr.bf16.mxu0 0
        %2950 = vmatpush1.bf16.msra.mxu0 0
        %2951 = vmatprep.subr.bf16.mxu0 0
        %2952 = vmatpush1.bf16.msra.mxu0 0
        %2953 = vmatprep.subr.bf16.mxu0 0
        %2954 = vmatpush1.bf16.msra.mxu0 0
        %2955 = vmatprep.subr.bf16.mxu0 0
        %2956 = vmatpush1.bf16.msra.mxu0 0
        %2957 = vmatprep.mubr.bf16.mxu0 0
        %2958 = vmatmul.mubr.bf16.gmra.mrb[0].mxu0 %v2814
        %v2959 = vpop.f32.mrb[0].mxu0
        %v2960 = vadd.f32 0.0, %v2959
        %v2961 = vpop.f32.mrb[0].mxu0
        %v2962 = vadd.f32 0.0, %v2961
        %v2963 = vpop.f32.mrb[0].mxu0
        %v2964 = vpop.f32.mrb[0].mxu0
        %2965 = vdwg.mxu0
        %2966 = vmatprep.subr.bf16.mxu0 %v2838
        %2967 = vmatpush1.bf16.msra.mxu0 %v2835
        %2968 = vmatprep.subr.bf16.mxu0 0
        %2969 = vmatpush1.bf16.msra.mxu0 0
        %2970 = vmatprep.subr.bf16.mxu0 0
        %2971 = vmatpush1.bf16.msra.mxu0 0
        %2972 = vmatprep.subr.bf16.mxu0 0
        %2973 = vmatpush1.bf16.msra.mxu0 0
        %2974 = vmatprep.subr.bf16.mxu0 0
        %2975 = vmatpush1.bf16.msra.mxu0 0
        %2976 = vmatprep.subr.bf16.mxu0 0
        %2977 = vmatpush1.bf16.msra.mxu0 0
        %2978 = vmatprep.subr.bf16.mxu0 0
        %2979 = vmatpush1.bf16.msra.mxu0 0
        %2980 = vmatprep.subr.bf16.mxu0 0
        %2981 = vmatpush1.bf16.msra.mxu0 0
        %2982 = vmatprep.subr.bf16.mxu0 0
        %2983 = vmatpush1.bf16.msra.mxu0 0
        %2984 = vmatprep.subr.bf16.mxu0 0
        %2985 = vmatpush1.bf16.msra.mxu0 0
        %2986 = vmatprep.subr.bf16.mxu0 0
        %2987 = vmatpush1.bf16.msra.mxu0 0
        %2988 = vmatprep.subr.bf16.mxu0 0
        %2989 = vmatpush1.bf16.msra.mxu0 0
        %2990 = vmatprep.subr.bf16.mxu0 0
        %2991 = vmatpush1.bf16.msra.mxu0 0
        %2992 = vmatprep.subr.bf16.mxu0 0
        %2993 = vmatpush1.bf16.msra.mxu0 0
        %2994 = vmatprep.subr.bf16.mxu0 0
        %2995 = vmatpush1.bf16.msra.mxu0 0
        %2996 = vmatprep.subr.bf16.mxu0 0
        %2997 = vmatpush1.bf16.msra.mxu0 0
        %2998 = vmatprep.mubr.bf16.mxu0 0
        %2999 = vmatmul.mubr.bf16.gmra.mrb[0].mxu0 %v2814
        %v3000 = vpop.f32.mrb[0].mxu0
        %v3001 = vadd.f32 0.0, %v3000
        %v3002 = vpop.f32.mrb[0].mxu0
        %v3003 = vadd.f32 0.0, %v3002
        %v3004 = vpop.f32.mrb[0].mxu0
        %v3005 = vpop.f32.mrb[0].mxu0
        %3006 = vdwg.mxu0
        %3007 = vmatprep.subr.bf16.mxu0 0
        %3008 = vmatpush1.bf16.msra.mxu0 %v2841
        %3009 = vmatprep.subr.bf16.mxu0 0
        %3010 = vmatpush1.bf16.msra.mxu0 0
        %3011 = vmatprep.subr.bf16.mxu0 0
        %3012 = vmatpush1.bf16.msra.mxu0 0
        %3013 = vmatprep.subr.bf16.mxu0 0
        %3014 = vmatpush1.bf16.msra.mxu0 0
        %3015 = vmatprep.subr.bf16.mxu0 0
        %3016 = vmatpush1.bf16.msra.mxu0 0
        %3017 = vmatprep.subr.bf16.mxu0 0
        %3018 = vmatpush1.bf16.msra.mxu0 0
        %3019 = vmatprep.subr.bf16.mxu0 0
        %3020 = vmatpush1.bf16.msra.mxu0 0
        %3021 = vmatprep.subr.bf16.mxu0 0
        %3022 = vmatpush1.bf16.msra.mxu0 0
        %3023 = vmatprep.subr.bf16.mxu0 0
        %3024 = vmatpush1.bf16.msra.mxu0 0
        %3025 = vmatprep.subr.bf16.mxu0 0
        %3026 = vmatpush1.bf16.msra.mxu0 0
        %3027 = vmatprep.subr.bf16.mxu0 0
        %3028 = vmatpush1.bf16.msra.mxu0 0
        %3029 = vmatprep.subr.bf16.mxu0 0
        %3030 = vmatpush1.bf16.msra.mxu0 0
        %3031 = vmatprep.subr.bf16.mxu0 0
        %3032 = vmatpush1.bf16.msra.mxu0 0
        %3033 = vmatprep.subr.bf16.mxu0 0
        %3034 = vmatpush1.bf16.msra.mxu0 0
        %3035 = vmatprep.subr.bf16.mxu0 0
        %3036 = vmatpush1.bf16.msra.mxu0 0
        %3037 = vmatprep.subr.bf16.mxu0 0
        %3038 = vmatpush1.bf16.msra.mxu0 0
        %3039 = vmatprep.mubr.bf16.mxu0 0
        %3040 = vmatmul.mubr.bf16.gmra.mrb[0].mxu0 %v2814
        %v3041 = vpop.f32.mrb[0].mxu0
        %v3042 = vadd.f32 0.0, %v3041
        %v3043 = vpop.f32.mrb[0].mxu0
        %v3044 = vpop.f32.mrb[0].mxu0
        %v3045 = vpop.f32.mrb[0].mxu0
        %3046 = vdwg.mxu0
        %v3047 = vadd.f32 %v2772, %v2878
        %v3048 = vadd.f32 %v2773, %v2880
        %v3049 = vadd.f32 %v2774, %v2919
        %v3050 = vadd.f32 %v2775, %v2921
        %v3051 = vadd.f32 %v2776, %v2960
        %v3052 = vadd.f32 %v2777, %v2962
        %v3053 = vadd.f32 %v2778, %v3001
        %v3054 = vadd.f32 %v2779, %v3003
        %v3055 = vadd.f32 %v2780, %v3042
        %3056 = vrot.lane.b32.xlu0 %v1443, 80
        %v3057 = vpop.permute.xlu0 %3056
        %3058 = vrot.lane.b32.xlu0 %v1431, 56
        %v3059 = vpop.permute.xlu0 %3058
        %3060 = vrot.lane.b32.xlu0 %v1432, 56
        %v3061 = vpop.permute.xlu0 %3060
        %3062 = vrot.lane.b32.xlu0 %v1433, 56
        %v3063 = vpop.permute.xlu0 %3062
        %3064 = vrot.lane.b32.xlu0 %v1434, 56
        %v3065 = vpop.permute.xlu0 %3064
        %3066 = vrot.lane.b32.xlu0 %v1435, 56
        %v3067 = vpop.permute.xlu0 %3066
        %3068 = vrot.lane.b32.xlu0 %v1436, 56
        %v3069 = vpop.permute.xlu0 %3068
        %3070 = vrot.lane.b32.xlu0 %v1437, 56
        %v3071 = vpop.permute.xlu0 %3070
        %3072 = vrot.lane.b32.xlu0 %v1438, 56
        %v3073 = vpop.permute.xlu0 %3072
        %3074 = vrot.lane.b32.xlu0 %v1439, 56
        %v3075 = vpop.permute.xlu0 %3074
        %3076 = vrot.lane.b32.xlu0 %v1440, 56
        %v3077 = vpop.permute.xlu0 %3076
        %vm3078 = vcmask 457728
        %v3079 = vsel %vm3078, %v3059, %v3061
        %v3080 = vsel %vm3078, %v3061, %v3063
        %v3081 = vsel %vm3078, %v3063, %v3065
        %v3082 = vsel %vm3078, %v3065, %v3067
        %v3083 = vsel %vm3078, %v3067, %v3069
        %v3084 = vsel %vm3078, %v3069, %v3071
        %v3085 = vsel %vm3078, %v3071, %v3073
        %v3086 = vsel %vm3078, %v3073, %v3075
        %v3087 = vsel %vm3078, %v3075, %v3077
        %v3089 = vsel %vm1486, %v3057, 0
        %v3092 = vsel %vm1490, %v3079, 0
        %v3095 = vsel %vm1490, %v3080, 0
        %v3098 = vsel %vm1490, %v3081, 0
        %v3101 = vsel %vm1490, %v3082, 0
        %v3104 = vsel %vm1490, %v3083, 0
        %v3107 = vsel %vm1490, %v3084, 0
        %v3110 = vsel %vm1490, %v3085, 0
        %v3113 = vsel %vm1490, %v3086, 0
        %v3116 = vsel %vm1490, %v3087, 0
        %3118 = vmatprep.subr.bf16.mxu0 %v3095
        %3119 = vmatpush1.bf16.msra.mxu0 %v3092
        %3120 = vmatprep.subr.bf16.mxu0 0
        %3121 = vmatpush1.bf16.msra.mxu0 0
        %3122 = vmatprep.subr.bf16.mxu0 0
        %3123 = vmatpush1.bf16.msra.mxu0 0
        %3124 = vmatprep.subr.bf16.mxu0 0
        %3125 = vmatpush1.bf16.msra.mxu0 0
        %3126 = vmatprep.subr.bf16.mxu0 0
        %3127 = vmatpush1.bf16.msra.mxu0 0
        %3128 = vmatprep.subr.bf16.mxu0 0
        %3129 = vmatpush1.bf16.msra.mxu0 0
        %3130 = vmatprep.subr.bf16.mxu0 0
        %3131 = vmatpush1.bf16.msra.mxu0 0
        %3132 = vmatprep.subr.bf16.mxu0 0
        %3133 = vmatpush1.bf16.msra.mxu0 0
        %3134 = vmatprep.subr.bf16.mxu0 0
        %3135 = vmatpush1.bf16.msra.mxu0 0
        %3136 = vmatprep.subr.bf16.mxu0 0
        %3137 = vmatpush1.bf16.msra.mxu0 0
        %3138 = vmatprep.subr.bf16.mxu0 0
        %3139 = vmatpush1.bf16.msra.mxu0 0
        %3140 = vmatprep.subr.bf16.mxu0 0
        %3141 = vmatpush1.bf16.msra.mxu0 0
        %3142 = vmatprep.subr.bf16.mxu0 0
        %3143 = vmatpush1.bf16.msra.mxu0 0
        %3144 = vmatprep.subr.bf16.mxu0 0
        %3145 = vmatpush1.bf16.msra.mxu0 0
        %3146 = vmatprep.subr.bf16.mxu0 0
        %3147 = vmatpush1.bf16.msra.mxu0 0
        %3148 = vmatprep.subr.bf16.mxu0 0
        %3149 = vmatpush1.bf16.msra.mxu0 0
        %3150 = vmatprep.mubr.bf16.mxu0 0
        %3151 = vmatmul.mubr.bf16.gmra.mrb[0].mxu0 %v3089
        %v3152 = vpop.f32.mrb[0].mxu0
        %v3153 = vadd.f32 0.0, %v3152
        %v3154 = vpop.f32.mrb[0].mxu0
        %v3155 = vadd.f32 0.0, %v3154
        %v3156 = vpop.f32.mrb[0].mxu0
        %v3157 = vpop.f32.mrb[0].mxu0
        %3158 = vdwg.mxu0
        %3159 = vmatprep.subr.bf16.mxu0 %v3101
        %3160 = vmatpush1.bf16.msra.mxu0 %v3098
        %3161 = vmatprep.subr.bf16.mxu0 0
        %3162 = vmatpush1.bf16.msra.mxu0 0
        %3163 = vmatprep.subr.bf16.mxu0 0
        %3164 = vmatpush1.bf16.msra.mxu0 0
        %3165 = vmatprep.subr.bf16.mxu0 0
        %3166 = vmatpush1.bf16.msra.mxu0 0
        %3167 = vmatprep.subr.bf16.mxu0 0
        %3168 = vmatpush1.bf16.msra.mxu0 0
        %3169 = vmatprep.subr.bf16.mxu0 0
        %3170 = vmatpush1.bf16.msra.mxu0 0
        %3171 = vmatprep.subr.bf16.mxu0 0
        %3172 = vmatpush1.bf16.msra.mxu0 0
        %3173 = vmatprep.subr.bf16.mxu0 0
        %3174 = vmatpush1.bf16.msra.mxu0 0
        %3175 = vmatprep.subr.bf16.mxu0 0
        %3176 = vmatpush1.bf16.msra.mxu0 0
        %3177 = vmatprep.subr.bf16.mxu0 0
        %3178 = vmatpush1.bf16.msra.mxu0 0
        %3179 = vmatprep.subr.bf16.mxu0 0
        %3180 = vmatpush1.bf16.msra.mxu0 0
        %3181 = vmatprep.subr.bf16.mxu0 0
        %3182 = vmatpush1.bf16.msra.mxu0 0
        %3183 = vmatprep.subr.bf16.mxu0 0
        %3184 = vmatpush1.bf16.msra.mxu0 0
        %3185 = vmatprep.subr.bf16.mxu0 0
        %3186 = vmatpush1.bf16.msra.mxu0 0
        %3187 = vmatprep.subr.bf16.mxu0 0
        %3188 = vmatpush1.bf16.msra.mxu0 0
        %3189 = vmatprep.subr.bf16.mxu0 0
        %3190 = vmatpush1.bf16.msra.mxu0 0
        %3191 = vmatprep.mubr.bf16.mxu0 0
        %3192 = vmatmul.mubr.bf16.gmra.mrb[0].mxu0 %v3089
        %v3193 = vpop.f32.mrb[0].mxu0
        %v3194 = vadd.f32 0.0, %v3193
        %v3195 = vpop.f32.mrb[0].mxu0
        %v3196 = vadd.f32 0.0, %v3195
        %v3197 = vpop.f32.mrb[0].mxu0
        %v3198 = vpop.f32.mrb[0].mxu0
        %3199 = vdwg.mxu0
        %3200 = vmatprep.subr.bf16.mxu0 %v3107
        %3201 = vmatpush1.bf16.msra.mxu0 %v3104
        %3202 = vmatprep.subr.bf16.mxu0 0
        %3203 = vmatpush1.bf16.msra.mxu0 0
        %3204 = vmatprep.subr.bf16.mxu0 0
        %3205 = vmatpush1.bf16.msra.mxu0 0
        %3206 = vmatprep.subr.bf16.mxu0 0
        %3207 = vmatpush1.bf16.msra.mxu0 0
        %3208 = vmatprep.subr.bf16.mxu0 0
        %3209 = vmatpush1.bf16.msra.mxu0 0
        %3210 = vmatprep.subr.bf16.mxu0 0
        %3211 = vmatpush1.bf16.msra.mxu0 0
        %3212 = vmatprep.subr.bf16.mxu0 0
        %3213 = vmatpush1.bf16.msra.mxu0 0
        %3214 = vmatprep.subr.bf16.mxu0 0
        %3215 = vmatpush1.bf16.msra.mxu0 0
        %3216 = vmatprep.subr.bf16.mxu0 0
        %3217 = vmatpush1.bf16.msra.mxu0 0
        %3218 = vmatprep.subr.bf16.mxu0 0
        %3219 = vmatpush1.bf16.msra.mxu0 0
        %3220 = vmatprep.subr.bf16.mxu0 0
        %3221 = vmatpush1.bf16.msra.mxu0 0
        %3222 = vmatprep.subr.bf16.mxu0 0
        %3223 = vmatpush1.bf16.msra.mxu0 0
        %3224 = vmatprep.subr.bf16.mxu0 0
        %3225 = vmatpush1.bf16.msra.mxu0 0
        %3226 = vmatprep.subr.bf16.mxu0 0
        %3227 = vmatpush1.bf16.msra.mxu0 0
        %3228 = vmatprep.subr.bf16.mxu0 0
        %3229 = vmatpush1.bf16.msra.mxu0 0
        %3230 = vmatprep.subr.bf16.mxu0 0
        %3231 = vmatpush1.bf16.msra.mxu0 0
        %3232 = vmatprep.mubr.bf16.mxu0 0
        %3233 = vmatmul.mubr.bf16.gmra.mrb[0].mxu0 %v3089
        %v3234 = vpop.f32.mrb[0].mxu0
        %v3235 = vadd.f32 0.0, %v3234
        %v3236 = vpop.f32.mrb[0].mxu0
        %v3237 = vadd.f32 0.0, %v3236
        %v3238 = vpop.f32.mrb[0].mxu0
        %v3239 = vpop.f32.mrb[0].mxu0
        %3240 = vdwg.mxu0
        %3241 = vmatprep.subr.bf16.mxu0 %v3113
        %3242 = vmatpush1.bf16.msra.mxu0 %v3110
        %3243 = vmatprep.subr.bf16.mxu0 0
        %3244 = vmatpush1.bf16.msra.mxu0 0
        %3245 = vmatprep.subr.bf16.mxu0 0
        %3246 = vmatpush1.bf16.msra.mxu0 0
        %3247 = vmatprep.subr.bf16.mxu0 0
        %3248 = vmatpush1.bf16.msra.mxu0 0
        %3249 = vmatprep.subr.bf16.mxu0 0
        %3250 = vmatpush1.bf16.msra.mxu0 0
        %3251 = vmatprep.subr.bf16.mxu0 0
        %3252 = vmatpush1.bf16.msra.mxu0 0
        %3253 = vmatprep.subr.bf16.mxu0 0
        %3254 = vmatpush1.bf16.msra.mxu0 0
        %3255 = vmatprep.subr.bf16.mxu0 0
        %3256 = vmatpush1.bf16.msra.mxu0 0
        %3257 = vmatprep.subr.bf16.mxu0 0
        %3258 = vmatpush1.bf16.msra.mxu0 0
        %3259 = vmatprep.subr.bf16.mxu0 0
        %3260 = vmatpush1.bf16.msra.mxu0 0
        %3261 = vmatprep.subr.bf16.mxu0 0
        %3262 = vmatpush1.bf16.msra.mxu0 0
        %3263 = vmatprep.subr.bf16.mxu0 0
        %3264 = vmatpush1.bf16.msra.mxu0 0
        %3265 = vmatprep.subr.bf16.mxu0 0
        %3266 = vmatpush1.bf16.msra.mxu0 0
        %3267 = vmatprep.subr.bf16.mxu0 0
        %3268 = vmatpush1.bf16.msra.mxu0 0
        %3269 = vmatprep.subr.bf16.mxu0 0
        %3270 = vmatpush1.bf16.msra.mxu0 0
        %3271 = vmatprep.subr.bf16.mxu0 0
        %3272 = vmatpush1.bf16.msra.mxu0 0
        %3273 = vmatprep.mubr.bf16.mxu0 0
        %3274 = vmatmul.mubr.bf16.gmra.mrb[0].mxu0 %v3089
        %v3275 = vpop.f32.mrb[0].mxu0
        %v3276 = vadd.f32 0.0, %v3275
        %v3277 = vpop.f32.mrb[0].mxu0
        %v3278 = vadd.f32 0.0, %v3277
        %v3279 = vpop.f32.mrb[0].mxu0
        %v3280 = vpop.f32.mrb[0].mxu0
        %3281 = vdwg.mxu0
        %3282 = vmatprep.subr.bf16.mxu0 0
        %3283 = vmatpush1.bf16.msra.mxu0 %v3116
        %3284 = vmatprep.subr.bf16.mxu0 0
        %3285 = vmatpush1.bf16.msra.mxu0 0
        %3286 = vmatprep.subr.bf16.mxu0 0
        %3287 = vmatpush1.bf16.msra.mxu0 0
        %3288 = vmatprep.subr.bf16.mxu0 0
        %3289 = vmatpush1.bf16.msra.mxu0 0
        %3290 = vmatprep.subr.bf16.mxu0 0
        %3291 = vmatpush1.bf16.msra.mxu0 0
        %3292 = vmatprep.subr.bf16.mxu0 0
        %3293 = vmatpush1.bf16.msra.mxu0 0
        %3294 = vmatprep.subr.bf16.mxu0 0
        %3295 = vmatpush1.bf16.msra.mxu0 0
        %3296 = vmatprep.subr.bf16.mxu0 0
        %3297 = vmatpush1.bf16.msra.mxu0 0
        %3298 = vmatprep.subr.bf16.mxu0 0
        %3299 = vmatpush1.bf16.msra.mxu0 0
        %3300 = vmatprep.subr.bf16.mxu0 0
        %3301 = vmatpush1.bf16.msra.mxu0 0
        %3302 = vmatprep.subr.bf16.mxu0 0
        %3303 = vmatpush1.bf16.msra.mxu0 0
        %3304 = vmatprep.subr.bf16.mxu0 0
        %3305 = vmatpush1.bf16.msra.mxu0 0
        %3306 = vmatprep.subr.bf16.mxu0 0
        %3307 = vmatpush1.bf16.msra.mxu0 0
        %3308 = vmatprep.subr.bf16.mxu0 0
        %3309 = vmatpush1.bf16.msra.mxu0 0
        %3310 = vmatprep.subr.bf16.mxu0 0
        %3311 = vmatpush1.bf16.msra.mxu0 0
        %3312 = vmatprep.subr.bf16.mxu0 0
        %3313 = vmatpush1.bf16.msra.mxu0 0
        %3314 = vmatprep.mubr.bf16.mxu0 0
        %3315 = vmatmul.mubr.bf16.gmra.mrb[0].mxu0 %v3089
        %v3316 = vpop.f32.mrb[0].mxu0
        %v3317 = vadd.f32 0.0, %v3316
        %v3318 = vpop.f32.mrb[0].mxu0
        %v3319 = vpop.f32.mrb[0].mxu0
        %v3320 = vpop.f32.mrb[0].mxu0
        %3321 = vdwg.mxu0
        %v3322 = vadd.f32 %v3047, %v3153
        %v3323 = vadd.f32 %v3048, %v3155
        %v3324 = vadd.f32 %v3049, %v3194
        %v3325 = vadd.f32 %v3050, %v3196
        %v3326 = vadd.f32 %v3051, %v3235
        %v3327 = vadd.f32 %v3052, %v3237
        %v3328 = vadd.f32 %v3053, %v3276
        %v3329 = vadd.f32 %v3054, %v3278
        %v3330 = vadd.f32 %v3055, %v3317
        %3331 = vrot.lane.b32.xlu0 %v1443, 72
        %v3332 = vpop.permute.xlu0 %3331
        %3333 = vrot.lane.b32.xlu0 %v1431, 55
        %v3334 = vpop.permute.xlu0 %3333
        %3335 = vrot.lane.b32.xlu0 %v1432, 55
        %v3336 = vpop.permute.xlu0 %3335
        %3337 = vrot.lane.b32.xlu0 %v1433, 55
        %v3338 = vpop.permute.xlu0 %3337
        %3339 = vrot.lane.b32.xlu0 %v1434, 55
        %v3340 = vpop.permute.xlu0 %3339
        %3341 = vrot.lane.b32.xlu0 %v1435, 55
        %v3342 = vpop.permute.xlu0 %3341
        %3343 = vrot.lane.b32.xlu0 %v1436, 55
        %v3344 = vpop.permute.xlu0 %3343
        %3345 = vrot.lane.b32.xlu0 %v1437, 55
        %v3346 = vpop.permute.xlu0 %3345
        %3347 = vrot.lane.b32.xlu0 %v1438, 55
        %v3348 = vpop.permute.xlu0 %3347
        %3349 = vrot.lane.b32.xlu0 %v1439, 55
        %v3350 = vpop.permute.xlu0 %3349
        %3351 = vrot.lane.b32.xlu0 %v1440, 55
        %v3352 = vpop.permute.xlu0 %3351
        %vm3353 = vcmask 449536
        %v3354 = vsel %vm3353, %v3334, %v3336
        %v3355 = vsel %vm3353, %v3336, %v3338
        %v3356 = vsel %vm3353, %v3338, %v3340
        %v3357 = vsel %vm3353, %v3340, %v3342
        %v3358 = vsel %vm3353, %v3342, %v3344
        %v3359 = vsel %vm3353, %v3344, %v3346
        %v3360 = vsel %vm3353, %v3346, %v3348
        %v3361 = vsel %vm3353, %v3348, %v3350
        %v3362 = vsel %vm3353, %v3350, %v3352
        %v3364 = vsel %vm1486, %v3332, 0
        %v3367 = vsel %vm1490, %v3354, 0
        %v3370 = vsel %vm1490, %v3355, 0
        %v3373 = vsel %vm1490, %v3356, 0
        %v3376 = vsel %vm1490, %v3357, 0
        %v3379 = vsel %vm1490, %v3358, 0
        %v3382 = vsel %vm1490, %v3359, 0
        %v3385 = vsel %vm1490, %v3360, 0
        %v3388 = vsel %vm1490, %v3361, 0
        %v3391 = vsel %vm1490, %v3362, 0
        %3393 = vmatprep.subr.bf16.mxu0 %v3370
        %3394 = vmatpush1.bf16.msra.mxu0 %v3367
        %3395 = vmatprep.subr.bf16.mxu0 0
        %3396 = vmatpush1.bf16.msra.mxu0 0
        %3397 = vmatprep.subr.bf16.mxu0 0
        %3398 = vmatpush1.bf16.msra.mxu0 0
        %3399 = vmatprep.subr.bf16.mxu0 0
        %3400 = vmatpush1.bf16.msra.mxu0 0
        %3401 = vmatprep.subr.bf16.mxu0 0
        %3402 = vmatpush1.bf16.msra.mxu0 0
        %3403 = vmatprep.subr.bf16.mxu0 0
        %3404 = vmatpush1.bf16.msra.mxu0 0
        %3405 = vmatprep.subr.bf16.mxu0 0
        %3406 = vmatpush1.bf16.msra.mxu0 0
        %3407 = vmatprep.subr.bf16.mxu0 0
        %3408 = vmatpush1.bf16.msra.mxu0 0
        %3409 = vmatprep.subr.bf16.mxu0 0
        %3410 = vmatpush1.bf16.msra.mxu0 0
        %3411 = vmatprep.subr.bf16.mxu0 0
        %3412 = vmatpush1.bf16.msra.mxu0 0
        %3413 = vmatprep.subr.bf16.mxu0 0
        %3414 = vmatpush1.bf16.msra.mxu0 0
        %3415 = vmatprep.subr.bf16.mxu0 0
        %3416 = vmatpush1.bf16.msra.mxu0 0
        %3417 = vmatprep.subr.bf16.mxu0 0
        %3418 = vmatpush1.bf16.msra.mxu0 0
        %3419 = vmatprep.subr.bf16.mxu0 0
        %3420 = vmatpush1.bf16.msra.mxu0 0
        %3421 = vmatprep.subr.bf16.mxu0 0
        %3422 = vmatpush1.bf16.msra.mxu0 0
        %3423 = vmatprep.subr.bf16.mxu0 0
        %3424 = vmatpush1.bf16.msra.mxu0 0
        %3425 = vmatprep.mubr.bf16.mxu0 0
        %3426 = vmatmul.mubr.bf16.gmra.mrb[0].mxu0 %v3364
        %v3427 = vpop.f32.mrb[0].mxu0
        %v3428 = vadd.f32 0.0, %v3427
        %v3429 = vpop.f32.mrb[0].mxu0
        %v3430 = vadd.f32 0.0, %v3429
        %v3431 = vpop.f32.mrb[0].mxu0
        %v3432 = vpop.f32.mrb[0].mxu0
        %3433 = vdwg.mxu0
        %3434 = vmatprep.subr.bf16.mxu0 %v3376
        %3435 = vmatpush1.bf16.msra.mxu0 %v3373
        %3436 = vmatprep.subr.bf16.mxu0 0
        %3437 = vmatpush1.bf16.msra.mxu0 0
        %3438 = vmatprep.subr.bf16.mxu0 0
        %3439 = vmatpush1.bf16.msra.mxu0 0
        %3440 = vmatprep.subr.bf16.mxu0 0
        %3441 = vmatpush1.bf16.msra.mxu0 0
        %3442 = vmatprep.subr.bf16.mxu0 0
        %3443 = vmatpush1.bf16.msra.mxu0 0
        %3444 = vmatprep.subr.bf16.mxu0 0
        %3445 = vmatpush1.bf16.msra.mxu0 0
        %3446 = vmatprep.subr.bf16.mxu0 0
        %3447 = vmatpush1.bf16.msra.mxu0 0
        %3448 = vmatprep.subr.bf16.mxu0 0
        %3449 = vmatpush1.bf16.msra.mxu0 0
        %3450 = vmatprep.subr.bf16.mxu0 0
        %3451 = vmatpush1.bf16.msra.mxu0 0
        %3452 = vmatprep.subr.bf16.mxu0 0
        %3453 = vmatpush1.bf16.msra.mxu0 0
        %3454 = vmatprep.subr.bf16.mxu0 0
        %3455 = vmatpush1.bf16.msra.mxu0 0
        %3456 = vmatprep.subr.bf16.mxu0 0
        %3457 = vmatpush1.bf16.msra.mxu0 0
        %3458 = vmatprep.subr.bf16.mxu0 0
        %3459 = vmatpush1.bf16.msra.mxu0 0
        %3460 = vmatprep.subr.bf16.mxu0 0
        %3461 = vmatpush1.bf16.msra.mxu0 0
        %3462 = vmatprep.subr.bf16.mxu0 0
        %3463 = vmatpush1.bf16.msra.mxu0 0
        %3464 = vmatprep.subr.bf16.mxu0 0
        %3465 = vmatpush1.bf16.msra.mxu0 0
        %3466 = vmatprep.mubr.bf16.mxu0 0
        %3467 = vmatmul.mubr.bf16.gmra.mrb[0].mxu0 %v3364
        %v3468 = vpop.f32.mrb[0].mxu0
        %v3469 = vadd.f32 0.0, %v3468
        %v3470 = vpop.f32.mrb[0].mxu0
        %v3471 = vadd.f32 0.0, %v3470
        %v3472 = vpop.f32.mrb[0].mxu0
        %v3473 = vpop.f32.mrb[0].mxu0
        %3474 = vdwg.mxu0
        %3475 = vmatprep.subr.bf16.mxu0 %v3382
        %3476 = vmatpush1.bf16.msra.mxu0 %v3379
        %3477 = vmatprep.subr.bf16.mxu0 0
        %3478 = vmatpush1.bf16.msra.mxu0 0
        %3479 = vmatprep.subr.bf16.mxu0 0
        %3480 = vmatpush1.bf16.msra.mxu0 0
        %3481 = vmatprep.subr.bf16.mxu0 0
        %3482 = vmatpush1.bf16.msra.mxu0 0
        %3483 = vmatprep.subr.bf16.mxu0 0
        %3484 = vmatpush1.bf16.msra.mxu0 0
        %3485 = vmatprep.subr.bf16.mxu0 0
        %3486 = vmatpush1.bf16.msra.mxu0 0
        %3487 = vmatprep.subr.bf16.mxu0 0
        %3488 = vmatpush1.bf16.msra.mxu0 0
        %3489 = vmatprep.subr.bf16.mxu0 0
        %3490 = vmatpush1.bf16.msra.mxu0 0
        %3491 = vmatprep.subr.bf16.mxu0 0
        %3492 = vmatpush1.bf16.msra.mxu0 0
        %3493 = vmatprep.subr.bf16.mxu0 0
        %3494 = vmatpush1.bf16.msra.mxu0 0
        %3495 = vmatprep.subr.bf16.mxu0 0
        %3496 = vmatpush1.bf16.msra.mxu0 0
        %3497 = vmatprep.subr.bf16.mxu0 0
        %3498 = vmatpush1.bf16.msra.mxu0 0
        %3499 = vmatprep.subr.bf16.mxu0 0
        %3500 = vmatpush1.bf16.msra.mxu0 0
        %3501 = vmatprep.subr.bf16.mxu0 0
        %3502 = vmatpush1.bf16.msra.mxu0 0
        %3503 = vmatprep.subr.bf16.mxu0 0
        %3504 = vmatpush1.bf16.msra.mxu0 0
        %3505 = vmatprep.subr.bf16.mxu0 0
        %3506 = vmatpush1.bf16.msra.mxu0 0
        %3507 = vmatprep.mubr.bf16.mxu0 0
        %3508 = vmatmul.mubr.bf16.gmra.mrb[0].mxu0 %v3364
        %v3509 = vpop.f32.mrb[0].mxu0
        %v3510 = vadd.f32 0.0, %v3509
        %v3511 = vpop.f32.mrb[0].mxu0
        %v3512 = vadd.f32 0.0, %v3511
        %v3513 = vpop.f32.mrb[0].mxu0
        %v3514 = vpop.f32.mrb[0].mxu0
        %3515 = vdwg.mxu0
        %3516 = vmatprep.subr.bf16.mxu0 %v3388
        %3517 = vmatpush1.bf16.msra.mxu0 %v3385
        %3518 = vmatprep.subr.bf16.mxu0 0
        %3519 = vmatpush1.bf16.msra.mxu0 0
        %3520 = vmatprep.subr.bf16.mxu0 0
        %3521 = vmatpush1.bf16.msra.mxu0 0
        %3522 = vmatprep.subr.bf16.mxu0 0
        %3523 = vmatpush1.bf16.msra.mxu0 0
        %3524 = vmatprep.subr.bf16.mxu0 0
        %3525 = vmatpush1.bf16.msra.mxu0 0
        %3526 = vmatprep.subr.bf16.mxu0 0
        %3527 = vmatpush1.bf16.msra.mxu0 0
        %3528 = vmatprep.subr.bf16.mxu0 0
        %3529 = vmatpush1.bf16.msra.mxu0 0
        %3530 = vmatprep.subr.bf16.mxu0 0
        %3531 = vmatpush1.bf16.msra.mxu0 0
        %3532 = vmatprep.subr.bf16.mxu0 0
        %3533 = vmatpush1.bf16.msra.mxu0 0
        %3534 = vmatprep.subr.bf16.mxu0 0
        %3535 = vmatpush1.bf16.msra.mxu0 0
        %3536 = vmatprep.subr.bf16.mxu0 0
        %3537 = vmatpush1.bf16.msra.mxu0 0
        %3538 = vmatprep.subr.bf16.mxu0 0
        %3539 = vmatpush1.bf16.msra.mxu0 0
        %3540 = vmatprep.subr.bf16.mxu0 0
        %3541 = vmatpush1.bf16.msra.mxu0 0
        %3542 = vmatprep.subr.bf16.mxu0 0
        %3543 = vmatpush1.bf16.msra.mxu0 0
        %3544 = vmatprep.subr.bf16.mxu0 0
        %3545 = vmatpush1.bf16.msra.mxu0 0
        %3546 = vmatprep.subr.bf16.mxu0 0
        %3547 = vmatpush1.bf16.msra.mxu0 0
        %3548 = vmatprep.mubr.bf16.mxu0 0
        %3549 = vmatmul.mubr.bf16.gmra.mrb[0].mxu0 %v3364
        %v3550 = vpop.f32.mrb[0].mxu0
        %v3551 = vadd.f32 0.0, %v3550
        %v3552 = vpop.f32.mrb[0].mxu0
        %v3553 = vadd.f32 0.0, %v3552
        %v3554 = vpop.f32.mrb[0].mxu0
        %v3555 = vpop.f32.mrb[0].mxu0
        %3556 = vdwg.mxu0
        %3557 = vmatprep.subr.bf16.mxu0 0
        %3558 = vmatpush1.bf16.msra.mxu0 %v3391
        %3559 = vmatprep.subr.bf16.mxu0 0
        %3560 = vmatpush1.bf16.msra.mxu0 0
        %3561 = vmatprep.subr.bf16.mxu0 0
        %3562 = vmatpush1.bf16.msra.mxu0 0
        %3563 = vmatprep.subr.bf16.mxu0 0
        %3564 = vmatpush1.bf16.msra.mxu0 0
        %3565 = vmatprep.subr.bf16.mxu0 0
        %3566 = vmatpush1.bf16.msra.mxu0 0
        %3567 = vmatprep.subr.bf16.mxu0 0
        %3568 = vmatpush1.bf16.msra.mxu0 0
        %3569 = vmatprep.subr.bf16.mxu0 0
        %3570 = vmatpush1.bf16.msra.mxu0 0
        %3571 = vmatprep.subr.bf16.mxu0 0
        %3572 = vmatpush1.bf16.msra.mxu0 0
        %3573 = vmatprep.subr.bf16.mxu0 0
        %3574 = vmatpush1.bf16.msra.mxu0 0
        %3575 = vmatprep.subr.bf16.mxu0 0
        %3576 = vmatpush1.bf16.msra.mxu0 0
        %3577 = vmatprep.subr.bf16.mxu0 0
        %3578 = vmatpush1.bf16.msra.mxu0 0
        %3579 = vmatprep.subr.bf16.mxu0 0
        %3580 = vmatpush1.bf16.msra.mxu0 0
        %3581 = vmatprep.subr.bf16.mxu0 0
        %3582 = vmatpush1.bf16.msra.mxu0 0
        %3583 = vmatprep.subr.bf16.mxu0 0
        %3584 = vmatpush1.bf16.msra.mxu0 0
        %3585 = vmatprep.subr.bf16.mxu0 0
        %3586 = vmatpush1.bf16.msra.mxu0 0
        %3587 = vmatprep.subr.bf16.mxu0 0
        %3588 = vmatpush1.bf16.msra.mxu0 0
        %3589 = vmatprep.mubr.bf16.mxu0 0
        %3590 = vmatmul.mubr.bf16.gmra.mrb[0].mxu0 %v3364
        %v3591 = vpop.f32.mrb[0].mxu0
        %v3592 = vadd.f32 0.0, %v3591
        %v3593 = vpop.f32.mrb[0].mxu0
        %v3594 = vpop.f32.mrb[0].mxu0
        %v3595 = vpop.f32.mrb[0].mxu0
        %3596 = vdwg.mxu0
        %v3597 = vadd.f32 %v3322, %v3428
        %v3598 = vadd.f32 %v3323, %v3430
        %v3599 = vadd.f32 %v3324, %v3469
        %v3600 = vadd.f32 %v3325, %v3471
        %v3601 = vadd.f32 %v3326, %v3510
        %v3602 = vadd.f32 %v3327, %v3512
        %v3603 = vadd.f32 %v3328, %v3551
        %v3604 = vadd.f32 %v3329, %v3553
        %v3605 = vadd.f32 %v3330, %v3592
        %3606 = vrot.lane.b32.xlu0 %v1443, 64
        %v3607 = vpop.permute.xlu0 %3606
        %3608 = vrot.lane.b32.xlu0 %v1431, 54
        %v3609 = vpop.permute.xlu0 %3608
        %3610 = vrot.lane.b32.xlu0 %v1432, 54
        %v3611 = vpop.permute.xlu0 %3610
        %3612 = vrot.lane.b32.xlu0 %v1433, 54
        %v3613 = vpop.permute.xlu0 %3612
        %3614 = vrot.lane.b32.xlu0 %v1434, 54
        %v3615 = vpop.permute.xlu0 %3614
        %3616 = vrot.lane.b32.xlu0 %v1435, 54
        %v3617 = vpop.permute.xlu0 %3616
        %3618 = vrot.lane.b32.xlu0 %v1436, 54
        %v3619 = vpop.permute.xlu0 %3618
        %3620 = vrot.lane.b32.xlu0 %v1437, 54
        %v3621 = vpop.permute.xlu0 %3620
        %3622 = vrot.lane.b32.xlu0 %v1438, 54
        %v3623 = vpop.permute.xlu0 %3622
        %3624 = vrot.lane.b32.xlu0 %v1439, 54
        %v3625 = vpop.permute.xlu0 %3624
        %3626 = vrot.lane.b32.xlu0 %v1440, 54
        %v3627 = vpop.permute.xlu0 %3626
        %vm3628 = vcmask 441344
        %v3629 = vsel %vm3628, %v3609, %v3611
        %v3630 = vsel %vm3628, %v3611, %v3613
        %v3631 = vsel %vm3628, %v3613, %v3615
        %v3632 = vsel %vm3628, %v3615, %v3617
        %v3633 = vsel %vm3628, %v3617, %v3619
        %v3634 = vsel %vm3628, %v3619, %v3621
        %v3635 = vsel %vm3628, %v3621, %v3623
        %v3636 = vsel %vm3628, %v3623, %v3625
        %v3637 = vsel %vm3628, %v3625, %v3627
        %v3639 = vsel %vm1486, %v3607, 0
        %v3642 = vsel %vm1490, %v3629, 0
        %v3645 = vsel %vm1490, %v3630, 0
        %v3648 = vsel %vm1490, %v3631, 0
        %v3651 = vsel %vm1490, %v3632, 0
        %v3654 = vsel %vm1490, %v3633, 0
        %v3657 = vsel %vm1490, %v3634, 0
        %v3660 = vsel %vm1490, %v3635, 0
        %v3663 = vsel %vm1490, %v3636, 0
        %v3666 = vsel %vm1490, %v3637, 0
        %3668 = vmatprep.subr.bf16.mxu0 %v3645
        %3669 = vmatpush1.bf16.msra.mxu0 %v3642
        %3670 = vmatprep.subr.bf16.mxu0 0
        %3671 = vmatpush1.bf16.msra.mxu0 0
        %3672 = vmatprep.subr.bf16.mxu0 0
        %3673 = vmatpush1.bf16.msra.mxu0 0
        %3674 = vmatprep.subr.bf16.mxu0 0
        %3675 = vmatpush1.bf16.msra.mxu0 0
        %3676 = vmatprep.subr.bf16.mxu0 0
        %3677 = vmatpush1.bf16.msra.mxu0 0
        %3678 = vmatprep.subr.bf16.mxu0 0
        %3679 = vmatpush1.bf16.msra.mxu0 0
        %3680 = vmatprep.subr.bf16.mxu0 0
        %3681 = vmatpush1.bf16.msra.mxu0 0
        %3682 = vmatprep.subr.bf16.mxu0 0
        %3683 = vmatpush1.bf16.msra.mxu0 0
        %3684 = vmatprep.subr.bf16.mxu0 0
        %3685 = vmatpush1.bf16.msra.mxu0 0
        %3686 = vmatprep.subr.bf16.mxu0 0
        %3687 = vmatpush1.bf16.msra.mxu0 0
        %3688 = vmatprep.subr.bf16.mxu0 0
        %3689 = vmatpush1.bf16.msra.mxu0 0
        %3690 = vmatprep.subr.bf16.mxu0 0
        %3691 = vmatpush1.bf16.msra.mxu0 0
        %3692 = vmatprep.subr.bf16.mxu0 0
        %3693 = vmatpush1.bf16.msra.mxu0 0
        %3694 = vmatprep.subr.bf16.mxu0 0
        %3695 = vmatpush1.bf16.msra.mxu0 0
        %3696 = vmatprep.subr.bf16.mxu0 0
        %3697 = vmatpush1.bf16.msra.mxu0 0
        %3698 = vmatprep.subr.bf16.mxu0 0
        %3699 = vmatpush1.bf16.msra.mxu0 0
        %3700 = vmatprep.mubr.bf16.mxu0 0
        %3701 = vmatmul.mubr.bf16.gmra.mrb[0].mxu0 %v3639
        %v3702 = vpop.f32.mrb[0].mxu0
        %v3703 = vadd.f32 0.0, %v3702
        %v3704 = vpop.f32.mrb[0].mxu0
        %v3705 = vadd.f32 0.0, %v3704
        %v3706 = vpop.f32.mrb[0].mxu0
        %v3707 = vpop.f32.mrb[0].mxu0
        %3708 = vdwg.mxu0
        %3709 = vmatprep.subr.bf16.mxu0 %v3651
        %3710 = vmatpush1.bf16.msra.mxu0 %v3648
        %3711 = vmatprep.subr.bf16.mxu0 0
        %3712 = vmatpush1.bf16.msra.mxu0 0
        %3713 = vmatprep.subr.bf16.mxu0 0
        %3714 = vmatpush1.bf16.msra.mxu0 0
        %3715 = vmatprep.subr.bf16.mxu0 0
        %3716 = vmatpush1.bf16.msra.mxu0 0
        %3717 = vmatprep.subr.bf16.mxu0 0
        %3718 = vmatpush1.bf16.msra.mxu0 0
        %3719 = vmatprep.subr.bf16.mxu0 0
        %3720 = vmatpush1.bf16.msra.mxu0 0
        %3721 = vmatprep.subr.bf16.mxu0 0
        %3722 = vmatpush1.bf16.msra.mxu0 0
        %3723 = vmatprep.subr.bf16.mxu0 0
        %3724 = vmatpush1.bf16.msra.mxu0 0
        %3725 = vmatprep.subr.bf16.mxu0 0
        %3726 = vmatpush1.bf16.msra.mxu0 0
        %3727 = vmatprep.subr.bf16.mxu0 0
        %3728 = vmatpush1.bf16.msra.mxu0 0
        %3729 = vmatprep.subr.bf16.mxu0 0
        %3730 = vmatpush1.bf16.msra.mxu0 0
        %3731 = vmatprep.subr.bf16.mxu0 0
        %3732 = vmatpush1.bf16.msra.mxu0 0
        %3733 = vmatprep.subr.bf16.mxu0 0
        %3734 = vmatpush1.bf16.msra.mxu0 0
        %3735 = vmatprep.subr.bf16.mxu0 0
        %3736 = vmatpush1.bf16.msra.mxu0 0
        %3737 = vmatprep.subr.bf16.mxu0 0
        %3738 = vmatpush1.bf16.msra.mxu0 0
        %3739 = vmatprep.subr.bf16.mxu0 0
        %3740 = vmatpush1.bf16.msra.mxu0 0
        %3741 = vmatprep.mubr.bf16.mxu0 0
        %3742 = vmatmul.mubr.bf16.gmra.mrb[0].mxu0 %v3639
        %v3743 = vpop.f32.mrb[0].mxu0
        %v3744 = vadd.f32 0.0, %v3743
        %v3745 = vpop.f32.mrb[0].mxu0
        %v3746 = vadd.f32 0.0, %v3745
        %v3747 = vpop.f32.mrb[0].mxu0
        %v3748 = vpop.f32.mrb[0].mxu0
        %3749 = vdwg.mxu0
        %3750 = vmatprep.subr.bf16.mxu0 %v3657
        %3751 = vmatpush1.bf16.msra.mxu0 %v3654
        %3752 = vmatprep.subr.bf16.mxu0 0
        %3753 = vmatpush1.bf16.msra.mxu0 0
        %3754 = vmatprep.subr.bf16.mxu0 0
        %3755 = vmatpush1.bf16.msra.mxu0 0
        %3756 = vmatprep.subr.bf16.mxu0 0
        %3757 = vmatpush1.bf16.msra.mxu0 0
        %3758 = vmatprep.subr.bf16.mxu0 0
        %3759 = vmatpush1.bf16.msra.mxu0 0
        %3760 = vmatprep.subr.bf16.mxu0 0
        %3761 = vmatpush1.bf16.msra.mxu0 0
        %3762 = vmatprep.subr.bf16.mxu0 0
        %3763 = vmatpush1.bf16.msra.mxu0 0
        %3764 = vmatprep.subr.bf16.mxu0 0
        %3765 = vmatpush1.bf16.msra.mxu0 0
        %3766 = vmatprep.subr.bf16.mxu0 0
        %3767 = vmatpush1.bf16.msra.mxu0 0
        %3768 = vmatprep.subr.bf16.mxu0 0
        %3769 = vmatpush1.bf16.msra.mxu0 0
        %3770 = vmatprep.subr.bf16.mxu0 0
        %3771 = vmatpush1.bf16.msra.mxu0 0
        %3772 = vmatprep.subr.bf16.mxu0 0
        %3773 = vmatpush1.bf16.msra.mxu0 0
        %3774 = vmatprep.subr.bf16.mxu0 0
        %3775 = vmatpush1.bf16.msra.mxu0 0
        %3776 = vmatprep.subr.bf16.mxu0 0
        %3777 = vmatpush1.bf16.msra.mxu0 0
        %3778 = vmatprep.subr.bf16.mxu0 0
        %3779 = vmatpush1.bf16.msra.mxu0 0
        %3780 = vmatprep.subr.bf16.mxu0 0
        %3781 = vmatpush1.bf16.msra.mxu0 0
        %3782 = vmatprep.mubr.bf16.mxu0 0
        %3783 = vmatmul.mubr.bf16.gmra.mrb[0].mxu0 %v3639
        %v3784 = vpop.f32.mrb[0].mxu0
        %v3785 = vadd.f32 0.0, %v3784
        %v3786 = vpop.f32.mrb[0].mxu0
        %v3787 = vadd.f32 0.0, %v3786
        %v3788 = vpop.f32.mrb[0].mxu0
        %v3789 = vpop.f32.mrb[0].mxu0
        %3790 = vdwg.mxu0
        %3791 = vmatprep.subr.bf16.mxu0 %v3663
        %3792 = vmatpush1.bf16.msra.mxu0 %v3660
        %3793 = vmatprep.subr.bf16.mxu0 0
        %3794 = vmatpush1.bf16.msra.mxu0 0
        %3795 = vmatprep.subr.bf16.mxu0 0
        %3796 = vmatpush1.bf16.msra.mxu0 0
        %3797 = vmatprep.subr.bf16.mxu0 0
        %3798 = vmatpush1.bf16.msra.mxu0 0
        %3799 = vmatprep.subr.bf16.mxu0 0
        %3800 = vmatpush1.bf16.msra.mxu0 0
        %3801 = vmatprep.subr.bf16.mxu0 0
        %3802 = vmatpush1.bf16.msra.mxu0 0
        %3803 = vmatprep.subr.bf16.mxu0 0
        %3804 = vmatpush1.bf16.msra.mxu0 0
        %3805 = vmatprep.subr.bf16.mxu0 0
        %3806 = vmatpush1.bf16.msra.mxu0 0
        %3807 = vmatprep.subr.bf16.mxu0 0
        %3808 = vmatpush1.bf16.msra.mxu0 0
        %3809 = vmatprep.subr.bf16.mxu0 0
        %3810 = vmatpush1.bf16.msra.mxu0 0
        %3811 = vmatprep.subr.bf16.mxu0 0
        %3812 = vmatpush1.bf16.msra.mxu0 0
        %3813 = vmatprep.subr.bf16.mxu0 0
        %3814 = vmatpush1.bf16.msra.mxu0 0
        %3815 = vmatprep.subr.bf16.mxu0 0
        %3816 = vmatpush1.bf16.msra.mxu0 0
        %3817 = vmatprep.subr.bf16.mxu0 0
        %3818 = vmatpush1.bf16.msra.mxu0 0
        %3819 = vmatprep.subr.bf16.mxu0 0
        %3820 = vmatpush1.bf16.msra.mxu0 0
        %3821 = vmatprep.subr.bf16.mxu0 0
        %3822 = vmatpush1.bf16.msra.mxu0 0
        %3823 = vmatprep.mubr.bf16.mxu0 0
        %3824 = vmatmul.mubr.bf16.gmra.mrb[0].mxu0 %v3639
        %v3825 = vpop.f32.mrb[0].mxu0
        %v3826 = vadd.f32 0.0, %v3825
        %v3827 = vpop.f32.mrb[0].mxu0
        %v3828 = vadd.f32 0.0, %v3827
        %v3829 = vpop.f32.mrb[0].mxu0
        %v3830 = vpop.f32.mrb[0].mxu0
        %3831 = vdwg.mxu0
        %3832 = vmatprep.subr.bf16.mxu0 0
        %3833 = vmatpush1.bf16.msra.mxu0 %v3666
        %3834 = vmatprep.subr.bf16.mxu0 0
        %3835 = vmatpush1.bf16.msra.mxu0 0
        %3836 = vmatprep.subr.bf16.mxu0 0
        %3837 = vmatpush1.bf16.msra.mxu0 0
        %3838 = vmatprep.subr.bf16.mxu0 0
        %3839 = vmatpush1.bf16.msra.mxu0 0
        %3840 = vmatprep.subr.bf16.mxu0 0
        %3841 = vmatpush1.bf16.msra.mxu0 0
        %3842 = vmatprep.subr.bf16.mxu0 0
        %3843 = vmatpush1.bf16.msra.mxu0 0
        %3844 = vmatprep.subr.bf16.mxu0 0
        %3845 = vmatpush1.bf16.msra.mxu0 0
        %3846 = vmatprep.subr.bf16.mxu0 0
        %3847 = vmatpush1.bf16.msra.mxu0 0
        %3848 = vmatprep.subr.bf16.mxu0 0
        %3849 = vmatpush1.bf16.msra.mxu0 0
        %3850 = vmatprep.subr.bf16.mxu0 0
        %3851 = vmatpush1.bf16.msra.mxu0 0
        %3852 = vmatprep.subr.bf16.mxu0 0
        %3853 = vmatpush1.bf16.msra.mxu0 0
        %3854 = vmatprep.subr.bf16.mxu0 0
        %3855 = vmatpush1.bf16.msra.mxu0 0
        %3856 = vmatprep.subr.bf16.mxu0 0
        %3857 = vmatpush1.bf16.msra.mxu0 0
        %3858 = vmatprep.subr.bf16.mxu0 0
        %3859 = vmatpush1.bf16.msra.mxu0 0
        %3860 = vmatprep.subr.bf16.mxu0 0
        %3861 = vmatpush1.bf16.msra.mxu0 0
        %3862 = vmatprep.subr.bf16.mxu0 0
        %3863 = vmatpush1.bf16.msra.mxu0 0
        %3864 = vmatprep.mubr.bf16.mxu0 0
        %3865 = vmatmul.mubr.bf16.gmra.mrb[0].mxu0 %v3639
        %v3866 = vpop.f32.mrb[0].mxu0
        %v3867 = vadd.f32 0.0, %v3866
        %v3868 = vpop.f32.mrb[0].mxu0
        %v3869 = vpop.f32.mrb[0].mxu0
        %v3870 = vpop.f32.mrb[0].mxu0
        %3871 = vdwg.mxu0
        %v3872 = vadd.f32 %v3597, %v3703
        %v3873 = vadd.f32 %v3598, %v3705
        %v3874 = vadd.f32 %v3599, %v3744
        %v3875 = vadd.f32 %v3600, %v3746
        %v3876 = vadd.f32 %v3601, %v3785
        %v3877 = vadd.f32 %v3602, %v3787
        %v3878 = vadd.f32 %v3603, %v3826
        %v3879 = vadd.f32 %v3604, %v3828
        %v3880 = vadd.f32 %v3605, %v3867
        %v3881 = vld [vmem:[%s4] sm:$0xff]
        %3883 = vset.pattern.permute.xlu0 0
        %3884 = vperm.xlu0 %3883, %v3881
        %v3885 = vpop.permute.xlu0 %3884
        %v3887 = vadd.f32 %v3872, %v3885
        %v3888 = vadd.f32 %v3873, %v3885
        %v3889 = vadd.f32 %v3874, %v3885
        %v3890 = vadd.f32 %v3875, %v3885
        %v3891 = vadd.f32 %v3876, %v3885
        %v3892 = vadd.f32 %v3877, %v3885
        %v3893 = vadd.f32 %v3878, %v3885
        %v3894 = vadd.f32 %v3879, %v3885
        %v3895 = vadd.f32 %v3880, %v3885
        %v3896 = vld [vmem:[%s2] sm:$0xff]
        %v3897 = vld [vmem:[%s2 + $0x8] sm:$0x1]
        %v3900 = vlaneseq
        %v3901 = vshrl.u32 %v3900, 7
        %v3902 = vsub.s32 0, %v3901
        %v3903 = vrot.slane %v3896, %v3902
        %v3904 = vlaneseq
        %v3905 = vshrl.u32 %v3904, 7
        %v3906 = vsub.s32 1, %v3905
        %v3907 = vrot.slane %v3896, %v3906
        %v3908 = vlaneseq
        %v3909 = vshrl.u32 %v3908, 7
        %v3910 = vsub.s32 2, %v3909
        %v3911 = vrot.slane %v3896, %v3910
        %v3912 = vlaneseq
        %v3913 = vshrl.u32 %v3912, 7
        %v3914 = vsub.s32 3, %v3913
        %v3915 = vrot.slane %v3896, %v3914
        %v3916 = vlaneseq
        %v3917 = vshrl.u32 %v3916, 7
        %v3918 = vsub.s32 4, %v3917
        %v3919 = vrot.slane %v3896, %v3918
        %v3920 = vlaneseq
        %v3921 = vshrl.u32 %v3920, 7
        %v3922 = vsub.s32 5, %v3921
        %v3923 = vrot.slane %v3896, %v3922
        %v3924 = vlaneseq
        %v3925 = vshrl.u32 %v3924, 7
        %v3926 = vsub.s32 6, %v3925
        %v3927 = vrot.slane %v3896, %v3926
        %v3928 = vlaneseq
        %v3929 = vshrl.u32 %v3928, 7
        %v3930 = vsub.s32 7, %v3929
        %v3931 = vrot.slane %v3896, %v3930
        %v3932 = vlaneseq
        %v3933 = vshrl.u32 %v3932, 7
        %v3934 = vsub.s32 0, %v3933
        %v3935 = vrot.slane %v3897, %v3934
        %v3945 = vmul.f32 %v3887, %v3903
        %v3946 = vmul.f32 %v3888, %v3907
        %v3947 = vmul.f32 %v3889, %v3911
        %v3948 = vmul.f32 %v3890, %v3915
        %v3949 = vmul.f32 %v3891, %v3919
        %v3950 = vmul.f32 %v3892, %v3923
        %v3951 = vmul.f32 %v3893, %v3927
        %v3952 = vmul.f32 %v3894, %v3931
        %v3953 = vmul.f32 %v3895, %v3935
        %v3954 = vadd.f32 %v3945, %v3946
        %v3955 = vadd.f32 %v3954, %v3947
        %v3956 = vadd.f32 %v3955, %v3948
        %v3957 = vadd.f32 %v3956, %v3949
        %v3958 = vadd.f32 %v3957, %v3950
        %v3959 = vadd.f32 %v3958, %v3951
        %v3960 = vadd.f32 %v3959, %v3952
        %v3961 = vadd.f32 %v3960, %v3953
        %3962 = vadd.xlane.f32.xlu0 %v3961
        %v3963 = vpop.xlane.xlu0 %3962
        %v3964 = vmul.f32 %v3887, %v3945
        %v3965 = vmul.f32 %v3888, %v3946
        %v3966 = vmul.f32 %v3889, %v3947
        %v3967 = vmul.f32 %v3890, %v3948
        %v3968 = vmul.f32 %v3891, %v3949
        %v3969 = vmul.f32 %v3892, %v3950
        %v3970 = vmul.f32 %v3893, %v3951
        %v3971 = vmul.f32 %v3894, %v3952
        %v3972 = vmul.f32 %v3895, %v3953
        %v3973 = vadd.f32 %v3964, %v3965
        %v3974 = vadd.f32 %v3973, %v3966
        %v3975 = vadd.f32 %v3974, %v3967
        %v3976 = vadd.f32 %v3975, %v3968
        %v3977 = vadd.f32 %v3976, %v3969
        %v3978 = vadd.f32 %v3977, %v3970
        %v3979 = vadd.f32 %v3978, %v3971
        %v3980 = vadd.f32 %v3979, %v3972
        %3981 = vadd.xlane.f32.xlu0 %v3980
        %v3982 = vpop.xlane.xlu0 %3981
        %v3983 = vmul.f32 %v3963, 0.0009765625
        %v3984 = vmul.f32 %v3982, 0.0009765625
        %v3985 = vmul.f32 %v3983, %v3983
        %v3986 = vsub.f32 %v3984, %v3985
        %v3987 = vmax.f32 %v3986, 0.0
        %v3988 = vsub.f32 %v3887, %v3983
        %v3989 = vsub.f32 %v3888, %v3983
        %v3990 = vsub.f32 %v3889, %v3983
        %v3991 = vsub.f32 %v3890, %v3983
        %v3992 = vsub.f32 %v3891, %v3983
        %v3993 = vsub.f32 %v3892, %v3983
        %v3994 = vsub.f32 %v3893, %v3983
        %v3995 = vsub.f32 %v3894, %v3983
        %v3996 = vsub.f32 %v3895, %v3983
        %v3997 = vadd.f32 %v3987, 1e-05
        %v3998 = vrsqrt.pop %v3997
        %v3999 = vmul.f32 %v3988, %v3998
        %v4000 = vmul.f32 %v3989, %v3998
        %v4001 = vmul.f32 %v3990, %v3998
        %v4002 = vmul.f32 %v3991, %v3998
        %v4003 = vmul.f32 %v3992, %v3998
        %v4004 = vmul.f32 %v3993, %v3998
        %v4005 = vmul.f32 %v3994, %v3998
        %v4006 = vmul.f32 %v3995, %v3998
        %v4007 = vmul.f32 %v3996, %v3998
        %vm4008 = vcmp.gt.f32.partialorder %v3999, 0.0
        %vm4009 = vcmp.gt.f32.partialorder %v4000, 0.0
        %vm4010 = vcmp.gt.f32.partialorder %v4001, 0.0
        %vm4011 = vcmp.gt.f32.partialorder %v4002, 0.0
        %vm4012 = vcmp.gt.f32.partialorder %v4003, 0.0
        %vm4013 = vcmp.gt.f32.partialorder %v4004, 0.0
        %vm4014 = vcmp.gt.f32.partialorder %v4005, 0.0
        %vm4015 = vcmp.gt.f32.partialorder %v4006, 0.0
        %vm4016 = vcmp.gt.f32.partialorder %v4007, 0.0
        %v4017 = vmul.f32 %v3999, 1.442695
        %v4018 = vpow.pop %v4017
        %v4019 = vmul.f32 %v4000, 1.442695
        %v4020 = vpow.pop %v4019
        %v4021 = vmul.f32 %v4001, 1.442695
        %v4022 = vpow.pop %v4021
        %v4023 = vmul.f32 %v4002, 1.442695
        %v4024 = vpow.pop %v4023
        %v4025 = vmul.f32 %v4003, 1.442695
        %v4026 = vpow.pop %v4025
        %v4027 = vmul.f32 %v4004, 1.442695
        %v4028 = vpow.pop %v4027
        %v4029 = vmul.f32 %v4005, 1.442695
        %v4030 = vpow.pop %v4029
        %v4031 = vmul.f32 %v4006, 1.442695
        %v4032 = vpow.pop %v4031
        %v4033 = vmul.f32 %v4007, 1.442695
        %v4034 = vpow.pop %v4033
        %v4035 = vsub.f32 %v4018, 1.0
        %v4036 = vsub.f32 %v4020, 1.0
        %v4037 = vsub.f32 %v4022, 1.0
        %v4038 = vsub.f32 %v4024, 1.0
        %v4039 = vsub.f32 %v4026, 1.0
        %v4040 = vsub.f32 %v4028, 1.0
        %v4041 = vsub.f32 %v4030, 1.0
        %v4042 = vsub.f32 %v4032, 1.0
        %v4043 = vsub.f32 %v4034, 1.0
        %v4044 = vsel %vm4008, %v3999, %v4035
        %v4045 = vsel %vm4009, %v4000, %v4036
        %v4046 = vsel %vm4010, %v4001, %v4037
        %v4047 = vsel %vm4011, %v4002, %v4038
        %v4048 = vsel %vm4012, %v4003, %v4039
        %v4049 = vsel %vm4013, %v4004, %v4040
        %v4050 = vsel %vm4014, %v4005, %v4041
        %v4051 = vsel %vm4015, %v4006, %v4042
        %v4052 = vsel %vm4016, %v4007, %v4043
        %4053 = vst [vmem:[%s255] sm:$0xff] %v4044
        %4054 = vst [vmem:[%s255 + $0x8] sm:$0xff] %v4045
        %4055 = vst [vmem:[%s255 + $0x10] sm:$0xff] %v4046
        %4056 = vst [vmem:[%s255 + $0x18] sm:$0xff] %v4047
        %4057 = vst [vmem:[%s255 + $0x20] sm:$0xff] %v4048
        %4058 = vst [vmem:[%s255 + $0x28] sm:$0xff] %v4049
        %4059 = vst [vmem:[%s255 + $0x30] sm:$0xff] %v4050
        %4060 = vst [vmem:[%s255 + $0x38] sm:$0xff] %v4051
        %4061 = vst [vmem:[%s255 + $0x40] sm:$0xff] %v4052
        %s4062 = sand.u32 %s141, 1
        %s4063 = scalar_lea.sflag [#allocation4], %s4062
        %s4064 = sand.u32 %s141, 1
        %s4065 = smul.addr %s4064, 72
        %s4066 = scalar_lea.vmem [#allocation7], %s4065
        // Predicated region
        $region49: #{tpu_custom_call.1} parent=39 // pred_check
          %p4067 = pneg %p151
        $region50: #{tpu_custom_call.1} parent=39 // pred_check_branch
          %4069 = sbr.rel (%p4067) target = $region52
        $region51: #{tpu_custom_call.1} parent=39 // pred_region
          %s4071 = ssub.s32 1152, 1152
          %4072 = vsyncadd %s4063, %s4071
          %s4073 = smul.addr %s23, 9
          %s4074 = smul.addr %s4073, 128
          %s4075 = scalar_lea.hbm %s5, %s4074
          %s4077 = sshll.u32 %s4066, 4
          %s4078 = int_to_ptr.vmem [resolvable:$true] %s4077
          %4080 = dma.vmem_to_hbm [thread:$0]  %s4078, 1152, %s4075, %s4063
        $region52: #{tpu_custom_call.1} parent=39 // pred_fallthru
          _
      $region40: #{tpu_custom_call.1} parent=5 // pred_fallthru
        _
      %p4081 = scmp.le.s32.totalorder 2, %s18
      // Predicated region
      $region53: #{tpu_custom_call.1} parent=5 // pred_check
        %p4082 = pneg %p4081
      $region54: #{tpu_custom_call.1} parent=5 // pred_check_branch
        %4084 = sbr.rel (%p4082) target = $region56
      $region55: #{tpu_custom_call.1} parent=5 // pred_region
        %s4085 = ssub.s32 %s18, 2
        // Predicated region
        $region57: #{tpu_custom_call.1} parent=55 // pred_check
          %p4086 = pneg %p157
        $region58: #{tpu_custom_call.1} parent=55 // pred_check_branch
          %4088 = sbr.rel (%p4086) target = $region60
        $region59: #{tpu_custom_call.1} parent=55 // pred_region
          %s4089 = sand.u32 %s142, 1
          %s4090 = scalar_lea.sflag [#allocation4], %s4089
          %s4091 = sand.u32 %s142, 1
          %s4092 = smul.addr %s4091, 72
          %s4093 = scalar_lea.vmem [#allocation7], %s4092
          %4094 = dma.done %s4090, 1152
        $region60: #{tpu_custom_call.1} parent=55 // pred_fallthru
          _
      $region56: #{tpu_custom_call.1} parent=5 // pred_fallthru
        _
    $region6: #{tpu_custom_call.1} parent=1 // loop_footer
      %s22 = sadd.s32 1, %s18
    $region7: #{tpu_custom_call.1} parent=1 // loop_footer_branch
      %17 = sbr.rel target = $region3
    $region8: #{tpu_custom_call.1} parent=1 // loop_exit
      _
    %4095 = vsyncpa [#allocation3], 1
    %s4096 = scalar_lea.sflag [#allocation3], 1
    %4097 = vsyncpa %s4096, 1
    %4098 = vsyncpa [#allocation6], 1
    %4099 = vsyncpa [#allocation4], 1
    %s4100 = scalar_lea.sflag [#allocation4], 1
    %4101 = vsyncpa %s4100, 1

</llo_original>
